<compile_context>
chip_gen: v7x
topology: tpu7x:2x2x1
jax: 0.10.0
libtpu: 0.0.40
codegen_flags: <defaults>
</compile_context>

<pallas_src>
import jax
import jax.numpy as jnp
from jax.experimental import pallas as pl
from jax.experimental.pallas import tpu as pltpu

# ---------------- configs (deterministic, small) ----------------
PATCH = 24             # fixed in the module
SEQ_LEN = 48           # configs.seq_len, multiple of PATCH
PRED_LEN = 16          # configs.pred_len
HIDDEN = 32            # configs.hidden_size
ENC_IN = 4             # configs.enc_in
BATCH = 2
EPS = 1e-5             # RevIN eps
NP = SEQ_LEN // PATCH  # number of patches (= LSTM "batch" because batch_first=False)
T = BATCH * ENC_IN     # LSTM sequence length (= B*C rows)


def _vmem():
    return pl.BlockSpec(memory_space=pltpu.MemorySpace.VMEM)


# ---------------- single fused kernel ----------------
def fused_kernel(x_ref, aw_ref, ab_ref, invaw_ref,
                 wstack_ref, b1w_ref, whh1_ref, wih2_ref, whh2_ref, b2_ref,
                 wlin_ref, blin_ref, out_ref, hbuf_ref):
    # layouts (all VMEM, single grid point):
    #   x      (B, L, C)      original module input, no host-side permute
    #   aw/ab/invaw (T, 1)    per-row RevIN affine params, row r = b*C + c; invaw = 1/(aw+eps^2)
    #   wstack (L, NP*4H)     block-diagonal: patch nb rows -> gate cols of block nb (perm [i,f,o,g])
    #   b1w    (1, NP*4H)     layer-1 bias tiled per patch block
    #   whh1/wih2/whh2 (H, 4H), b2 (1, 4H)   gate cols permuted [i,f,o,g]
    #   wlin   (NP*H, PRED),  blin (1, PRED)
    #   out    (B, PRED, C)   final module layout
    #   hbuf   (T, NP*H)      VMEM scratch slab for the flattened hidden rows
    H = HIDDEN
    G4 = 4 * H
    C = ENC_IN

    # ---- (B, L, C) -> (B*C, L): permute/reshape folded into the kernel prologue ----
    xr = jnp.concatenate([x_ref[b].T for b in range(BATCH)], axis=0)      # (T, L)

    # ---- RevIN 'norm' (rsqrt; std recovered with one multiply) ----
    mean = jnp.mean(xr, axis=-1, keepdims=True)                           # (T, 1)
    cent = xr - mean
    var = jnp.mean(cent * cent, axis=-1, keepdims=True)                   # biased variance
    inv_std = jax.lax.rsqrt(var + EPS)
    std = (var + EPS) * inv_std                                           # = sqrt(var + EPS)
    xn = cent * (inv_std * aw_ref[...]) + ab_ref[...]                     # (T, L)

    # ---- layer-1 input projection: ONE hoisted MXU push for all (t, patch) ----
    # gwide[t, nb*4H:(nb+1)*4H] = xn[t, nb*P:(nb+1)*P] @ Wih1 + b1
    gwide = jnp.dot(xn, wstack_ref[...],
                    preferred_element_type=jnp.float32) + b1w_ref[...]    # (T, NP*4H)

    whh1 = whh1_ref[...]
    wih2 = wih2_ref[...]
    whh2 = whh2_ref[...]
    b2 = b2_ref[...]

    # gate columns are pre-permuted to [i, f, o, g]: one sigmoid(3H) + one tanh(H) per layer
    def gates(g):
        s = jax.nn.sigmoid(g[:, :3 * H])
        gg = jnp.tanh(g[:, 3 * H:])
        return s[:, :H], s[:, H:2 * H], s[:, 2 * H:3 * H], gg

    z = jnp.zeros((NP, H), jnp.float32)
    h1, c1, h2, c2 = z, z, z, z
    # fully unrolled serial recurrence over the T = B*C "sequence" steps
    for t in range(T):
        # depends only on h2(t-1): drains while layer 1 computes (off the critical chain)
        g2h = jnp.dot(h2, whh2, preferred_element_type=jnp.float32) + b2

        # recurrence-independent slice of the hoisted x-projection (vreg-aligned lane slices)
        row = gwide[t:t + 1, :]
        g1x = jnp.concatenate([row[:, nb * G4:(nb + 1) * G4] for nb in range(NP)],
                              axis=0)                                      # (NP, 4H)

        # layer 1 (critical chain): existing + dot(...) -> MRB-accumulate friendly on v7x
        g1 = g1x + jnp.dot(h1, whh1, preferred_element_type=jnp.float32)
        i1, f1, o1, gg1 = gates(g1)
        c1 = f1 * c1 + i1 * gg1
        h1 = o1 * jnp.tanh(c1)

        # layer 2: only the Wih2 dot sits on the chain; Whh2 half already drained
        g2 = g2h + jnp.dot(h1, wih2, preferred_element_type=jnp.float32)
        i2, f2, o2, gg2 = gates(g2)
        c2 = f2 * c2 + i2 * gg2
        h2 = o2 * jnp.tanh(c2)

        # flatten(start_dim=-2): row t of the head input = [h2[0,:], h2[1,:], ...]
        # static-index stores to the VMEM slab (vector-store slot, off the MXU/EUP chain)
        for nb in range(NP):
            hbuf_ref[t:t + 1, nb * H:(nb + 1) * H] = h2[nb:nb + 1, :]

    # ---- linear head: one (T, NP*H) @ (NP*H, PRED) dot ----
    hflat = hbuf_ref[...]
    y = jnp.dot(hflat, wlin_ref[...],
                preferred_element_type=jnp.float32) + blin_ref[...]        # (T, PRED)

    # ---- RevIN 'denorm' (per row, reciprocal multiplies) ----
    yd = (y - ab_ref[...]) * invaw_ref[...] * std + mean                   # (T, PRED)

    # ---- emit output already in the module's final (B, PRED, C) layout ----
    for b in range(BATCH):
        out_ref[b] = yd[b * C:(b + 1) * C, :].T                            # (PRED, C)


def model_forward(x, pk):
    # x: (B, seq_len, enc_in) -- exactly the torch module input; no outer transposes/reshapes.
    return pl.pallas_call(
        fused_kernel,
        out_shape=jax.ShapeDtypeStruct((BATCH, PRED_LEN, ENC_IN), jnp.float32),
        in_specs=[_vmem()] * 12,
        out_specs=_vmem(),
        scratch_shapes=[pltpu.VMEM((T, NP * HIDDEN), jnp.float32)],
    )(x, pk["aw_r"], pk["ab_r"], pk["invaw_r"],
      pk["wstack"], pk["b1w"], pk["whh1"], pk["wih2"], pk["whh2"], pk["b2"],
      pk["wlin"], pk["blin"])


# ---------------- one-time weight packing (outside the jitted hot path) ----------------
def pack_params(p, batch):
    H = HIDDEN
    C = ENC_IN
    P = PATCH
    # torch gate order [i, f, g, o] -> kernel order [i, f, o, g]
    perm = jnp.concatenate([jnp.arange(0, H), jnp.arange(H, 2 * H),
                            jnp.arange(3 * H, 4 * H), jnp.arange(2 * H, 3 * H)])
    wih1 = p["w_ih_l0"].T[:, perm]                                   # (PATCH, 4H)
    b1 = (p["b_ih_l0"] + p["b_hh_l0"])[perm]                         # (4H,)
    # block-diagonal input-projection weight: patch nb -> gate block nb
    wstack = jnp.zeros((NP * P, NP * 4 * H), jnp.float32)
    for nb in range(NP):
        wstack = wstack.at[nb * P:(nb + 1) * P, nb * 4 * H:(nb + 1) * 4 * H].set(wih1)
    b1w = jnp.tile(b1.reshape(1, -1), (1, NP))                       # (1, NP*4H)
    whh1 = p["w_hh_l0"].T[:, perm]                                   # (H, 4H)
    wih2 = p["w_ih_l1"].T[:, perm]                                   # (H, 4H)
    whh2 = p["w_hh_l1"].T[:, perm]                                   # (H, 4H)
    b2 = (p["b_ih_l1"] + p["b_hh_l1"])[perm].reshape(1, -1)          # (1, 4H)
    wlin = p["w_lin"].T                                              # (NP*H, PRED)
    blin = p["b_lin"].reshape(1, -1)                                 # (1, PRED)
    # per-row (row = b*C + c) RevIN affine params
    aw_r = jnp.tile(p["aw"].reshape(C, 1), (batch, 1))               # (T, 1)
    ab_r = jnp.tile(p["ab"].reshape(C, 1), (batch, 1))               # (T, 1)
    invaw_r = 1.0 / (aw_r + EPS * EPS)                               # (T, 1)
    return dict(aw_r=aw_r, ab_r=ab_r, invaw_r=invaw_r, wstack=wstack, b1w=b1w,
                whh1=whh1, wih2=wih2, whh2=whh2, b2=b2, wlin=wlin, blin=blin)


# ---------------- pure-JAX reference (direct torch transliteration, for self-check) ----------------
def reference_forward(x, p):
    B, L, C = x.shape
    H = HIDDEN
    aw = p["aw"].reshape(1, C, 1)
    ab = p["ab"].reshape(1, C, 1)
    xm = jnp.transpose(x, (0, 2, 1))
    mean = jnp.mean(xm, axis=-1, keepdims=True)
    var = jnp.mean((xm - mean) ** 2, axis=-1, keepdims=True)
    std = jnp.sqrt(var + EPS)
    xn = (xm - mean) / std * aw + ab
    xp = xn.reshape(B * C, NP, PATCH)

    h1 = jnp.zeros((NP, H)); c1 = jnp.zeros((NP, H))
    h2 = jnp.zeros((NP, H)); c2 = jnp.zeros((NP, H))
    outs = []
    for t in range(B * C):
        g1 = xp[t] @ p["w_ih_l0"].T + p["b_ih_l0"] + h1 @ p["w_hh_l0"].T + p["b_hh_l0"]
        i1 = jax.nn.sigmoid(g1[:, :H]); f1 = jax.nn.sigmoid(g1[:, H:2 * H])
        gg1 = jnp.tanh(g1[:, 2 * H:3 * H]); o1 = jax.nn.sigmoid(g1[:, 3 * H:])
        c1 = f1 * c1 + i1 * gg1; h1 = o1 * jnp.tanh(c1)
        g2 = h1 @ p["w_ih_l1"].T + p["b_ih_l1"] + h2 @ p["w_hh_l1"].T + p["b_hh_l1"]
        i2 = jax.nn.sigmoid(g2[:, :H]); f2 = jax.nn.sigmoid(g2[:, H:2 * H])
        gg2 = jnp.tanh(g2[:, 2 * H:3 * H]); o2 = jax.nn.sigmoid(g2[:, 3 * H:])
        c2 = f2 * c2 + i2 * gg2; h2 = o2 * jnp.tanh(c2)
        outs.append(h2)
    hall = jnp.stack(outs, axis=0)                   # (B*C, NP, H)
    y = hall.reshape(B * C, NP * HIDDEN) @ p["w_lin"].T + p["b_lin"]
    y = y.reshape(B, C, PRED_LEN)
    y = (y - ab) / (aw + EPS * EPS) * std + mean
    return jnp.transpose(y, (0, 2, 1))


# ---------------- deterministic parameter init ----------------
def init_params(key):
    ks = jax.random.split(key, 12)
    s = 1.0 / jnp.sqrt(HIDDEN)

    def u(k, shape):
        return jax.random.uniform(k, shape, jnp.float32, -s, s)

    return dict(
        w_ih_l0=u(ks[0], (4 * HIDDEN, PATCH)),
        w_hh_l0=u(ks[1], (4 * HIDDEN, HIDDEN)),
        b_ih_l0=u(ks[2], (4 * HIDDEN,)),
        b_hh_l0=u(ks[3], (4 * HIDDEN,)),
        w_ih_l1=u(ks[4], (4 * HIDDEN, HIDDEN)),
        w_hh_l1=u(ks[5], (4 * HIDDEN, HIDDEN)),
        b_ih_l1=u(ks[6], (4 * HIDDEN,)),
        b_hh_l1=u(ks[7], (4 * HIDDEN,)),
        w_lin=u(ks[8], (PRED_LEN, NP * HIDDEN)),
        b_lin=u(ks[9], (PRED_LEN,)),
        aw=1.0 + 0.1 * jax.random.normal(ks[10], (ENC_IN,), jnp.float32),  # RevIN affine_weight
        ab=0.1 * jax.random.normal(ks[11], (ENC_IN,), jnp.float32),        # RevIN affine_bias
    )


if __name__ == "__main__":
    key = jax.random.PRNGKey(0)
    kx, kp = jax.random.split(key)
    x = jax.random.normal(kx, (BATCH, SEQ_LEN, ENC_IN), jnp.float32)
    params = init_params(kp)
    packed = pack_params(params, BATCH)          # one-time packing, not in the hot path

    fwd = jax.jit(model_forward)
    out = jax.block_until_ready(fwd(x, packed))

    ref = reference_forward(x, params)
    assert out.shape == (BATCH, PRED_LEN, ENC_IN), out.shape
    err = float(jnp.max(jnp.abs(out - ref)))
    assert jnp.allclose(out, ref, atol=2e-4, rtol=2e-4), err
    print("KERNEL_OK")
</pallas_src>

<mosaic_0001>
module attributes {stable_mosaic.version = 11 : i64} {
  func.func @fused_kernel(%arg0: memref<2x48x4xf32, #tpu.memory_space<vmem>>, %arg1: memref<8x1xf32, #tpu.memory_space<vmem>>, %arg2: memref<8x1xf32, #tpu.memory_space<vmem>>, %arg3: memref<8x1xf32, #tpu.memory_space<vmem>>, %arg4: memref<48x256xf32, #tpu.memory_space<vmem>>, %arg5: memref<1x256xf32, #tpu.memory_space<vmem>>, %arg6: memref<32x128xf32, #tpu.memory_space<vmem>>, %arg7: memref<32x128xf32, #tpu.memory_space<vmem>>, %arg8: memref<32x128xf32, #tpu.memory_space<vmem>>, %arg9: memref<1x128xf32, #tpu.memory_space<vmem>>, %arg10: memref<64x16xf32, #tpu.memory_space<vmem>>, %arg11: memref<1x16xf32, #tpu.memory_space<vmem>>, %arg12: memref<2x16x4xf32, #tpu.memory_space<vmem>>, %arg13: memref<8x64xf32, #tpu.memory_space<vmem>>) attributes {dimension_semantics = [], scalar_prefetch = 0 : i64, scratch_operands = 1 : i64, tpu.core_type = #tpu.core_type<tc>} {
    %c0 = arith.constant 0 : index
    %c0_0 = arith.constant 0 : index
    %c0_1 = arith.constant 0 : index
    %0 = vector.load %arg0[%c0, %c0_0, %c0_1] : memref<2x48x4xf32, #tpu.memory_space<vmem>>, vector<1x48x4xf32>
    %1 = vector.shape_cast %0 : vector<1x48x4xf32> to vector<48x4xf32>
    %2 = tpu.transpose %1, [1, 0] : vector<48x4xf32> -> vector<4x48xf32>
    %c1 = arith.constant 1 : index
    %c0_2 = arith.constant 0 : index
    %c0_3 = arith.constant 0 : index
    %3 = vector.load %arg0[%c1, %c0_2, %c0_3] : memref<2x48x4xf32, #tpu.memory_space<vmem>>, vector<1x48x4xf32>
    %4 = vector.shape_cast %3 : vector<1x48x4xf32> to vector<48x4xf32>
    %5 = tpu.transpose %4, [1, 0] : vector<48x4xf32> -> vector<4x48xf32>
    %6 = tpu.concatenate %2, %5 in 0 : vector<4x48xf32>, vector<4x48xf32> -> vector<8x48xf32>
    %cst = arith.constant dense<0.000000e+00> : vector<8xf32>
    %7 = vector.multi_reduction <add>, %6, %cst [1] : vector<8x48xf32> to vector<8xf32>
    %8 = vector.shape_cast %7 : vector<8xf32> to vector<8x1xf32>
    %cst_4 = arith.constant 4.800000e+01 : f32
    %9 = vector.broadcast %cst_4 : f32 to vector<8x1xf32>
    %10 = arith.divf %8, %9 : vector<8x1xf32>
    %11 = vector.broadcast %10 : vector<8x1xf32> to vector<8x48xf32>
    %12 = arith.subf %6, %11 : vector<8x48xf32>
    %13 = arith.mulf %12, %12 : vector<8x48xf32>
    %cst_5 = arith.constant dense<0.000000e+00> : vector<8xf32>
    %14 = vector.multi_reduction <add>, %13, %cst_5 [1] : vector<8x48xf32> to vector<8xf32>
    %15 = vector.shape_cast %14 : vector<8xf32> to vector<8x1xf32>
    %cst_6 = arith.constant 4.800000e+01 : f32
    %16 = vector.broadcast %cst_6 : f32 to vector<8x1xf32>
    %17 = arith.divf %15, %16 : vector<8x1xf32>
    %cst_7 = arith.constant 9.99999974E-6 : f32
    %18 = vector.broadcast %cst_7 : f32 to vector<8x1xf32>
    %19 = arith.addf %17, %18 : vector<8x1xf32>
    %20 = math.rsqrt %19 : vector<8x1xf32>
    %cst_8 = arith.constant 9.99999974E-6 : f32
    %21 = vector.broadcast %cst_8 : f32 to vector<8x1xf32>
    %22 = arith.addf %17, %21 : vector<8x1xf32>
    %23 = arith.mulf %22, %20 : vector<8x1xf32>
    %c0_9 = arith.constant 0 : index
    %c0_10 = arith.constant 0 : index
    %24 = vector.load %arg1[%c0_9, %c0_10] : memref<8x1xf32, #tpu.memory_space<vmem>>, vector<8x1xf32>
    %25 = arith.mulf %20, %24 : vector<8x1xf32>
    %26 = vector.broadcast %25 : vector<8x1xf32> to vector<8x48xf32>
    %27 = arith.mulf %12, %26 : vector<8x48xf32>
    %c0_11 = arith.constant 0 : index
    %c0_12 = arith.constant 0 : index
    %28 = vector.load %arg2[%c0_11, %c0_12] : memref<8x1xf32, #tpu.memory_space<vmem>>, vector<8x1xf32>
    %29 = vector.broadcast %28 : vector<8x1xf32> to vector<8x48xf32>
    %30 = arith.addf %27, %29 : vector<8x48xf32>
    %c0_13 = arith.constant 0 : index
    %c0_14 = arith.constant 0 : index
    %31 = vector.load %arg4[%c0_13, %c0_14] : memref<48x256xf32, #tpu.memory_space<vmem>>, vector<48x256xf32>
    %cst_15 = arith.constant dense<0.000000e+00> : vector<8x256xf32>
    %32 = tpu.matmul %30, %31, %cst_15 {dimension_numbers = #tpu.dot_dimension_numbers<[1], [0], [0], [1], [0, 0, 1, 1], [], []>} : vector<8x48xf32>, vector<48x256xf32>, vector<8x256xf32> -> vector<8x256xf32>
    %c0_16 = arith.constant 0 : index
    %c0_17 = arith.constant 0 : index
    %33 = vector.load %arg5[%c0_16, %c0_17] : memref<1x256xf32, #tpu.memory_space<vmem>>, vector<1x256xf32>
    %34 = vector.broadcast %33 : vector<1x256xf32> to vector<8x256xf32>
    %35 = arith.addf %32, %34 : vector<8x256xf32>
    %c0_18 = arith.constant 0 : index
    %c0_19 = arith.constant 0 : index
    %36 = vector.load %arg6[%c0_18, %c0_19] : memref<32x128xf32, #tpu.memory_space<vmem>>, vector<32x128xf32>
    %c0_20 = arith.constant 0 : index
    %c0_21 = arith.constant 0 : index
    %37 = vector.load %arg7[%c0_20, %c0_21] : memref<32x128xf32, #tpu.memory_space<vmem>>, vector<32x128xf32>
    %c0_22 = arith.constant 0 : index
    %c0_23 = arith.constant 0 : index
    %38 = vector.load %arg8[%c0_22, %c0_23] : memref<32x128xf32, #tpu.memory_space<vmem>>, vector<32x128xf32>
    %c0_24 = arith.constant 0 : index
    %c0_25 = arith.constant 0 : index
    %39 = vector.load %arg9[%c0_24, %c0_25] : memref<1x128xf32, #tpu.memory_space<vmem>>, vector<1x128xf32>
    %cst_26 = arith.constant 0.000000e+00 : f32
    %40 = vector.broadcast %cst_26 : f32 to vector<2x32xf32>
    %cst_27 = arith.constant dense<0.000000e+00> : vector<2x128xf32>
    %41 = tpu.matmul %40, %38, %cst_27 {dimension_numbers = #tpu.dot_dimension_numbers<[1], [0], [0], [1], [0, 0, 1, 1], [], []>} : vector<2x32xf32>, vector<32x128xf32>, vector<2x128xf32> -> vector<2x128xf32>
    %42 = vector.broadcast %39 : vector<1x128xf32> to vector<2x128xf32>
    %43 = arith.addf %41, %42 : vector<2x128xf32>
    %44 = vector.extract_strided_slice %35 {offsets = [0, 0], sizes = [1, 256], strides = [1, 1]} : vector<8x256xf32> to vector<1x256xf32>
    %45 = vector.extract_strided_slice %44 {offsets = [0, 0], sizes = [1, 128], strides = [1, 1]} : vector<1x256xf32> to vector<1x128xf32>
    %46 = vector.extract_strided_slice %44 {offsets = [0, 128], sizes = [1, 128], strides = [1, 1]} : vector<1x256xf32> to vector<1x128xf32>
    %47 = tpu.concatenate %45, %46 in 0 : vector<1x128xf32>, vector<1x128xf32> -> vector<2x128xf32>
    %cst_28 = arith.constant dense<0.000000e+00> : vector<2x128xf32>
    %48 = tpu.matmul %40, %36, %cst_28 {dimension_numbers = #tpu.dot_dimension_numbers<[1], [0], [0], [1], [0, 0, 1, 1], [], []>} : vector<2x32xf32>, vector<32x128xf32>, vector<2x128xf32> -> vector<2x128xf32>
    %49 = arith.addf %47, %48 : vector<2x128xf32>
    %50 = vector.extract_strided_slice %49 {offsets = [0, 0], sizes = [2, 96], strides = [1, 1]} : vector<2x128xf32> to vector<2x96xf32>
    %51 = arith.negf %50 : vector<2x96xf32>
    %52 = math.exp %51 : vector<2x96xf32>
    %cst_29 = arith.constant 1.000000e+00 : f32
    %53 = vector.broadcast %cst_29 : f32 to vector<2x96xf32>
    %54 = arith.addf %53, %52 : vector<2x96xf32>
    %55 = arith.divf %53, %54 : vector<2x96xf32>
    %56 = vector.extract_strided_slice %49 {offsets = [0, 96], sizes = [2, 32], strides = [1, 1]} : vector<2x128xf32> to vector<2x32xf32>
    %57 = math.tanh %56 : vector<2x32xf32>
    %58 = vector.extract_strided_slice %55 {offsets = [0, 0], sizes = [2, 32], strides = [1, 1]} : vector<2x96xf32> to vector<2x32xf32>
    %59 = vector.extract_strided_slice %55 {offsets = [0, 32], sizes = [2, 32], strides = [1, 1]} : vector<2x96xf32> to vector<2x32xf32>
    %60 = vector.extract_strided_slice %55 {offsets = [0, 64], sizes = [2, 32], strides = [1, 1]} : vector<2x96xf32> to vector<2x32xf32>
    %61 = arith.mulf %59, %40 : vector<2x32xf32>
    %62 = arith.mulf %58, %57 : vector<2x32xf32>
    %63 = arith.addf %61, %62 : vector<2x32xf32>
    %64 = math.tanh %63 : vector<2x32xf32>
    %65 = arith.mulf %60, %64 : vector<2x32xf32>
    %cst_30 = arith.constant dense<0.000000e+00> : vector<2x128xf32>
    %66 = tpu.matmul %65, %37, %cst_30 {dimension_numbers = #tpu.dot_dimension_numbers<[1], [0], [0], [1], [0, 0, 1, 1], [], []>} : vector<2x32xf32>, vector<32x128xf32>, vector<2x128xf32> -> vector<2x128xf32>
    %67 = arith.addf %43, %66 : vector<2x128xf32>
    %68 = vector.extract_strided_slice %67 {offsets = [0, 0], sizes = [2, 96], strides = [1, 1]} : vector<2x128xf32> to vector<2x96xf32>
    %69 = arith.negf %68 : vector<2x96xf32>
    %70 = math.exp %69 : vector<2x96xf32>
    %cst_31 = arith.constant 1.000000e+00 : f32
    %71 = vector.broadcast %cst_31 : f32 to vector<2x96xf32>
    %72 = arith.addf %71, %70 : vector<2x96xf32>
    %73 = arith.divf %71, %72 : vector<2x96xf32>
    %74 = vector.extract_strided_slice %67 {offsets = [0, 96], sizes = [2, 32], strides = [1, 1]} : vector<2x128xf32> to vector<2x32xf32>
    %75 = math.tanh %74 : vector<2x32xf32>
    %76 = vector.extract_strided_slice %73 {offsets = [0, 0], sizes = [2, 32], strides = [1, 1]} : vector<2x96xf32> to vector<2x32xf32>
    %77 = vector.extract_strided_slice %73 {offsets = [0, 32], sizes = [2, 32], strides = [1, 1]} : vector<2x96xf32> to vector<2x32xf32>
    %78 = vector.extract_strided_slice %73 {offsets = [0, 64], sizes = [2, 32], strides = [1, 1]} : vector<2x96xf32> to vector<2x32xf32>
    %79 = arith.mulf %77, %40 : vector<2x32xf32>
    %80 = arith.mulf %76, %75 : vector<2x32xf32>
    %81 = arith.addf %79, %80 : vector<2x32xf32>
    %82 = math.tanh %81 : vector<2x32xf32>
    %83 = arith.mulf %78, %82 : vector<2x32xf32>
    %84 = vector.extract_strided_slice %83 {offsets = [0, 0], sizes = [1, 32], strides = [1, 1]} : vector<2x32xf32> to vector<1x32xf32>
    %c0_32 = arith.constant 0 : index
    %c0_33 = arith.constant 0 : index
    %85 = vector.load %arg13[%c0_32, %c0_33] : memref<8x64xf32, #tpu.memory_space<vmem>>, vector<1x32xf32>
    tpu.vector_store %arg13[%c0_32, %c0_33], %84 {strides = array<i32>} : memref<8x64xf32, #tpu.memory_space<vmem>>, vector<1x32xf32>,
    %86 = vector.extract_strided_slice %83 {offsets = [1, 0], sizes = [1, 32], strides = [1, 1]} : vector<2x32xf32> to vector<1x32xf32>
    %c0_34 = arith.constant 0 : index
    %c32 = arith.constant 32 : index
    %87 = vector.load %arg13[%c0_34, %c32] : memref<8x64xf32, #tpu.memory_space<vmem>>, vector<1x32xf32>
    tpu.vector_store %arg13[%c0_34, %c32], %86 {strides = array<i32>} : memref<8x64xf32, #tpu.memory_space<vmem>>, vector<1x32xf32>,
    %cst_35 = arith.constant dense<0.000000e+00> : vector<2x128xf32>
    %88 = tpu.matmul %83, %38, %cst_35 {dimension_numbers = #tpu.dot_dimension_numbers<[1], [0], [0], [1], [0, 0, 1, 1], [], []>} : vector<2x32xf32>, vector<32x128xf32>, vector<2x128xf32> -> vector<2x128xf32>
    %89 = vector.broadcast %39 : vector<1x128xf32> to vector<2x128xf32>
    %90 = arith.addf %88, %89 : vector<2x128xf32>
    %91 = vector.extract_strided_slice %35 {offsets = [1, 0], sizes = [1, 256], strides = [1, 1]} : vector<8x256xf32> to vector<1x256xf32>
    %92 = vector.extract_strided_slice %91 {offsets = [0, 0], sizes = [1, 128], strides = [1, 1]} : vector<1x256xf32> to vector<1x128xf32>
    %93 = vector.extract_strided_slice %91 {offsets = [0, 128], sizes = [1, 128], strides = [1, 1]} : vector<1x256xf32> to vector<1x128xf32>
    %94 = tpu.concatenate %92, %93 in 0 : vector<1x128xf32>, vector<1x128xf32> -> vector<2x128xf32>
    %cst_36 = arith.constant dense<0.000000e+00> : vector<2x128xf32>
    %95 = tpu.matmul %65, %36, %cst_36 {dimension_numbers = #tpu.dot_dimension_numbers<[1], [0], [0], [1], [0, 0, 1, 1], [], []>} : vector<2x32xf32>, vector<32x128xf32>, vector<2x128xf32> -> vector<2x128xf32>
    %96 = arith.addf %94, %95 : vector<2x128xf32>
    %97 = vector.extract_strided_slice %96 {offsets = [0, 0], sizes = [2, 96], strides = [1, 1]} : vector<2x128xf32> to vector<2x96xf32>
    %98 = arith.negf %97 : vector<2x96xf32>
    %99 = math.exp %98 : vector<2x96xf32>
    %cst_37 = arith.constant 1.000000e+00 : f32
    %100 = vector.broadcast %cst_37 : f32 to vector<2x96xf32>
    %101 = arith.addf %100, %99 : vector<2x96xf32>
    %102 = arith.divf %100, %101 : vector<2x96xf32>
    %103 = vector.extract_strided_slice %96 {offsets = [0, 96], sizes = [2, 32], strides = [1, 1]} : vector<2x128xf32> to vector<2x32xf32>
    %104 = math.tanh %103 : vector<2x32xf32>
    %105 = vector.extract_strided_slice %102 {offsets = [0, 0], sizes = [2, 32], strides = [1, 1]} : vector<2x96xf32> to vector<2x32xf32>
    %106 = vector.extract_strided_slice %102 {offsets = [0, 32], sizes = [2, 32], strides = [1, 1]} : vector<2x96xf32> to vector<2x32xf32>
    %107 = vector.extract_strided_slice %102 {offsets = [0, 64], sizes = [2, 32], strides = [1, 1]} : vector<2x96xf32> to vector<2x32xf32>
    %108 = arith.mulf %106, %63 : vector<2x32xf32>
    %109 = arith.mulf %105, %104 : vector<2x32xf32>
    %110 = arith.addf %108, %109 : vector<2x32xf32>
    %111 = math.tanh %110 : vector<2x32xf32>
    %112 = arith.mulf %107, %111 : vector<2x32xf32>
    %cst_38 = arith.constant dense<0.000000e+00> : vector<2x128xf32>
    %113 = tpu.matmul %112, %37, %cst_38 {dimension_numbers = #tpu.dot_dimension_numbers<[1], [0], [0], [1], [0, 0, 1, 1], [], []>} : vector<2x32xf32>, vector<32x128xf32>, vector<2x128xf32> -> vector<2x128xf32>
    %114 = arith.addf %90, %113 : vector<2x128xf32>
    %115 = vector.extract_strided_slice %114 {offsets = [0, 0], sizes = [2, 96], strides = [1, 1]} : vector<2x128xf32> to vector<2x96xf32>
    %116 = arith.negf %115 : vector<2x96xf32>
    %117 = math.exp %116 : vector<2x96xf32>
    %cst_39 = arith.constant 1.000000e+00 : f32
    %118 = vector.broadcast %cst_39 : f32 to vector<2x96xf32>
    %119 = arith.addf %118, %117 : vector<2x96xf32>
    %120 = arith.divf %118, %119 : vector<2x96xf32>
    %121 = vector.extract_strided_slice %114 {offsets = [0, 96], sizes = [2, 32], strides = [1, 1]} : vector<2x128xf32> to vector<2x32xf32>
    %122 = math.tanh %121 : vector<2x32xf32>
    %123 = vector.extract_strided_slice %120 {offsets = [0, 0], sizes = [2, 32], strides = [1, 1]} : vector<2x96xf32> to vector<2x32xf32>
    %124 = vector.extract_strided_slice %120 {offsets = [0, 32], sizes = [2, 32], strides = [1, 1]} : vector<2x96xf32> to vector<2x32xf32>
    %125 = vector.extract_strided_slice %120 {offsets = [0, 64], sizes = [2, 32], strides = [1, 1]} : vector<2x96xf32> to vector<2x32xf32>
    %126 = arith.mulf %124, %81 : vector<2x32xf32>
    %127 = arith.mulf %123, %122 : vector<2x32xf32>
    %128 = arith.addf %126, %127 : vector<2x32xf32>
    %129 = math.tanh %128 : vector<2x32xf32>
    %130 = arith.mulf %125, %129 : vector<2x32xf32>
    %131 = vector.extract_strided_slice %130 {offsets = [0, 0], sizes = [1, 32], strides = [1, 1]} : vector<2x32xf32> to vector<1x32xf32>
    %c1_40 = arith.constant 1 : index
    %c0_41 = arith.constant 0 : index
    %132 = vector.load %arg13[%c1_40, %c0_41] : memref<8x64xf32, #tpu.memory_space<vmem>>, vector<1x32xf32>
    tpu.vector_store %arg13[%c1_40, %c0_41], %131 {strides = array<i32>} : memref<8x64xf32, #tpu.memory_space<vmem>>, vector<1x32xf32>,
    %133 = vector.extract_strided_slice %130 {offsets = [1, 0], sizes = [1, 32], strides = [1, 1]} : vector<2x32xf32> to vector<1x32xf32>
    %c1_42 = arith.constant 1 : index
    %c32_43 = arith.constant 32 : index
    %134 = vector.load %arg13[%c1_42, %c32_43] : memref<8x64xf32, #tpu.memory_space<vmem>>, vector<1x32xf32>
    tpu.vector_store %arg13[%c1_42, %c32_43], %133 {strides = array<i32>} : memref<8x64xf32, #tpu.memory_space<vmem>>, vector<1x32xf32>,
    %cst_44 = arith.constant dense<0.000000e+00> : vector<2x128xf32>
    %135 = tpu.matmul %130, %38, %cst_44 {dimension_numbers = #tpu.dot_dimension_numbers<[1], [0], [0], [1], [0, 0, 1, 1], [], []>} : vector<2x32xf32>, vector<32x128xf32>, vector<2x128xf32> -> vector<2x128xf32>
    %136 = vector.broadcast %39 : vector<1x128xf32> to vector<2x128xf32>
    %137 = arith.addf %135, %136 : vector<2x128xf32>
    %138 = vector.extract_strided_slice %35 {offsets = [2, 0], sizes = [1, 256], strides = [1, 1]} : vector<8x256xf32> to vector<1x256xf32>
    %139 = vector.extract_strided_slice %138 {offsets = [0, 0], sizes = [1, 128], strides = [1, 1]} : vector<1x256xf32> to vector<1x128xf32>
    %140 = vector.extract_strided_slice %138 {offsets = [0, 128], sizes = [1, 128], strides = [1, 1]} : vector<1x256xf32> to vector<1x128xf32>
    %141 = tpu.concatenate %139, %140 in 0 : vector<1x128xf32>, vector<1x128xf32> -> vector<2x128xf32>
    %cst_45 = arith.constant dense<0.000000e+00> : vector<2x128xf32>
    %142 = tpu.matmul %112, %36, %cst_45 {dimension_numbers = #tpu.dot_dimension_numbers<[1], [0], [0], [1], [0, 0, 1, 1], [], []>} : vector<2x32xf32>, vector<32x128xf32>, vector<2x128xf32> -> vector<2x128xf32>
    %143 = arith.addf %141, %142 : vector<2x128xf32>
    %144 = vector.extract_strided_slice %143 {offsets = [0, 0], sizes = [2, 96], strides = [1, 1]} : vector<2x128xf32> to vector<2x96xf32>
    %145 = arith.negf %144 : vector<2x96xf32>
    %146 = math.exp %145 : vector<2x96xf32>
    %cst_46 = arith.constant 1.000000e+00 : f32
    %147 = vector.broadcast %cst_46 : f32 to vector<2x96xf32>
    %148 = arith.addf %147, %146 : vector<2x96xf32>
    %149 = arith.divf %147, %148 : vector<2x96xf32>
    %150 = vector.extract_strided_slice %143 {offsets = [0, 96], sizes = [2, 32], strides = [1, 1]} : vector<2x128xf32> to vector<2x32xf32>
    %151 = math.tanh %150 : vector<2x32xf32>
    %152 = vector.extract_strided_slice %149 {offsets = [0, 0], sizes = [2, 32], strides = [1, 1]} : vector<2x96xf32> to vector<2x32xf32>
    %153 = vector.extract_strided_slice %149 {offsets = [0, 32], sizes = [2, 32], strides = [1, 1]} : vector<2x96xf32> to vector<2x32xf32>
    %154 = vector.extract_strided_slice %149 {offsets = [0, 64], sizes = [2, 32], strides = [1, 1]} : vector<2x96xf32> to vector<2x32xf32>
    %155 = arith.mulf %153, %110 : vector<2x32xf32>
    %156 = arith.mulf %152, %151 : vector<2x32xf32>
    %157 = arith.addf %155, %156 : vector<2x32xf32>
    %158 = math.tanh %157 : vector<2x32xf32>
    %159 = arith.mulf %154, %158 : vector<2x32xf32>
    %cst_47 = arith.constant dense<0.000000e+00> : vector<2x128xf32>
    %160 = tpu.matmul %159, %37, %cst_47 {dimension_numbers = #tpu.dot_dimension_numbers<[1], [0], [0], [1], [0, 0, 1, 1], [], []>} : vector<2x32xf32>, vector<32x128xf32>, vector<2x128xf32> -> vector<2x128xf32>
    %161 = arith.addf %137, %160 : vector<2x128xf32>
    %162 = vector.extract_strided_slice %161 {offsets = [0, 0], sizes = [2, 96], strides = [1, 1]} : vector<2x128xf32> to vector<2x96xf32>
    %163 = arith.negf %162 : vector<2x96xf32>
    %164 = math.exp %163 : vector<2x96xf32>
    %cst_48 = arith.constant 1.000000e+00 : f32
    %165 = vector.broadcast %cst_48 : f32 to vector<2x96xf32>
    %166 = arith.addf %165, %164 : vector<2x96xf32>
    %167 = arith.divf %165, %166 : vector<2x96xf32>
    %168 = vector.extract_strided_slice %161 {offsets = [0, 96], sizes = [2, 32], strides = [1, 1]} : vector<2x128xf32> to vector<2x32xf32>
    %169 = math.tanh %168 : vector<2x32xf32>
    %170 = vector.extract_strided_slice %167 {offsets = [0, 0], sizes = [2, 32], strides = [1, 1]} : vector<2x96xf32> to vector<2x32xf32>
    %171 = vector.extract_strided_slice %167 {offsets = [0, 32], sizes = [2, 32], strides = [1, 1]} : vector<2x96xf32> to vector<2x32xf32>
    %172 = vector.extract_strided_slice %167 {offsets = [0, 64], sizes = [2, 32], strides = [1, 1]} : vector<2x96xf32> to vector<2x32xf32>
    %173 = arith.mulf %171, %128 : vector<2x32xf32>
    %174 = arith.mulf %170, %169 : vector<2x32xf32>
    %175 = arith.addf %173, %174 : vector<2x32xf32>
    %176 = math.tanh %175 : vector<2x32xf32>
    %177 = arith.mulf %172, %176 : vector<2x32xf32>
    %178 = vector.extract_strided_slice %177 {offsets = [0, 0], sizes = [1, 32], strides = [1, 1]} : vector<2x32xf32> to vector<1x32xf32>
    %c2 = arith.constant 2 : index
    %c0_49 = arith.constant 0 : index
    %179 = vector.load %arg13[%c2, %c0_49] : memref<8x64xf32, #tpu.memory_space<vmem>>, vector<1x32xf32>
    tpu.vector_store %arg13[%c2, %c0_49], %178 {strides = array<i32>} : memref<8x64xf32, #tpu.memory_space<vmem>>, vector<1x32xf32>,
    %180 = vector.extract_strided_slice %177 {offsets = [1, 0], sizes = [1, 32], strides = [1, 1]} : vector<2x32xf32> to vector<1x32xf32>
    %c2_50 = arith.constant 2 : index
    %c32_51 = arith.constant 32 : index
    %181 = vector.load %arg13[%c2_50, %c32_51] : memref<8x64xf32, #tpu.memory_space<vmem>>, vector<1x32xf32>
    tpu.vector_store %arg13[%c2_50, %c32_51], %180 {strides = array<i32>} : memref<8x64xf32, #tpu.memory_space<vmem>>, vector<1x32xf32>,
    %cst_52 = arith.constant dense<0.000000e+00> : vector<2x128xf32>
    %182 = tpu.matmul %177, %38, %cst_52 {dimension_numbers = #tpu.dot_dimension_numbers<[1], [0], [0], [1], [0, 0, 1, 1], [], []>} : vector<2x32xf32>, vector<32x128xf32>, vector<2x128xf32> -> vector<2x128xf32>
    %183 = vector.broadcast %39 : vector<1x128xf32> to vector<2x128xf32>
    %184 = arith.addf %182, %183 : vector<2x128xf32>
    %185 = vector.extract_strided_slice %35 {offsets = [3, 0], sizes = [1, 256], strides = [1, 1]} : vector<8x256xf32> to vector<1x256xf32>
    %186 = vector.extract_strided_slice %185 {offsets = [0, 0], sizes = [1, 128], strides = [1, 1]} : vector<1x256xf32> to vector<1x128xf32>
    %187 = vector.extract_strided_slice %185 {offsets = [0, 128], sizes = [1, 128], strides = [1, 1]} : vector<1x256xf32> to vector<1x128xf32>
    %188 = tpu.concatenate %186, %187 in 0 : vector<1x128xf32>, vector<1x128xf32> -> vector<2x128xf32>
    %cst_53 = arith.constant dense<0.000000e+00> : vector<2x128xf32>
    %189 = tpu.matmul %159, %36, %cst_53 {dimension_numbers = #tpu.dot_dimension_numbers<[1], [0], [0], [1], [0, 0, 1, 1], [], []>} : vector<2x32xf32>, vector<32x128xf32>, vector<2x128xf32> -> vector<2x128xf32>
    %190 = arith.addf %188, %189 : vector<2x128xf32>
    %191 = vector.extract_strided_slice %190 {offsets = [0, 0], sizes = [2, 96], strides = [1, 1]} : vector<2x128xf32> to vector<2x96xf32>
    %192 = arith.negf %191 : vector<2x96xf32>
    %193 = math.exp %192 : vector<2x96xf32>
    %cst_54 = arith.constant 1.000000e+00 : f32
    %194 = vector.broadcast %cst_54 : f32 to vector<2x96xf32>
    %195 = arith.addf %194, %193 : vector<2x96xf32>
    %196 = arith.divf %194, %195 : vector<2x96xf32>
    %197 = vector.extract_strided_slice %190 {offsets = [0, 96], sizes = [2, 32], strides = [1, 1]} : vector<2x128xf32> to vector<2x32xf32>
    %198 = math.tanh %197 : vector<2x32xf32>
    %199 = vector.extract_strided_slice %196 {offsets = [0, 0], sizes = [2, 32], strides = [1, 1]} : vector<2x96xf32> to vector<2x32xf32>
    %200 = vector.extract_strided_slice %196 {offsets = [0, 32], sizes = [2, 32], strides = [1, 1]} : vector<2x96xf32> to vector<2x32xf32>
    %201 = vector.extract_strided_slice %196 {offsets = [0, 64], sizes = [2, 32], strides = [1, 1]} : vector<2x96xf32> to vector<2x32xf32>
    %202 = arith.mulf %200, %157 : vector<2x32xf32>
    %203 = arith.mulf %199, %198 : vector<2x32xf32>
    %204 = arith.addf %202, %203 : vector<2x32xf32>
    %205 = math.tanh %204 : vector<2x32xf32>
    %206 = arith.mulf %201, %205 : vector<2x32xf32>
    %cst_55 = arith.constant dense<0.000000e+00> : vector<2x128xf32>
    %207 = tpu.matmul %206, %37, %cst_55 {dimension_numbers = #tpu.dot_dimension_numbers<[1], [0], [0], [1], [0, 0, 1, 1], [], []>} : vector<2x32xf32>, vector<32x128xf32>, vector<2x128xf32> -> vector<2x128xf32>
    %208 = arith.addf %184, %207 : vector<2x128xf32>
    %209 = vector.extract_strided_slice %208 {offsets = [0, 0], sizes = [2, 96], strides = [1, 1]} : vector<2x128xf32> to vector<2x96xf32>
    %210 = arith.negf %209 : vector<2x96xf32>
    %211 = math.exp %210 : vector<2x96xf32>
    %cst_56 = arith.constant 1.000000e+00 : f32
    %212 = vector.broadcast %cst_56 : f32 to vector<2x96xf32>
    %213 = arith.addf %212, %211 : vector<2x96xf32>
    %214 = arith.divf %212, %213 : vector<2x96xf32>
    %215 = vector.extract_strided_slice %208 {offsets = [0, 96], sizes = [2, 32], strides = [1, 1]} : vector<2x128xf32> to vector<2x32xf32>
    %216 = math.tanh %215 : vector<2x32xf32>
    %217 = vector.extract_strided_slice %214 {offsets = [0, 0], sizes = [2, 32], strides = [1, 1]} : vector<2x96xf32> to vector<2x32xf32>
    %218 = vector.extract_strided_slice %214 {offsets = [0, 32], sizes = [2, 32], strides = [1, 1]} : vector<2x96xf32> to vector<2x32xf32>
    %219 = vector.extract_strided_slice %214 {offsets = [0, 64], sizes = [2, 32], strides = [1, 1]} : vector<2x96xf32> to vector<2x32xf32>
    %220 = arith.mulf %218, %175 : vector<2x32xf32>
    %221 = arith.mulf %217, %216 : vector<2x32xf32>
    %222 = arith.addf %220, %221 : vector<2x32xf32>
    %223 = math.tanh %222 : vector<2x32xf32>
    %224 = arith.mulf %219, %223 : vector<2x32xf32>
    %225 = vector.extract_strided_slice %224 {offsets = [0, 0], sizes = [1, 32], strides = [1, 1]} : vector<2x32xf32> to vector<1x32xf32>
    %c3 = arith.constant 3 : index
    %c0_57 = arith.constant 0 : index
    %226 = vector.load %arg13[%c3, %c0_57] : memref<8x64xf32, #tpu.memory_space<vmem>>, vector<1x32xf32>
    tpu.vector_store %arg13[%c3, %c0_57], %225 {strides = array<i32>} : memref<8x64xf32, #tpu.memory_space<vmem>>, vector<1x32xf32>,
    %227 = vector.extract_strided_slice %224 {offsets = [1, 0], sizes = [1, 32], strides = [1, 1]} : vector<2x32xf32> to vector<1x32xf32>
    %c3_58 = arith.constant 3 : index
    %c32_59 = arith.constant 32 : index
    %228 = vector.load %arg13[%c3_58, %c32_59] : memref<8x64xf32, #tpu.memory_space<vmem>>, vector<1x32xf32>
    tpu.vector_store %arg13[%c3_58, %c32_59], %227 {strides = array<i32>} : memref<8x64xf32, #tpu.memory_space<vmem>>, vector<1x32xf32>,
    %cst_60 = arith.constant dense<0.000000e+00> : vector<2x128xf32>
    %229 = tpu.matmul %224, %38, %cst_60 {dimension_numbers = #tpu.dot_dimension_numbers<[1], [0], [0], [1], [0, 0, 1, 1], [], []>} : vector<2x32xf32>, vector<32x128xf32>, vector<2x128xf32> -> vector<2x128xf32>
    %230 = vector.broadcast %39 : vector<1x128xf32> to vector<2x128xf32>
    %231 = arith.addf %229, %230 : vector<2x128xf32>
    %232 = vector.extract_strided_slice %35 {offsets = [4, 0], sizes = [1, 256], strides = [1, 1]} : vector<8x256xf32> to vector<1x256xf32>
    %233 = vector.extract_strided_slice %232 {offsets = [0, 0], sizes = [1, 128], strides = [1, 1]} : vector<1x256xf32> to vector<1x128xf32>
    %234 = vector.extract_strided_slice %232 {offsets = [0, 128], sizes = [1, 128], strides = [1, 1]} : vector<1x256xf32> to vector<1x128xf32>
    %235 = tpu.concatenate %233, %234 in 0 : vector<1x128xf32>, vector<1x128xf32> -> vector<2x128xf32>
    %cst_61 = arith.constant dense<0.000000e+00> : vector<2x128xf32>
    %236 = tpu.matmul %206, %36, %cst_61 {dimension_numbers = #tpu.dot_dimension_numbers<[1], [0], [0], [1], [0, 0, 1, 1], [], []>} : vector<2x32xf32>, vector<32x128xf32>, vector<2x128xf32> -> vector<2x128xf32>
    %237 = arith.addf %235, %236 : vector<2x128xf32>
    %238 = vector.extract_strided_slice %237 {offsets = [0, 0], sizes = [2, 96], strides = [1, 1]} : vector<2x128xf32> to vector<2x96xf32>
    %239 = arith.negf %238 : vector<2x96xf32>
    %240 = math.exp %239 : vector<2x96xf32>
    %cst_62 = arith.constant 1.000000e+00 : f32
    %241 = vector.broadcast %cst_62 : f32 to vector<2x96xf32>
    %242 = arith.addf %241, %240 : vector<2x96xf32>
    %243 = arith.divf %241, %242 : vector<2x96xf32>
    %244 = vector.extract_strided_slice %237 {offsets = [0, 96], sizes = [2, 32], strides = [1, 1]} : vector<2x128xf32> to vector<2x32xf32>
    %245 = math.tanh %244 : vector<2x32xf32>
    %246 = vector.extract_strided_slice %243 {offsets = [0, 0], sizes = [2, 32], strides = [1, 1]} : vector<2x96xf32> to vector<2x32xf32>
    %247 = vector.extract_strided_slice %243 {offsets = [0, 32], sizes = [2, 32], strides = [1, 1]} : vector<2x96xf32> to vector<2x32xf32>
    %248 = vector.extract_strided_slice %243 {offsets = [0, 64], sizes = [2, 32], strides = [1, 1]} : vector<2x96xf32> to vector<2x32xf32>
    %249 = arith.mulf %247, %204 : vector<2x32xf32>
    %250 = arith.mulf %246, %245 : vector<2x32xf32>
    %251 = arith.addf %249, %250 : vector<2x32xf32>
    %252 = math.tanh %251 : vector<2x32xf32>
    %253 = arith.mulf %248, %252 : vector<2x32xf32>
    %cst_63 = arith.constant dense<0.000000e+00> : vector<2x128xf32>
    %254 = tpu.matmul %253, %37, %cst_63 {dimension_numbers = #tpu.dot_dimension_numbers<[1], [0], [0], [1], [0, 0, 1, 1], [], []>} : vector<2x32xf32>, vector<32x128xf32>, vector<2x128xf32> -> vector<2x128xf32>
    %255 = arith.addf %231, %254 : vector<2x128xf32>
    %256 = vector.extract_strided_slice %255 {offsets = [0, 0], sizes = [2, 96], strides = [1, 1]} : vector<2x128xf32> to vector<2x96xf32>
    %257 = arith.negf %256 : vector<2x96xf32>
    %258 = math.exp %257 : vector<2x96xf32>
    %cst_64 = arith.constant 1.000000e+00 : f32
    %259 = vector.broadcast %cst_64 : f32 to vector<2x96xf32>
    %260 = arith.addf %259, %258 : vector<2x96xf32>
    %261 = arith.divf %259, %260 : vector<2x96xf32>
    %262 = vector.extract_strided_slice %255 {offsets = [0, 96], sizes = [2, 32], strides = [1, 1]} : vector<2x128xf32> to vector<2x32xf32>
    %263 = math.tanh %262 : vector<2x32xf32>
    %264 = vector.extract_strided_slice %261 {offsets = [0, 0], sizes = [2, 32], strides = [1, 1]} : vector<2x96xf32> to vector<2x32xf32>
    %265 = vector.extract_strided_slice %261 {offsets = [0, 32], sizes = [2, 32], strides = [1, 1]} : vector<2x96xf32> to vector<2x32xf32>
    %266 = vector.extract_strided_slice %261 {offsets = [0, 64], sizes = [2, 32], strides = [1, 1]} : vector<2x96xf32> to vector<2x32xf32>
    %267 = arith.mulf %265, %222 : vector<2x32xf32>
    %268 = arith.mulf %264, %263 : vector<2x32xf32>
    %269 = arith.addf %267, %268 : vector<2x32xf32>
    %270 = math.tanh %269 : vector<2x32xf32>
    %271 = arith.mulf %266, %270 : vector<2x32xf32>
    %272 = vector.extract_strided_slice %271 {offsets = [0, 0], sizes = [1, 32], strides = [1, 1]} : vector<2x32xf32> to vector<1x32xf32>
    %c4 = arith.constant 4 : index
    %c0_65 = arith.constant 0 : index
    %273 = vector.load %arg13[%c4, %c0_65] : memref<8x64xf32, #tpu.memory_space<vmem>>, vector<1x32xf32>
    tpu.vector_store %arg13[%c4, %c0_65], %272 {strides = array<i32>} : memref<8x64xf32, #tpu.memory_space<vmem>>, vector<1x32xf32>,
    %274 = vector.extract_strided_slice %271 {offsets = [1, 0], sizes = [1, 32], strides = [1, 1]} : vector<2x32xf32> to vector<1x32xf32>
    %c4_66 = arith.constant 4 : index
    %c32_67 = arith.constant 32 : index
    %275 = vector.load %arg13[%c4_66, %c32_67] : memref<8x64xf32, #tpu.memory_space<vmem>>, vector<1x32xf32>
    tpu.vector_store %arg13[%c4_66, %c32_67], %274 {strides = array<i32>} : memref<8x64xf32, #tpu.memory_space<vmem>>, vector<1x32xf32>,
    %cst_68 = arith.constant dense<0.000000e+00> : vector<2x128xf32>
    %276 = tpu.matmul %271, %38, %cst_68 {dimension_numbers = #tpu.dot_dimension_numbers<[1], [0], [0], [1], [0, 0, 1, 1], [], []>} : vector<2x32xf32>, vector<32x128xf32>, vector<2x128xf32> -> vector<2x128xf32>
    %277 = vector.broadcast %39 : vector<1x128xf32> to vector<2x128xf32>
    %278 = arith.addf %276, %277 : vector<2x128xf32>
    %279 = vector.extract_strided_slice %35 {offsets = [5, 0], sizes = [1, 256], strides = [1, 1]} : vector<8x256xf32> to vector<1x256xf32>
    %280 = vector.extract_strided_slice %279 {offsets = [0, 0], sizes = [1, 128], strides = [1, 1]} : vector<1x256xf32> to vector<1x128xf32>
    %281 = vector.extract_strided_slice %279 {offsets = [0, 128], sizes = [1, 128], strides = [1, 1]} : vector<1x256xf32> to vector<1x128xf32>
    %282 = tpu.concatenate %280, %281 in 0 : vector<1x128xf32>, vector<1x128xf32> -> vector<2x128xf32>
    %cst_69 = arith.constant dense<0.000000e+00> : vector<2x128xf32>
    %283 = tpu.matmul %253, %36, %cst_69 {dimension_numbers = #tpu.dot_dimension_numbers<[1], [0], [0], [1], [0, 0, 1, 1], [], []>} : vector<2x32xf32>, vector<32x128xf32>, vector<2x128xf32> -> vector<2x128xf32>
    %284 = arith.addf %282, %283 : vector<2x128xf32>
    %285 = vector.extract_strided_slice %284 {offsets = [0, 0], sizes = [2, 96], strides = [1, 1]} : vector<2x128xf32> to vector<2x96xf32>
    %286 = arith.negf %285 : vector<2x96xf32>
    %287 = math.exp %286 : vector<2x96xf32>
    %cst_70 = arith.constant 1.000000e+00 : f32
    %288 = vector.broadcast %cst_70 : f32 to vector<2x96xf32>
    %289 = arith.addf %288, %287 : vector<2x96xf32>
    %290 = arith.divf %288, %289 : vector<2x96xf32>
    %291 = vector.extract_strided_slice %284 {offsets = [0, 96], sizes = [2, 32], strides = [1, 1]} : vector<2x128xf32> to vector<2x32xf32>
    %292 = math.tanh %291 : vector<2x32xf32>
    %293 = vector.extract_strided_slice %290 {offsets = [0, 0], sizes = [2, 32], strides = [1, 1]} : vector<2x96xf32> to vector<2x32xf32>
    %294 = vector.extract_strided_slice %290 {offsets = [0, 32], sizes = [2, 32], strides = [1, 1]} : vector<2x96xf32> to vector<2x32xf32>
    %295 = vector.extract_strided_slice %290 {offsets = [0, 64], sizes = [2, 32], strides = [1, 1]} : vector<2x96xf32> to vector<2x32xf32>
    %296 = arith.mulf %294, %251 : vector<2x32xf32>
    %297 = arith.mulf %293, %292 : vector<2x32xf32>
    %298 = arith.addf %296, %297 : vector<2x32xf32>
    %299 = math.tanh %298 : vector<2x32xf32>
    %300 = arith.mulf %295, %299 : vector<2x32xf32>
    %cst_71 = arith.constant dense<0.000000e+00> : vector<2x128xf32>
    %301 = tpu.matmul %300, %37, %cst_71 {dimension_numbers = #tpu.dot_dimension_numbers<[1], [0], [0], [1], [0, 0, 1, 1], [], []>} : vector<2x32xf32>, vector<32x128xf32>, vector<2x128xf32> -> vector<2x128xf32>
    %302 = arith.addf %278, %301 : vector<2x128xf32>
    %303 = vector.extract_strided_slice %302 {offsets = [0, 0], sizes = [2, 96], strides = [1, 1]} : vector<2x128xf32> to vector<2x96xf32>
    %304 = arith.negf %303 : vector<2x96xf32>
    %305 = math.exp %304 : vector<2x96xf32>
    %cst_72 = arith.constant 1.000000e+00 : f32
    %306 = vector.broadcast %cst_72 : f32 to vector<2x96xf32>
    %307 = arith.addf %306, %305 : vector<2x96xf32>
    %308 = arith.divf %306, %307 : vector<2x96xf32>
    %309 = vector.extract_strided_slice %302 {offsets = [0, 96], sizes = [2, 32], strides = [1, 1]} : vector<2x128xf32> to vector<2x32xf32>
    %310 = math.tanh %309 : vector<2x32xf32>
    %311 = vector.extract_strided_slice %308 {offsets = [0, 0], sizes = [2, 32], strides = [1, 1]} : vector<2x96xf32> to vector<2x32xf32>
    %312 = vector.extract_strided_slice %308 {offsets = [0, 32], sizes = [2, 32], strides = [1, 1]} : vector<2x96xf32> to vector<2x32xf32>
    %313 = vector.extract_strided_slice %308 {offsets = [0, 64], sizes = [2, 32], strides = [1, 1]} : vector<2x96xf32> to vector<2x32xf32>
    %314 = arith.mulf %312, %269 : vector<2x32xf32>
    %315 = arith.mulf %311, %310 : vector<2x32xf32>
    %316 = arith.addf %314, %315 : vector<2x32xf32>
    %317 = math.tanh %316 : vector<2x32xf32>
    %318 = arith.mulf %313, %317 : vector<2x32xf32>
    %319 = vector.extract_strided_slice %318 {offsets = [0, 0], sizes = [1, 32], strides = [1, 1]} : vector<2x32xf32> to vector<1x32xf32>
    %c5 = arith.constant 5 : index
    %c0_73 = arith.constant 0 : index
    %320 = vector.load %arg13[%c5, %c0_73] : memref<8x64xf32, #tpu.memory_space<vmem>>, vector<1x32xf32>
    tpu.vector_store %arg13[%c5, %c0_73], %319 {strides = array<i32>} : memref<8x64xf32, #tpu.memory_space<vmem>>, vector<1x32xf32>,
    %321 = vector.extract_strided_slice %318 {offsets = [1, 0], sizes = [1, 32], strides = [1, 1]} : vector<2x32xf32> to vector<1x32xf32>
    %c5_74 = arith.constant 5 : index
    %c32_75 = arith.constant 32 : index
    %322 = vector.load %arg13[%c5_74, %c32_75] : memref<8x64xf32, #tpu.memory_space<vmem>>, vector<1x32xf32>
    tpu.vector_store %arg13[%c5_74, %c32_75], %321 {strides = array<i32>} : memref<8x64xf32, #tpu.memory_space<vmem>>, vector<1x32xf32>,
    %cst_76 = arith.constant dense<0.000000e+00> : vector<2x128xf32>
    %323 = tpu.matmul %318, %38, %cst_76 {dimension_numbers = #tpu.dot_dimension_numbers<[1], [0], [0], [1], [0, 0, 1, 1], [], []>} : vector<2x32xf32>, vector<32x128xf32>, vector<2x128xf32> -> vector<2x128xf32>
    %324 = vector.broadcast %39 : vector<1x128xf32> to vector<2x128xf32>
    %325 = arith.addf %323, %324 : vector<2x128xf32>
    %326 = vector.extract_strided_slice %35 {offsets = [6, 0], sizes = [1, 256], strides = [1, 1]} : vector<8x256xf32> to vector<1x256xf32>
    %327 = vector.extract_strided_slice %326 {offsets = [0, 0], sizes = [1, 128], strides = [1, 1]} : vector<1x256xf32> to vector<1x128xf32>
    %328 = vector.extract_strided_slice %326 {offsets = [0, 128], sizes = [1, 128], strides = [1, 1]} : vector<1x256xf32> to vector<1x128xf32>
    %329 = tpu.concatenate %327, %328 in 0 : vector<1x128xf32>, vector<1x128xf32> -> vector<2x128xf32>
    %cst_77 = arith.constant dense<0.000000e+00> : vector<2x128xf32>
    %330 = tpu.matmul %300, %36, %cst_77 {dimension_numbers = #tpu.dot_dimension_numbers<[1], [0], [0], [1], [0, 0, 1, 1], [], []>} : vector<2x32xf32>, vector<32x128xf32>, vector<2x128xf32> -> vector<2x128xf32>
    %331 = arith.addf %329, %330 : vector<2x128xf32>
    %332 = vector.extract_strided_slice %331 {offsets = [0, 0], sizes = [2, 96], strides = [1, 1]} : vector<2x128xf32> to vector<2x96xf32>
    %333 = arith.negf %332 : vector<2x96xf32>
    %334 = math.exp %333 : vector<2x96xf32>
    %cst_78 = arith.constant 1.000000e+00 : f32
    %335 = vector.broadcast %cst_78 : f32 to vector<2x96xf32>
    %336 = arith.addf %335, %334 : vector<2x96xf32>
    %337 = arith.divf %335, %336 : vector<2x96xf32>
    %338 = vector.extract_strided_slice %331 {offsets = [0, 96], sizes = [2, 32], strides = [1, 1]} : vector<2x128xf32> to vector<2x32xf32>
    %339 = math.tanh %338 : vector<2x32xf32>
    %340 = vector.extract_strided_slice %337 {offsets = [0, 0], sizes = [2, 32], strides = [1, 1]} : vector<2x96xf32> to vector<2x32xf32>
    %341 = vector.extract_strided_slice %337 {offsets = [0, 32], sizes = [2, 32], strides = [1, 1]} : vector<2x96xf32> to vector<2x32xf32>
    %342 = vector.extract_strided_slice %337 {offsets = [0, 64], sizes = [2, 32], strides = [1, 1]} : vector<2x96xf32> to vector<2x32xf32>
    %343 = arith.mulf %341, %298 : vector<2x32xf32>
    %344 = arith.mulf %340, %339 : vector<2x32xf32>
    %345 = arith.addf %343, %344 : vector<2x32xf32>
    %346 = math.tanh %345 : vector<2x32xf32>
    %347 = arith.mulf %342, %346 : vector<2x32xf32>
    %cst_79 = arith.constant dense<0.000000e+00> : vector<2x128xf32>
    %348 = tpu.matmul %347, %37, %cst_79 {dimension_numbers = #tpu.dot_dimension_numbers<[1], [0], [0], [1], [0, 0, 1, 1], [], []>} : vector<2x32xf32>, vector<32x128xf32>, vector<2x128xf32> -> vector<2x128xf32>
    %349 = arith.addf %325, %348 : vector<2x128xf32>
    %350 = vector.extract_strided_slice %349 {offsets = [0, 0], sizes = [2, 96], strides = [1, 1]} : vector<2x128xf32> to vector<2x96xf32>
    %351 = arith.negf %350 : vector<2x96xf32>
    %352 = math.exp %351 : vector<2x96xf32>
    %cst_80 = arith.constant 1.000000e+00 : f32
    %353 = vector.broadcast %cst_80 : f32 to vector<2x96xf32>
    %354 = arith.addf %353, %352 : vector<2x96xf32>
    %355 = arith.divf %353, %354 : vector<2x96xf32>
    %356 = vector.extract_strided_slice %349 {offsets = [0, 96], sizes = [2, 32], strides = [1, 1]} : vector<2x128xf32> to vector<2x32xf32>
    %357 = math.tanh %356 : vector<2x32xf32>
    %358 = vector.extract_strided_slice %355 {offsets = [0, 0], sizes = [2, 32], strides = [1, 1]} : vector<2x96xf32> to vector<2x32xf32>
    %359 = vector.extract_strided_slice %355 {offsets = [0, 32], sizes = [2, 32], strides = [1, 1]} : vector<2x96xf32> to vector<2x32xf32>
    %360 = vector.extract_strided_slice %355 {offsets = [0, 64], sizes = [2, 32], strides = [1, 1]} : vector<2x96xf32> to vector<2x32xf32>
    %361 = arith.mulf %359, %316 : vector<2x32xf32>
    %362 = arith.mulf %358, %357 : vector<2x32xf32>
    %363 = arith.addf %361, %362 : vector<2x32xf32>
    %364 = math.tanh %363 : vector<2x32xf32>
    %365 = arith.mulf %360, %364 : vector<2x32xf32>
    %366 = vector.extract_strided_slice %365 {offsets = [0, 0], sizes = [1, 32], strides = [1, 1]} : vector<2x32xf32> to vector<1x32xf32>
    %c6 = arith.constant 6 : index
    %c0_81 = arith.constant 0 : index
    %367 = vector.load %arg13[%c6, %c0_81] : memref<8x64xf32, #tpu.memory_space<vmem>>, vector<1x32xf32>
    tpu.vector_store %arg13[%c6, %c0_81], %366 {strides = array<i32>} : memref<8x64xf32, #tpu.memory_space<vmem>>, vector<1x32xf32>,
    %368 = vector.extract_strided_slice %365 {offsets = [1, 0], sizes = [1, 32], strides = [1, 1]} : vector<2x32xf32> to vector<1x32xf32>
    %c6_82 = arith.constant 6 : index
    %c32_83 = arith.constant 32 : index
    %369 = vector.load %arg13[%c6_82, %c32_83] : memref<8x64xf32, #tpu.memory_space<vmem>>, vector<1x32xf32>
    tpu.vector_store %arg13[%c6_82, %c32_83], %368 {strides = array<i32>} : memref<8x64xf32, #tpu.memory_space<vmem>>, vector<1x32xf32>,
    %cst_84 = arith.constant dense<0.000000e+00> : vector<2x128xf32>
    %370 = tpu.matmul %365, %38, %cst_84 {dimension_numbers = #tpu.dot_dimension_numbers<[1], [0], [0], [1], [0, 0, 1, 1], [], []>} : vector<2x32xf32>, vector<32x128xf32>, vector<2x128xf32> -> vector<2x128xf32>
    %371 = vector.broadcast %39 : vector<1x128xf32> to vector<2x128xf32>
    %372 = arith.addf %370, %371 : vector<2x128xf32>
    %373 = vector.extract_strided_slice %35 {offsets = [7, 0], sizes = [1, 256], strides = [1, 1]} : vector<8x256xf32> to vector<1x256xf32>
    %374 = vector.extract_strided_slice %373 {offsets = [0, 0], sizes = [1, 128], strides = [1, 1]} : vector<1x256xf32> to vector<1x128xf32>
    %375 = vector.extract_strided_slice %373 {offsets = [0, 128], sizes = [1, 128], strides = [1, 1]} : vector<1x256xf32> to vector<1x128xf32>
    %376 = tpu.concatenate %374, %375 in 0 : vector<1x128xf32>, vector<1x128xf32> -> vector<2x128xf32>
    %cst_85 = arith.constant dense<0.000000e+00> : vector<2x128xf32>
    %377 = tpu.matmul %347, %36, %cst_85 {dimension_numbers = #tpu.dot_dimension_numbers<[1], [0], [0], [1], [0, 0, 1, 1], [], []>} : vector<2x32xf32>, vector<32x128xf32>, vector<2x128xf32> -> vector<2x128xf32>
    %378 = arith.addf %376, %377 : vector<2x128xf32>
    %379 = vector.extract_strided_slice %378 {offsets = [0, 0], sizes = [2, 96], strides = [1, 1]} : vector<2x128xf32> to vector<2x96xf32>
    %380 = arith.negf %379 : vector<2x96xf32>
    %381 = math.exp %380 : vector<2x96xf32>
    %cst_86 = arith.constant 1.000000e+00 : f32
    %382 = vector.broadcast %cst_86 : f32 to vector<2x96xf32>
    %383 = arith.addf %382, %381 : vector<2x96xf32>
    %384 = arith.divf %382, %383 : vector<2x96xf32>
    %385 = vector.extract_strided_slice %378 {offsets = [0, 96], sizes = [2, 32], strides = [1, 1]} : vector<2x128xf32> to vector<2x32xf32>
    %386 = math.tanh %385 : vector<2x32xf32>
    %387 = vector.extract_strided_slice %384 {offsets = [0, 0], sizes = [2, 32], strides = [1, 1]} : vector<2x96xf32> to vector<2x32xf32>
    %388 = vector.extract_strided_slice %384 {offsets = [0, 32], sizes = [2, 32], strides = [1, 1]} : vector<2x96xf32> to vector<2x32xf32>
    %389 = vector.extract_strided_slice %384 {offsets = [0, 64], sizes = [2, 32], strides = [1, 1]} : vector<2x96xf32> to vector<2x32xf32>
    %390 = arith.mulf %388, %345 : vector<2x32xf32>
    %391 = arith.mulf %387, %386 : vector<2x32xf32>
    %392 = arith.addf %390, %391 : vector<2x32xf32>
    %393 = math.tanh %392 : vector<2x32xf32>
    %394 = arith.mulf %389, %393 : vector<2x32xf32>
    %cst_87 = arith.constant dense<0.000000e+00> : vector<2x128xf32>
    %395 = tpu.matmul %394, %37, %cst_87 {dimension_numbers = #tpu.dot_dimension_numbers<[1], [0], [0], [1], [0, 0, 1, 1], [], []>} : vector<2x32xf32>, vector<32x128xf32>, vector<2x128xf32> -> vector<2x128xf32>
    %396 = arith.addf %372, %395 : vector<2x128xf32>
    %397 = vector.extract_strided_slice %396 {offsets = [0, 0], sizes = [2, 96], strides = [1, 1]} : vector<2x128xf32> to vector<2x96xf32>
    %398 = arith.negf %397 : vector<2x96xf32>
    %399 = math.exp %398 : vector<2x96xf32>
    %cst_88 = arith.constant 1.000000e+00 : f32
    %400 = vector.broadcast %cst_88 : f32 to vector<2x96xf32>
    %401 = arith.addf %400, %399 : vector<2x96xf32>
    %402 = arith.divf %400, %401 : vector<2x96xf32>
    %403 = vector.extract_strided_slice %396 {offsets = [0, 96], sizes = [2, 32], strides = [1, 1]} : vector<2x128xf32> to vector<2x32xf32>
    %404 = math.tanh %403 : vector<2x32xf32>
    %405 = vector.extract_strided_slice %402 {offsets = [0, 0], sizes = [2, 32], strides = [1, 1]} : vector<2x96xf32> to vector<2x32xf32>
    %406 = vector.extract_strided_slice %402 {offsets = [0, 32], sizes = [2, 32], strides = [1, 1]} : vector<2x96xf32> to vector<2x32xf32>
    %407 = vector.extract_strided_slice %402 {offsets = [0, 64], sizes = [2, 32], strides = [1, 1]} : vector<2x96xf32> to vector<2x32xf32>
    %408 = arith.mulf %406, %363 : vector<2x32xf32>
    %409 = arith.mulf %405, %404 : vector<2x32xf32>
    %410 = arith.addf %408, %409 : vector<2x32xf32>
    %411 = math.tanh %410 : vector<2x32xf32>
    %412 = arith.mulf %407, %411 : vector<2x32xf32>
    %413 = vector.extract_strided_slice %412 {offsets = [0, 0], sizes = [1, 32], strides = [1, 1]} : vector<2x32xf32> to vector<1x32xf32>
    %c7 = arith.constant 7 : index
    %c0_89 = arith.constant 0 : index
    %414 = vector.load %arg13[%c7, %c0_89] : memref<8x64xf32, #tpu.memory_space<vmem>>, vector<1x32xf32>
    tpu.vector_store %arg13[%c7, %c0_89], %413 {strides = array<i32>} : memref<8x64xf32, #tpu.memory_space<vmem>>, vector<1x32xf32>,
    %415 = vector.extract_strided_slice %412 {offsets = [1, 0], sizes = [1, 32], strides = [1, 1]} : vector<2x32xf32> to vector<1x32xf32>
    %c7_90 = arith.constant 7 : index
    %c32_91 = arith.constant 32 : index
    %416 = vector.load %arg13[%c7_90, %c32_91] : memref<8x64xf32, #tpu.memory_space<vmem>>, vector<1x32xf32>
    tpu.vector_store %arg13[%c7_90, %c32_91], %415 {strides = array<i32>} : memref<8x64xf32, #tpu.memory_space<vmem>>, vector<1x32xf32>,
    %c0_92 = arith.constant 0 : index
    %c0_93 = arith.constant 0 : index
    %417 = vector.load %arg13[%c0_92, %c0_93] : memref<8x64xf32, #tpu.memory_space<vmem>>, vector<8x64xf32>
    %c0_94 = arith.constant 0 : index
    %c0_95 = arith.constant 0 : index
    %418 = vector.load %arg10[%c0_94, %c0_95] : memref<64x16xf32, #tpu.memory_space<vmem>>, vector<64x16xf32>
    %cst_96 = arith.constant dense<0.000000e+00> : vector<8x16xf32>
    %419 = tpu.matmul %417, %418, %cst_96 {dimension_numbers = #tpu.dot_dimension_numbers<[1], [0], [0], [1], [0, 0, 1, 1], [], []>} : vector<8x64xf32>, vector<64x16xf32>, vector<8x16xf32> -> vector<8x16xf32>
    %c0_97 = arith.constant 0 : index
    %c0_98 = arith.constant 0 : index
    %420 = vector.load %arg11[%c0_97, %c0_98] : memref<1x16xf32, #tpu.memory_space<vmem>>, vector<1x16xf32>
    %421 = vector.broadcast %420 : vector<1x16xf32> to vector<8x16xf32>
    %422 = arith.addf %419, %421 : vector<8x16xf32>
    %c0_99 = arith.constant 0 : index
    %c0_100 = arith.constant 0 : index
    %423 = vector.load %arg2[%c0_99, %c0_100] : memref<8x1xf32, #tpu.memory_space<vmem>>, vector<8x1xf32>
    %424 = vector.broadcast %423 : vector<8x1xf32> to vector<8x16xf32>
    %425 = arith.subf %422, %424 : vector<8x16xf32>
    %c0_101 = arith.constant 0 : index
    %c0_102 = arith.constant 0 : index
    %426 = vector.load %arg3[%c0_101, %c0_102] : memref<8x1xf32, #tpu.memory_space<vmem>>, vector<8x1xf32>
    %427 = vector.broadcast %426 : vector<8x1xf32> to vector<8x16xf32>
    %428 = arith.mulf %425, %427 : vector<8x16xf32>
    %429 = vector.broadcast %23 : vector<8x1xf32> to vector<8x16xf32>
    %430 = arith.mulf %428, %429 : vector<8x16xf32>
    %431 = vector.broadcast %10 : vector<8x1xf32> to vector<8x16xf32>
    %432 = arith.addf %430, %431 : vector<8x16xf32>
    %433 = vector.extract_strided_slice %432 {offsets = [0, 0], sizes = [4, 16], strides = [1, 1]} : vector<8x16xf32> to vector<4x16xf32>
    %434 = tpu.transpose %433, [1, 0] : vector<4x16xf32> -> vector<16x4xf32>
    %c0_103 = arith.constant 0 : index
    %c0_104 = arith.constant 0 : index
    %c0_105 = arith.constant 0 : index
    %435 = vector.load %arg12[%c0_103, %c0_104, %c0_105] : memref<2x16x4xf32, #tpu.memory_space<vmem>>, vector<1x16x4xf32>
    %436 = vector.shape_cast %435 : vector<1x16x4xf32> to vector<16x4xf32>
    %437 = vector.shape_cast %434 : vector<16x4xf32> to vector<1x16x4xf32>
    tpu.vector_store %arg12[%c0_103, %c0_104, %c0_105], %437 {strides = array<i32>} : memref<2x16x4xf32, #tpu.memory_space<vmem>>, vector<1x16x4xf32>,
    %438 = vector.extract_strided_slice %432 {offsets = [4, 0], sizes = [4, 16], strides = [1, 1]} : vector<8x16xf32> to vector<4x16xf32>
    %439 = tpu.transpose %438, [1, 0] : vector<4x16xf32> -> vector<16x4xf32>
    %c1_106 = arith.constant 1 : index
    %c0_107 = arith.constant 0 : index
    %c0_108 = arith.constant 0 : index
    %440 = vector.load %arg12[%c1_106, %c0_107, %c0_108] : memref<2x16x4xf32, #tpu.memory_space<vmem>>, vector<1x16x4xf32>
    %441 = vector.shape_cast %440 : vector<1x16x4xf32> to vector<16x4xf32>
    %442 = vector.shape_cast %439 : vector<16x4xf32> to vector<1x16x4xf32>
    tpu.vector_store %arg12[%c1_106, %c0_107, %c0_108], %442 {strides = array<i32>} : memref<2x16x4xf32, #tpu.memory_space<vmem>>, vector<1x16x4xf32>,
    return
  }
}

</mosaic_0001>

<llo_original>
// kernel: model_forward.1
$region0: #{model_forward.1}
  #allocation0 [shape = 'u32[]', space=smem, size = 0x4, offset = 0x4, fixed_abs, tag = 'smem constant byte address 0x4 - core index']
  #allocation1 [shape = 'u32[144,128]{1,0:T(1,128)}', space=vmem, size = 0x12000, scoped, tag = 'internal scratch']
  #allocation2 [shape = 'f32[8,64]{1,0:T(8,128)}', space=vmem, size = 0x1000, scoped, tag = 'scratch operand']
  %s0 = inlined_call_operand.vmem [shape: f32[2,48,4], index: 0, kind: input, shape index: {}]
  %s1 = inlined_call_operand.vmem [shape: f32[8,1], index: 1, kind: input, shape index: {}]
  %s2 = inlined_call_operand.vmem [shape: f32[8,1], index: 2, kind: input, shape index: {}]
  %s3 = inlined_call_operand.vmem [shape: f32[8,1], index: 3, kind: input, shape index: {}]
  %s4 = inlined_call_operand.vmem [shape: f32[48,256], index: 4, kind: input, shape index: {}]
  %s5 = inlined_call_operand.vmem [shape: f32[1,256], index: 5, kind: input, shape index: {}]
  %s6 = inlined_call_operand.vmem [shape: f32[32,128], index: 6, kind: input, shape index: {}]
  %s7 = inlined_call_operand.vmem [shape: f32[32,128], index: 7, kind: input, shape index: {}]
  %s8 = inlined_call_operand.vmem [shape: f32[32,128], index: 8, kind: input, shape index: {}]
  %s9 = inlined_call_operand.vmem [shape: f32[1,128], index: 9, kind: input, shape index: {}]
  %s10 = inlined_call_operand.vmem [shape: f32[64,16], index: 10, kind: input, shape index: {}]
  %s11 = inlined_call_operand.vmem [shape: f32[1,16], index: 11, kind: input, shape index: {}]
  %s12 = inlined_call_operand.vmem [shape: f32[2,16,4], index: 12, kind: output, shape index: {}]
  %s13 = sld [smem:[#allocation0]]
  $region58: #{model_forward.1} parent=0
    _
  %s15 = ssub.s32 1, %s13
  %s16 = scalar_select 0, %s15, %s13
  // Predicated region
  $region2: #{model_forward.1} parent=0 // pred_check
    _
  $region3: #{model_forward.1} parent=0 // pred_check_branch
    %18 = sbr.rel (0) target = $region5
  $region4: #{model_forward.1} parent=0 // pred_region
    _
  $region5: #{model_forward.1} parent=0 // pred_fallthru
    _
  // Predicated region
  $region6: #{model_forward.1} parent=0 // pred_check
    _
  $region7: #{model_forward.1} parent=0 // pred_check_branch
    %20 = sbr.rel (0) target = $region9
  $region8: #{model_forward.1} parent=0 // pred_region
    _
  $region9: #{model_forward.1} parent=0 // pred_fallthru
    _
  // Predicated region
  $region10: #{model_forward.1} parent=0 // pred_check
    _
  $region11: #{model_forward.1} parent=0 // pred_check_branch
    %22 = sbr.rel (0) target = $region13
  $region12: #{model_forward.1} parent=0 // pred_region
    _
  $region13: #{model_forward.1} parent=0 // pred_fallthru
    _
  // Predicated region
  $region14: #{model_forward.1} parent=0 // pred_check
    _
  $region15: #{model_forward.1} parent=0 // pred_check_branch
    %24 = sbr.rel (0) target = $region17
  $region16: #{model_forward.1} parent=0 // pred_region
    _
  $region17: #{model_forward.1} parent=0 // pred_fallthru
    _
  // Predicated region
  $region18: #{model_forward.1} parent=0 // pred_check
    _
  $region19: #{model_forward.1} parent=0 // pred_check_branch
    %26 = sbr.rel (0) target = $region21
  $region20: #{model_forward.1} parent=0 // pred_region
    _
  $region21: #{model_forward.1} parent=0 // pred_fallthru
    _
  // Predicated region
  $region22: #{model_forward.1} parent=0 // pred_check
    _
  $region23: #{model_forward.1} parent=0 // pred_check_branch
    %28 = sbr.rel (0) target = $region25
  $region24: #{model_forward.1} parent=0 // pred_region
    _
  $region25: #{model_forward.1} parent=0 // pred_fallthru
    _
  // Predicated region
  $region26: #{model_forward.1} parent=0 // pred_check
    _
  $region27: #{model_forward.1} parent=0 // pred_check_branch
    %30 = sbr.rel (0) target = $region29
  $region28: #{model_forward.1} parent=0 // pred_region
    _
  $region29: #{model_forward.1} parent=0 // pred_fallthru
    _
  // Predicated region
  $region30: #{model_forward.1} parent=0 // pred_check
    _
  $region31: #{model_forward.1} parent=0 // pred_check_branch
    %32 = sbr.rel (0) target = $region33
  $region32: #{model_forward.1} parent=0 // pred_region
    _
  $region33: #{model_forward.1} parent=0 // pred_fallthru
    _
  // Predicated region
  $region34: #{model_forward.1} parent=0 // pred_check
    _
  $region35: #{model_forward.1} parent=0 // pred_check_branch
    %34 = sbr.rel (0) target = $region37
  $region36: #{model_forward.1} parent=0 // pred_region
    _
  $region37: #{model_forward.1} parent=0 // pred_fallthru
    _
  // Predicated region
  $region38: #{model_forward.1} parent=0 // pred_check
    _
  $region39: #{model_forward.1} parent=0 // pred_check_branch
    %36 = sbr.rel (0) target = $region41
  $region40: #{model_forward.1} parent=0 // pred_region
    _
  $region41: #{model_forward.1} parent=0 // pred_fallthru
    _
  // Predicated region
  $region42: #{model_forward.1} parent=0 // pred_check
    _
  $region43: #{model_forward.1} parent=0 // pred_check_branch
    %38 = sbr.rel (0) target = $region45
  $region44: #{model_forward.1} parent=0 // pred_region
    _
  $region45: #{model_forward.1} parent=0 // pred_fallthru
    _
  // Predicated region
  $region46: #{model_forward.1} parent=0 // pred_check
    _
  $region47: #{model_forward.1} parent=0 // pred_check_branch
    %40 = sbr.rel (0) target = $region49
  $region48: #{model_forward.1} parent=0 // pred_region
    _
  $region49: #{model_forward.1} parent=0 // pred_fallthru
    _
  %v41 = vld [vmem:[%s0] sm:$0xff]
  %v42 = vld [vmem:[%s0 + $0x8] sm:$0xff]
  %v43 = vld [vmem:[%s0 + $0x10] sm:$0xff]
  %v44 = vld [vmem:[%s0 + $0x18] sm:$0xff]
  %v45 = vld [vmem:[%s0 + $0x20] sm:$0xff]
  %v46 = vld [vmem:[%s0 + $0x28] sm:$0xff]
  %47 = vxpose.xlu0.b32.start [1/16] %v41, 128
  %48 = vxpose.xlu0.b32.cont [2/16] %v42, 128
  %49 = vxpose.xlu0.b32.cont [3/16] %v43, 128
  %50 = vxpose.xlu0.b32.cont [4/16] %v44, 128
  %51 = vxpose.xlu0.b32.cont [5/16] %v45, 128
  %52 = vxpose.xlu0.b32.cont [6/16] %v46, 128
  %53 = vxpose.xlu0.b32.cont [7/16] 0.0, 128
  %54 = vxpose.xlu0.b32.cont [8/16] 0.0, 128
  %55 = vxpose.xlu0.b32.cont [9/16] 0.0, 128
  %56 = vxpose.xlu0.b32.cont [10/16] 0.0, 128
  %57 = vxpose.xlu0.b32.cont [11/16] 0.0, 128
  %58 = vxpose.xlu0.b32.cont [12/16] 0.0, 128
  %59 = vxpose.xlu0.b32.cont [13/16] 0.0, 128
  %60 = vxpose.xlu0.b32.cont [14/16] 0.0, 128
  %61 = vxpose.xlu0.b32.cont [15/16] 0.0, 128
  %62 = vxpose.xlu0.b32.end [16/16] 0.0, 128
  %v63 = vpop.trf.xlu0
  %v64 = vpop.trf.xlu0
  %v65 = vpop.trf.xlu0
  %v66 = vpop.trf.xlu0
  %v67 = vpop.trf.xlu0
  %v68 = vpop.trf.xlu0
  %v69 = vpop.trf.xlu0
  %v70 = vpop.trf.xlu0
  %v71 = vpop.trf.xlu0
  %v72 = vpop.trf.xlu0
  %v73 = vpop.trf.xlu0
  %v74 = vpop.trf.xlu0
  %v75 = vpop.trf.xlu0
  %v76 = vpop.trf.xlu0
  %v77 = vpop.trf.xlu0
  %v78 = vpop.trf.xlu0
  %s79 = scalar_lea.vmem %s0, 48
  %v80 = vld [vmem:[%s79] sm:$0xff]
  %v81 = vld [vmem:[%s79 + $0x8] sm:$0xff]
  %v82 = vld [vmem:[%s79 + $0x10] sm:$0xff]
  %v83 = vld [vmem:[%s79 + $0x18] sm:$0xff]
  %v84 = vld [vmem:[%s79 + $0x20] sm:$0xff]
  %v85 = vld [vmem:[%s79 + $0x28] sm:$0xff]
  %86 = vxpose.xlu0.b32.start [1/16] %v80, 128
  %87 = vxpose.xlu0.b32.cont [2/16] %v81, 128
  %88 = vxpose.xlu0.b32.cont [3/16] %v82, 128
  %89 = vxpose.xlu0.b32.cont [4/16] %v83, 128
  %90 = vxpose.xlu0.b32.cont [5/16] %v84, 128
  %91 = vxpose.xlu0.b32.cont [6/16] %v85, 128
  %92 = vxpose.xlu0.b32.cont [7/16] 0.0, 128
  %93 = vxpose.xlu0.b32.cont [8/16] 0.0, 128
  %94 = vxpose.xlu0.b32.cont [9/16] 0.0, 128
  %95 = vxpose.xlu0.b32.cont [10/16] 0.0, 128
  %96 = vxpose.xlu0.b32.cont [11/16] 0.0, 128
  %97 = vxpose.xlu0.b32.cont [12/16] 0.0, 128
  %98 = vxpose.xlu0.b32.cont [13/16] 0.0, 128
  %99 = vxpose.xlu0.b32.cont [14/16] 0.0, 128
  %100 = vxpose.xlu0.b32.cont [15/16] 0.0, 128
  %101 = vxpose.xlu0.b32.end [16/16] 0.0, 128
  %v102 = vpop.trf.xlu0
  %v103 = vpop.trf.xlu0
  %v104 = vpop.trf.xlu0
  %v105 = vpop.trf.xlu0
  %v106 = vpop.trf.xlu0
  %v107 = vpop.trf.xlu0
  %v108 = vpop.trf.xlu0
  %v109 = vpop.trf.xlu0
  %v110 = vpop.trf.xlu0
  %v111 = vpop.trf.xlu0
  %v112 = vpop.trf.xlu0
  %v113 = vpop.trf.xlu0
  %v114 = vpop.trf.xlu0
  %v115 = vpop.trf.xlu0
  %v116 = vpop.trf.xlu0
  %v117 = vpop.trf.xlu0
  %v119 = vrot.slane %v102, 4
  %vm121 = vcmask 1043456
  %v122 = vsel %vm121, %v63, %v119
  %vm123 = vcmask 392192
  %v124 = vsel %vm123, %v122, 0.0
  %125 = vadd.xlane.f32.xlu0 %v124
  %v126 = vpop.xlane.xlu0 %125
  %v127 = vrcp.pop 48.0
  %v128 = vmul.f32 %v126, %v127
  %v129 = vsub.f32 %v122, %v128
  %v130 = vmul.f32 %v129, %v129
  %v131 = vsel %vm123, %v130, 0.0
  %132 = vadd.xlane.f32.xlu0 %v131
  %v133 = vpop.xlane.xlu0 %132
  %v134 = vmul.f32 %v133, %v127
  %v135 = vadd.f32 %v134, 1e-05
  %v136 = vrsqrt.pop %v135
  %v137 = vmul.f32 %v135, %v136
  %v138 = vld [vmem:[%s1] sm:$0xff]
  %v139 = vmul.f32 %v136, %v138
  %141 = vset.pattern.permute.xlu0 0
  %142 = vperm.xlu0 %141, %v139
  %v143 = vpop.permute.xlu0 %142
  %v145 = vmul.f32 %v129, %v143
  %v146 = vld [vmem:[%s2] sm:$0xff]
  %148 = vset.pattern.permute.xlu0 0
  %149 = vperm.xlu0 %148, %v146
  %v150 = vpop.permute.xlu0 %149
  %v152 = vadd.f32 %v145, %v150
  %v153 = vld [vmem:[%s4] sm:$0xff]
  %v154 = vld [vmem:[%s4 + $0x8] sm:$0xff]
  %v155 = vld [vmem:[%s4 + $0x10] sm:$0xff]
  %v156 = vld [vmem:[%s4 + $0x18] sm:$0xff]
  %v157 = vld [vmem:[%s4 + $0x20] sm:$0xff]
  %v158 = vld [vmem:[%s4 + $0x28] sm:$0xff]
  %v159 = vld [vmem:[%s4 + $0x30] sm:$0xff]
  %v160 = vld [vmem:[%s4 + $0x38] sm:$0xff]
  %v161 = vld [vmem:[%s4 + $0x40] sm:$0xff]
  %v162 = vld [vmem:[%s4 + $0x48] sm:$0xff]
  %v163 = vld [vmem:[%s4 + $0x50] sm:$0xff]
  %v164 = vld [vmem:[%s4 + $0x58] sm:$0xff]
  %v165 = vld [vmem:[%s5] sm:$0x3]
  %v167 = vlaneseq
  %v168 = vshrl.u32 %v167, 7
  %v169 = vsub.s32 0, %v168
  %v170 = vrot.slane %v165, %v169
  %v171 = vlaneseq
  %v172 = vshrl.u32 %v171, 7
  %v173 = vsub.s32 1, %v172
  %v174 = vrot.slane %v165, %v173
  %v178 = vsel %vm123, %v152, 0
  %180 = vmatprep.subr.mxu0 %v154
  %181 = vmatpush1.msra.mxu0 %v153
  %182 = vmatprep.subr.mxu0 %v156
  %183 = vmatpush1.msra.mxu0 %v155
  %184 = vmatprep.subr.mxu0 %v158
  %185 = vmatpush1.msra.mxu0 %v157
  %186 = vmatprep.subr.mxu0 %v160
  %187 = vmatpush1.msra.mxu0 %v159
  %188 = vmatprep.subr.mxu0 %v162
  %189 = vmatpush1.msra.mxu0 %v161
  %190 = vmatprep.subr.mxu0 %v164
  %191 = vmatpush1.msra.mxu0 %v163
  %192 = vmatprep.subr.mxu0 0.0
  %193 = vmatpush1.msra.mxu0 0.0
  %194 = vmatprep.subr.mxu0 0.0
  %195 = vmatpush1.msra.mxu0 0.0
  %196 = vmatprep.subr.mxu0 0.0
  %197 = vmatpush1.msra.mxu0 0.0
  %198 = vmatprep.subr.mxu0 0.0
  %199 = vmatpush1.msra.mxu0 0.0
  %200 = vmatprep.subr.mxu0 0.0
  %201 = vmatpush1.msra.mxu0 0.0
  %202 = vmatprep.subr.mxu0 0.0
  %203 = vmatpush1.msra.mxu0 0.0
  %204 = vmatprep.subr.mxu0 0.0
  %205 = vmatpush1.msra.mxu0 0.0
  %206 = vmatprep.subr.mxu0 0.0
  %207 = vmatpush1.msra.mxu0 0.0
  %208 = vmatprep.subr.mxu0 0.0
  %209 = vmatpush1.msra.mxu0 0.0
  %210 = vmatprep.subr.mxu0 0.0
  %211 = vmatpush1.msra.mxu0 0.0
  %212 = vmatprep.subr.mxu0 0.0
  %213 = vmatpush1.msra.mxu0 0.0
  %214 = vmatprep.subr.mxu0 0.0
  %215 = vmatpush1.msra.mxu0 0.0
  %216 = vmatprep.subr.mxu0 0.0
  %217 = vmatpush1.msra.mxu0 0.0
  %218 = vmatprep.subr.mxu0 0.0
  %219 = vmatpush1.msra.mxu0 0.0
  %220 = vmatprep.subr.mxu0 0.0
  %221 = vmatpush1.msra.mxu0 0.0
  %222 = vmatprep.subr.mxu0 0.0
  %223 = vmatpush1.msra.mxu0 0.0
  %224 = vmatprep.subr.mxu0 0.0
  %225 = vmatpush1.msra.mxu0 0.0
  %226 = vmatprep.subr.mxu0 0.0
  %227 = vmatpush1.msra.mxu0 0.0
  %228 = vmatprep.subr.mxu0 0.0
  %229 = vmatpush1.msra.mxu0 0.0
  %230 = vmatprep.subr.mxu0 0.0
  %231 = vmatpush1.msra.mxu0 0.0
  %232 = vmatprep.subr.mxu0 0.0
  %233 = vmatpush1.msra.mxu0 0.0
  %234 = vmatprep.subr.mxu0 0.0
  %235 = vmatpush1.msra.mxu0 0.0
  %236 = vmatprep.subr.mxu0 0.0
  %237 = vmatpush1.msra.mxu0 0.0
  %238 = vmatprep.subr.mxu0 0.0
  %239 = vmatpush1.msra.mxu0 0.0
  %240 = vmatprep.subr.mxu0 0.0
  %241 = vmatpush1.msra.mxu0 0.0
  %242 = vmatprep.subr.mxu0 0.0
  %243 = vmatpush1.msra.mxu0 0.0
  %244 = vmatprep.mubr.f32.mxu0 0.0
  %245 = vmatmul.mubr.f32.gmra.mrb[0].mxu0 %v178
  %v246 = vpop.f32.mrb[0].mxu0
  %v247 = vadd.f32 %v170, %v246
  %v248 = vpop.f32.mrb[0].mxu0
  %v249 = vadd.f32 %v174, %v248
  %250 = vdwg.mxu0
  %v251 = vld [vmem:[%s6] sm:$0xff]
  %v252 = vld [vmem:[%s6 + $0x8] sm:$0xff]
  %v253 = vld [vmem:[%s6 + $0x10] sm:$0xff]
  %v254 = vld [vmem:[%s6 + $0x18] sm:$0xff]
  %v255 = vld [vmem:[%s7] sm:$0xff]
  %v256 = vld [vmem:[%s7 + $0x8] sm:$0xff]
  %v257 = vld [vmem:[%s7 + $0x10] sm:$0xff]
  %v258 = vld [vmem:[%s7 + $0x18] sm:$0xff]
  %v259 = vld [vmem:[%s8] sm:$0xff]
  %v260 = vld [vmem:[%s8 + $0x8] sm:$0xff]
  %v261 = vld [vmem:[%s8 + $0x10] sm:$0xff]
  %v262 = vld [vmem:[%s8 + $0x18] sm:$0xff]
  %v263 = vld [vmem:[%s9] sm:$0x1]
  %v265 = vlaneseq
  %v266 = vshrl.u32 %v265, 7
  %v267 = vsub.s32 0, %v266
  %v268 = vrot.slane %v263, %v267
  %vm270 = vcmask 261120
  %v272 = vsel %vm270, 0.0, 0
  %274 = vmatprep.subr.mxu0 0.0
  %275 = vmatpush1.msra.mxu0 %v259
  %276 = vmatprep.subr.mxu0 0.0
  %277 = vmatpush1.msra.mxu0 %v260
  %278 = vmatprep.subr.mxu0 0.0
  %279 = vmatpush1.msra.mxu0 %v261
  %280 = vmatprep.subr.mxu0 0.0
  %281 = vmatpush1.msra.mxu0 %v262
  %282 = vmatprep.subr.mxu0 0.0
  %283 = vmatpush1.msra.mxu0 0.0
  %284 = vmatprep.subr.mxu0 0.0
  %285 = vmatpush1.msra.mxu0 0.0
  %286 = vmatprep.subr.mxu0 0.0
  %287 = vmatpush1.msra.mxu0 0.0
  %288 = vmatprep.subr.mxu0 0.0
  %289 = vmatpush1.msra.mxu0 0.0
  %290 = vmatprep.subr.mxu0 0.0
  %291 = vmatpush1.msra.mxu0 0.0
  %292 = vmatprep.subr.mxu0 0.0
  %293 = vmatpush1.msra.mxu0 0.0
  %294 = vmatprep.subr.mxu0 0.0
  %295 = vmatpush1.msra.mxu0 0.0
  %296 = vmatprep.subr.mxu0 0.0
  %297 = vmatpush1.msra.mxu0 0.0
  %298 = vmatprep.subr.mxu0 0.0
  %299 = vmatpush1.msra.mxu0 0.0
  %300 = vmatprep.subr.mxu0 0.0
  %301 = vmatpush1.msra.mxu0 0.0
  %302 = vmatprep.subr.mxu0 0.0
  %303 = vmatpush1.msra.mxu0 0.0
  %304 = vmatprep.subr.mxu0 0.0
  %305 = vmatpush1.msra.mxu0 0.0
  %306 = vmatprep.subr.mxu0 0.0
  %307 = vmatpush1.msra.mxu0 0.0
  %308 = vmatprep.subr.mxu0 0.0
  %309 = vmatpush1.msra.mxu0 0.0
  %310 = vmatprep.subr.mxu0 0.0
  %311 = vmatpush1.msra.mxu0 0.0
  %312 = vmatprep.subr.mxu0 0.0
  %313 = vmatpush1.msra.mxu0 0.0
  %314 = vmatprep.subr.mxu0 0.0
  %315 = vmatpush1.msra.mxu0 0.0
  %316 = vmatprep.subr.mxu0 0.0
  %317 = vmatpush1.msra.mxu0 0.0
  %318 = vmatprep.subr.mxu0 0.0
  %319 = vmatpush1.msra.mxu0 0.0
  %320 = vmatprep.subr.mxu0 0.0
  %321 = vmatpush1.msra.mxu0 0.0
  %322 = vmatprep.subr.mxu0 0.0
  %323 = vmatpush1.msra.mxu0 0.0
  %324 = vmatprep.subr.mxu0 0.0
  %325 = vmatpush1.msra.mxu0 0.0
  %326 = vmatprep.subr.mxu0 0.0
  %327 = vmatpush1.msra.mxu0 0.0
  %328 = vmatprep.subr.mxu0 0.0
  %329 = vmatpush1.msra.mxu0 0.0
  %330 = vmatprep.subr.mxu0 0.0
  %331 = vmatpush1.msra.mxu0 0.0
  %332 = vmatprep.subr.mxu0 0.0
  %333 = vmatpush1.msra.mxu0 0.0
  %334 = vmatprep.subr.mxu0 0.0
  %335 = vmatpush1.msra.mxu0 0.0
  %336 = vmatprep.subr.mxu0 0.0
  %337 = vmatpush1.msra.mxu0 0.0
  %338 = vmatprep.mubr.f32.mxu0 0.0
  %339 = vmatmul.mubr.f32.gmra.mrb[0].mxu0 %v272
  %v340 = vpop.f32.mrb[0].mxu0
  %v341 = vadd.f32 %v268, %v340
  %v342 = vpop.f32.mrb[0].mxu0
  %343 = vdwg.mxu0
  %v345 = vrot.slane %v249, 7
  %vm347 = vcmask 1040384
  %v348 = vsel %vm347, %v247, %v345
  %349 = vmatprep.subr.mxu0 0.0
  %350 = vmatpush1.msra.mxu0 %v251
  %351 = vmatprep.subr.mxu0 0.0
  %352 = vmatpush1.msra.mxu0 %v252
  %353 = vmatprep.subr.mxu0 0.0
  %354 = vmatpush1.msra.mxu0 %v253
  %355 = vmatprep.subr.mxu0 0.0
  %356 = vmatpush1.msra.mxu0 %v254
  %357 = vmatprep.subr.mxu0 0.0
  %358 = vmatpush1.msra.mxu0 0.0
  %359 = vmatprep.subr.mxu0 0.0
  %360 = vmatpush1.msra.mxu0 0.0
  %361 = vmatprep.subr.mxu0 0.0
  %362 = vmatpush1.msra.mxu0 0.0
  %363 = vmatprep.subr.mxu0 0.0
  %364 = vmatpush1.msra.mxu0 0.0
  %365 = vmatprep.subr.mxu0 0.0
  %366 = vmatpush1.msra.mxu0 0.0
  %367 = vmatprep.subr.mxu0 0.0
  %368 = vmatpush1.msra.mxu0 0.0
  %369 = vmatprep.subr.mxu0 0.0
  %370 = vmatpush1.msra.mxu0 0.0
  %371 = vmatprep.subr.mxu0 0.0
  %372 = vmatpush1.msra.mxu0 0.0
  %373 = vmatprep.subr.mxu0 0.0
  %374 = vmatpush1.msra.mxu0 0.0
  %375 = vmatprep.subr.mxu0 0.0
  %376 = vmatpush1.msra.mxu0 0.0
  %377 = vmatprep.subr.mxu0 0.0
  %378 = vmatpush1.msra.mxu0 0.0
  %379 = vmatprep.subr.mxu0 0.0
  %380 = vmatpush1.msra.mxu0 0.0
  %381 = vmatprep.subr.mxu0 0.0
  %382 = vmatpush1.msra.mxu0 0.0
  %383 = vmatprep.subr.mxu0 0.0
  %384 = vmatpush1.msra.mxu0 0.0
  %385 = vmatprep.subr.mxu0 0.0
  %386 = vmatpush1.msra.mxu0 0.0
  %387 = vmatprep.subr.mxu0 0.0
  %388 = vmatpush1.msra.mxu0 0.0
  %389 = vmatprep.subr.mxu0 0.0
  %390 = vmatpush1.msra.mxu0 0.0
  %391 = vmatprep.subr.mxu0 0.0
  %392 = vmatpush1.msra.mxu0 0.0
  %393 = vmatprep.subr.mxu0 0.0
  %394 = vmatpush1.msra.mxu0 0.0
  %395 = vmatprep.subr.mxu0 0.0
  %396 = vmatpush1.msra.mxu0 0.0
  %397 = vmatprep.subr.mxu0 0.0
  %398 = vmatpush1.msra.mxu0 0.0
  %399 = vmatprep.subr.mxu0 0.0
  %400 = vmatpush1.msra.mxu0 0.0
  %401 = vmatprep.subr.mxu0 0.0
  %402 = vmatpush1.msra.mxu0 0.0
  %403 = vmatprep.subr.mxu0 0.0
  %404 = vmatpush1.msra.mxu0 0.0
  %405 = vmatprep.subr.mxu0 0.0
  %406 = vmatpush1.msra.mxu0 0.0
  %407 = vmatprep.subr.mxu0 0.0
  %408 = vmatpush1.msra.mxu0 0.0
  %409 = vmatprep.subr.mxu0 0.0
  %410 = vmatpush1.msra.mxu0 0.0
  %411 = vmatprep.subr.mxu0 0.0
  %412 = vmatpush1.msra.mxu0 0.0
  %413 = vmatprep.mubr.f32.mxu0 0.0
  %414 = vmatmul.mubr.f32.gmra.mrb[0].mxu0 %v272
  %v415 = vpop.f32.mrb[0].mxu0
  %v416 = vadd.f32 0.0, %v415
  %v417 = vpop.f32.mrb[0].mxu0
  %418 = vdwg.mxu0
  %v419 = vadd.f32 %v348, %v416
  %v420 = vxor.u32 %v419, 2147483648
  %v421 = vmul.f32 %v420, 1.442695
  %v422 = vpow.pop %v421
  %v423 = vadd.f32 %v422, 1.0
  %v424 = vrcp.pop %v423
  %v425 = vmul.f32 1.0, %v424
  %v426 = vtanh.pop %v419
  %v427 = vmul.f32 %v425, 0.0
  %429 = vrot.lane.b32.xlu0 %v426, 32
  %v430 = vpop.permute.xlu0 %429
  %v432 = vmul.f32 %v425, %v430
  %434 = vrot.lane.b32.xlu0 %v432, 32
  %v435 = vpop.permute.xlu0 %434
  %v437 = vadd.f32 %v427, %v435
  %v438 = vtanh.pop %v437
  %440 = vrot.lane.b32.xlu0 %v438, 32
  %v441 = vpop.permute.xlu0 %440
  %v443 = vmul.f32 %v425, %v441
  %445 = vrot.lane.b32.xlu0 %v443, 64
  %v446 = vpop.permute.xlu0 %445
  %v447 = vsel %vm270, %v446, 0
  %449 = vmatprep.subr.mxu0 0.0
  %450 = vmatpush1.msra.mxu0 %v255
  %451 = vmatprep.subr.mxu0 0.0
  %452 = vmatpush1.msra.mxu0 %v256
  %453 = vmatprep.subr.mxu0 0.0
  %454 = vmatpush1.msra.mxu0 %v257
  %455 = vmatprep.subr.mxu0 0.0
  %456 = vmatpush1.msra.mxu0 %v258
  %457 = vmatprep.subr.mxu0 0.0
  %458 = vmatpush1.msra.mxu0 0.0
  %459 = vmatprep.subr.mxu0 0.0
  %460 = vmatpush1.msra.mxu0 0.0
  %461 = vmatprep.subr.mxu0 0.0
  %462 = vmatpush1.msra.mxu0 0.0
  %463 = vmatprep.subr.mxu0 0.0
  %464 = vmatpush1.msra.mxu0 0.0
  %465 = vmatprep.subr.mxu0 0.0
  %466 = vmatpush1.msra.mxu0 0.0
  %467 = vmatprep.subr.mxu0 0.0
  %468 = vmatpush1.msra.mxu0 0.0
  %469 = vmatprep.subr.mxu0 0.0
  %470 = vmatpush1.msra.mxu0 0.0
  %471 = vmatprep.subr.mxu0 0.0
  %472 = vmatpush1.msra.mxu0 0.0
  %473 = vmatprep.subr.mxu0 0.0
  %474 = vmatpush1.msra.mxu0 0.0
  %475 = vmatprep.subr.mxu0 0.0
  %476 = vmatpush1.msra.mxu0 0.0
  %477 = vmatprep.subr.mxu0 0.0
  %478 = vmatpush1.msra.mxu0 0.0
  %479 = vmatprep.subr.mxu0 0.0
  %480 = vmatpush1.msra.mxu0 0.0
  %481 = vmatprep.subr.mxu0 0.0
  %482 = vmatpush1.msra.mxu0 0.0
  %483 = vmatprep.subr.mxu0 0.0
  %484 = vmatpush1.msra.mxu0 0.0
  %485 = vmatprep.subr.mxu0 0.0
  %486 = vmatpush1.msra.mxu0 0.0
  %487 = vmatprep.subr.mxu0 0.0
  %488 = vmatpush1.msra.mxu0 0.0
  %489 = vmatprep.subr.mxu0 0.0
  %490 = vmatpush1.msra.mxu0 0.0
  %491 = vmatprep.subr.mxu0 0.0
  %492 = vmatpush1.msra.mxu0 0.0
  %493 = vmatprep.subr.mxu0 0.0
  %494 = vmatpush1.msra.mxu0 0.0
  %495 = vmatprep.subr.mxu0 0.0
  %496 = vmatpush1.msra.mxu0 0.0
  %497 = vmatprep.subr.mxu0 0.0
  %498 = vmatpush1.msra.mxu0 0.0
  %499 = vmatprep.subr.mxu0 0.0
  %500 = vmatpush1.msra.mxu0 0.0
  %501 = vmatprep.subr.mxu0 0.0
  %502 = vmatpush1.msra.mxu0 0.0
  %503 = vmatprep.subr.mxu0 0.0
  %504 = vmatpush1.msra.mxu0 0.0
  %505 = vmatprep.subr.mxu0 0.0
  %506 = vmatpush1.msra.mxu0 0.0
  %507 = vmatprep.subr.mxu0 0.0
  %508 = vmatpush1.msra.mxu0 0.0
  %509 = vmatprep.subr.mxu0 0.0
  %510 = vmatpush1.msra.mxu0 0.0
  %511 = vmatprep.subr.mxu0 0.0
  %512 = vmatpush1.msra.mxu0 0.0
  %513 = vmatprep.mubr.f32.mxu0 0.0
  %514 = vmatmul.mubr.f32.gmra.mrb[0].mxu0 %v447
  %v515 = vpop.f32.mrb[0].mxu0
  %v516 = vadd.f32 0.0, %v515
  %v517 = vpop.f32.mrb[0].mxu0
  %518 = vdwg.mxu0
  %v519 = vadd.f32 %v341, %v516
  %v520 = vxor.u32 %v519, 2147483648
  %v521 = vmul.f32 %v520, 1.442695
  %v522 = vpow.pop %v521
  %v523 = vadd.f32 %v522, 1.0
  %v524 = vrcp.pop %v523
  %v525 = vmul.f32 1.0, %v524
  %v526 = vtanh.pop %v519
  %v527 = vmul.f32 %v525, 0.0
  %529 = vrot.lane.b32.xlu0 %v526, 32
  %v530 = vpop.permute.xlu0 %529
  %v532 = vmul.f32 %v525, %v530
  %534 = vrot.lane.b32.xlu0 %v532, 32
  %v535 = vpop.permute.xlu0 %534
  %v537 = vadd.f32 %v527, %v535
  %v538 = vtanh.pop %v537
  %540 = vrot.lane.b32.xlu0 %v538, 32
  %v541 = vpop.permute.xlu0 %540
  %v543 = vmul.f32 %v525, %v541
  %545 = vrot.lane.b32.xlu0 %v543, 64
  %v546 = vpop.permute.xlu0 %545
  %vm548 = vcmask 253952
  %549 = vst.msk [vmem:[#allocation2] sm:$0x1] %vm548, %v546
  %550 = vrot.lane.b32.xlu0 %v543, 96
  %v551 = vpop.permute.xlu0 %550
  %vm553 = vcmask 517377
  %554 = vst.msk [vmem:[#allocation2 - $0x1] sm:$0x2] %vm553, %v551
  %v555 = vsel %vm270, %v546, 0
  %557 = vmatprep.subr.mxu0 0.0
  %558 = vmatpush1.msra.mxu0 %v259
  %559 = vmatprep.subr.mxu0 0.0
  %560 = vmatpush1.msra.mxu0 %v260
  %561 = vmatprep.subr.mxu0 0.0
  %562 = vmatpush1.msra.mxu0 %v261
  %563 = vmatprep.subr.mxu0 0.0
  %564 = vmatpush1.msra.mxu0 %v262
  %565 = vmatprep.subr.mxu0 0.0
  %566 = vmatpush1.msra.mxu0 0.0
  %567 = vmatprep.subr.mxu0 0.0
  %568 = vmatpush1.msra.mxu0 0.0
  %569 = vmatprep.subr.mxu0 0.0
  %570 = vmatpush1.msra.mxu0 0.0
  %571 = vmatprep.subr.mxu0 0.0
  %572 = vmatpush1.msra.mxu0 0.0
  %573 = vmatprep.subr.mxu0 0.0
  %574 = vmatpush1.msra.mxu0 0.0
  %575 = vmatprep.subr.mxu0 0.0
  %576 = vmatpush1.msra.mxu0 0.0
  %577 = vmatprep.subr.mxu0 0.0
  %578 = vmatpush1.msra.mxu0 0.0
  %579 = vmatprep.subr.mxu0 0.0
  %580 = vmatpush1.msra.mxu0 0.0
  %581 = vmatprep.subr.mxu0 0.0
  %582 = vmatpush1.msra.mxu0 0.0
  %583 = vmatprep.subr.mxu0 0.0
  %584 = vmatpush1.msra.mxu0 0.0
  %585 = vmatprep.subr.mxu0 0.0
  %586 = vmatpush1.msra.mxu0 0.0
  %587 = vmatprep.subr.mxu0 0.0
  %588 = vmatpush1.msra.mxu0 0.0
  %589 = vmatprep.subr.mxu0 0.0
  %590 = vmatpush1.msra.mxu0 0.0
  %591 = vmatprep.subr.mxu0 0.0
  %592 = vmatpush1.msra.mxu0 0.0
  %593 = vmatprep.subr.mxu0 0.0
  %594 = vmatpush1.msra.mxu0 0.0
  %595 = vmatprep.subr.mxu0 0.0
  %596 = vmatpush1.msra.mxu0 0.0
  %597 = vmatprep.subr.mxu0 0.0
  %598 = vmatpush1.msra.mxu0 0.0
  %599 = vmatprep.subr.mxu0 0.0
  %600 = vmatpush1.msra.mxu0 0.0
  %601 = vmatprep.subr.mxu0 0.0
  %602 = vmatpush1.msra.mxu0 0.0
  %603 = vmatprep.subr.mxu0 0.0
  %604 = vmatpush1.msra.mxu0 0.0
  %605 = vmatprep.subr.mxu0 0.0
  %606 = vmatpush1.msra.mxu0 0.0
  %607 = vmatprep.subr.mxu0 0.0
  %608 = vmatpush1.msra.mxu0 0.0
  %609 = vmatprep.subr.mxu0 0.0
  %610 = vmatpush1.msra.mxu0 0.0
  %611 = vmatprep.subr.mxu0 0.0
  %612 = vmatpush1.msra.mxu0 0.0
  %613 = vmatprep.subr.mxu0 0.0
  %614 = vmatpush1.msra.mxu0 0.0
  %615 = vmatprep.subr.mxu0 0.0
  %616 = vmatpush1.msra.mxu0 0.0
  %617 = vmatprep.subr.mxu0 0.0
  %618 = vmatpush1.msra.mxu0 0.0
  %619 = vmatprep.subr.mxu0 0.0
  %620 = vmatpush1.msra.mxu0 0.0
  %621 = vmatprep.mubr.f32.mxu0 0.0
  %622 = vmatmul.mubr.f32.gmra.mrb[0].mxu0 %v555
  %v623 = vpop.f32.mrb[0].mxu0
  %v624 = vadd.f32 %v268, %v623
  %v625 = vpop.f32.mrb[0].mxu0
  %626 = vdwg.mxu0
  %v628 = vrot.slane %v247, 1
  %v630 = vsel %vm347, %v628, %v249
  %631 = vmatprep.subr.mxu0 0.0
  %632 = vmatpush1.msra.mxu0 %v251
  %633 = vmatprep.subr.mxu0 0.0
  %634 = vmatpush1.msra.mxu0 %v252
  %635 = vmatprep.subr.mxu0 0.0
  %636 = vmatpush1.msra.mxu0 %v253
  %637 = vmatprep.subr.mxu0 0.0
  %638 = vmatpush1.msra.mxu0 %v254
  %639 = vmatprep.subr.mxu0 0.0
  %640 = vmatpush1.msra.mxu0 0.0
  %641 = vmatprep.subr.mxu0 0.0
  %642 = vmatpush1.msra.mxu0 0.0
  %643 = vmatprep.subr.mxu0 0.0
  %644 = vmatpush1.msra.mxu0 0.0
  %645 = vmatprep.subr.mxu0 0.0
  %646 = vmatpush1.msra.mxu0 0.0
  %647 = vmatprep.subr.mxu0 0.0
  %648 = vmatpush1.msra.mxu0 0.0
  %649 = vmatprep.subr.mxu0 0.0
  %650 = vmatpush1.msra.mxu0 0.0
  %651 = vmatprep.subr.mxu0 0.0
  %652 = vmatpush1.msra.mxu0 0.0
  %653 = vmatprep.subr.mxu0 0.0
  %654 = vmatpush1.msra.mxu0 0.0
  %655 = vmatprep.subr.mxu0 0.0
  %656 = vmatpush1.msra.mxu0 0.0
  %657 = vmatprep.subr.mxu0 0.0
  %658 = vmatpush1.msra.mxu0 0.0
  %659 = vmatprep.subr.mxu0 0.0
  %660 = vmatpush1.msra.mxu0 0.0
  %661 = vmatprep.subr.mxu0 0.0
  %662 = vmatpush1.msra.mxu0 0.0
  %663 = vmatprep.subr.mxu0 0.0
  %664 = vmatpush1.msra.mxu0 0.0
  %665 = vmatprep.subr.mxu0 0.0
  %666 = vmatpush1.msra.mxu0 0.0
  %667 = vmatprep.subr.mxu0 0.0
  %668 = vmatpush1.msra.mxu0 0.0
  %669 = vmatprep.subr.mxu0 0.0
  %670 = vmatpush1.msra.mxu0 0.0
  %671 = vmatprep.subr.mxu0 0.0
  %672 = vmatpush1.msra.mxu0 0.0
  %673 = vmatprep.subr.mxu0 0.0
  %674 = vmatpush1.msra.mxu0 0.0
  %675 = vmatprep.subr.mxu0 0.0
  %676 = vmatpush1.msra.mxu0 0.0
  %677 = vmatprep.subr.mxu0 0.0
  %678 = vmatpush1.msra.mxu0 0.0
  %679 = vmatprep.subr.mxu0 0.0
  %680 = vmatpush1.msra.mxu0 0.0
  %681 = vmatprep.subr.mxu0 0.0
  %682 = vmatpush1.msra.mxu0 0.0
  %683 = vmatprep.subr.mxu0 0.0
  %684 = vmatpush1.msra.mxu0 0.0
  %685 = vmatprep.subr.mxu0 0.0
  %686 = vmatpush1.msra.mxu0 0.0
  %687 = vmatprep.subr.mxu0 0.0
  %688 = vmatpush1.msra.mxu0 0.0
  %689 = vmatprep.subr.mxu0 0.0
  %690 = vmatpush1.msra.mxu0 0.0
  %691 = vmatprep.subr.mxu0 0.0
  %692 = vmatpush1.msra.mxu0 0.0
  %693 = vmatprep.subr.mxu0 0.0
  %694 = vmatpush1.msra.mxu0 0.0
  %695 = vmatprep.mubr.f32.mxu0 0.0
  %696 = vmatmul.mubr.f32.gmra.mrb[0].mxu0 %v447
  %v697 = vpop.f32.mrb[0].mxu0
  %v698 = vadd.f32 0.0, %v697
  %v699 = vpop.f32.mrb[0].mxu0
  %700 = vdwg.mxu0
  %v701 = vadd.f32 %v630, %v698
  %v702 = vxor.u32 %v701, 2147483648
  %v703 = vmul.f32 %v702, 1.442695
  %v704 = vpow.pop %v703
  %v705 = vadd.f32 %v704, 1.0
  %v706 = vrcp.pop %v705
  %v707 = vmul.f32 1.0, %v706
  %v708 = vtanh.pop %v701
  %v709 = vmul.f32 %v707, %v437
  %711 = vrot.lane.b32.xlu0 %v708, 32
  %v712 = vpop.permute.xlu0 %711
  %v714 = vmul.f32 %v707, %v712
  %716 = vrot.lane.b32.xlu0 %v714, 32
  %v717 = vpop.permute.xlu0 %716
  %v719 = vadd.f32 %v709, %v717
  %v720 = vtanh.pop %v719
  %722 = vrot.lane.b32.xlu0 %v720, 32
  %v723 = vpop.permute.xlu0 %722
  %v725 = vmul.f32 %v707, %v723
  %727 = vrot.lane.b32.xlu0 %v725, 64
  %v728 = vpop.permute.xlu0 %727
  %v729 = vsel %vm270, %v728, 0
  %731 = vmatprep.subr.mxu0 0.0
  %732 = vmatpush1.msra.mxu0 %v255
  %733 = vmatprep.subr.mxu0 0.0
  %734 = vmatpush1.msra.mxu0 %v256
  %735 = vmatprep.subr.mxu0 0.0
  %736 = vmatpush1.msra.mxu0 %v257
  %737 = vmatprep.subr.mxu0 0.0
  %738 = vmatpush1.msra.mxu0 %v258
  %739 = vmatprep.subr.mxu0 0.0
  %740 = vmatpush1.msra.mxu0 0.0
  %741 = vmatprep.subr.mxu0 0.0
  %742 = vmatpush1.msra.mxu0 0.0
  %743 = vmatprep.subr.mxu0 0.0
  %744 = vmatpush1.msra.mxu0 0.0
  %745 = vmatprep.subr.mxu0 0.0
  %746 = vmatpush1.msra.mxu0 0.0
  %747 = vmatprep.subr.mxu0 0.0
  %748 = vmatpush1.msra.mxu0 0.0
  %749 = vmatprep.subr.mxu0 0.0
  %750 = vmatpush1.msra.mxu0 0.0
  %751 = vmatprep.subr.mxu0 0.0
  %752 = vmatpush1.msra.mxu0 0.0
  %753 = vmatprep.subr.mxu0 0.0
  %754 = vmatpush1.msra.mxu0 0.0
  %755 = vmatprep.subr.mxu0 0.0
  %756 = vmatpush1.msra.mxu0 0.0
  %757 = vmatprep.subr.mxu0 0.0
  %758 = vmatpush1.msra.mxu0 0.0
  %759 = vmatprep.subr.mxu0 0.0
  %760 = vmatpush1.msra.mxu0 0.0
  %761 = vmatprep.subr.mxu0 0.0
  %762 = vmatpush1.msra.mxu0 0.0
  %763 = vmatprep.subr.mxu0 0.0
  %764 = vmatpush1.msra.mxu0 0.0
  %765 = vmatprep.subr.mxu0 0.0
  %766 = vmatpush1.msra.mxu0 0.0
  %767 = vmatprep.subr.mxu0 0.0
  %768 = vmatpush1.msra.mxu0 0.0
  %769 = vmatprep.subr.mxu0 0.0
  %770 = vmatpush1.msra.mxu0 0.0
  %771 = vmatprep.subr.mxu0 0.0
  %772 = vmatpush1.msra.mxu0 0.0
  %773 = vmatprep.subr.mxu0 0.0
  %774 = vmatpush1.msra.mxu0 0.0
  %775 = vmatprep.subr.mxu0 0.0
  %776 = vmatpush1.msra.mxu0 0.0
  %777 = vmatprep.subr.mxu0 0.0
  %778 = vmatpush1.msra.mxu0 0.0
  %779 = vmatprep.subr.mxu0 0.0
  %780 = vmatpush1.msra.mxu0 0.0
  %781 = vmatprep.subr.mxu0 0.0
  %782 = vmatpush1.msra.mxu0 0.0
  %783 = vmatprep.subr.mxu0 0.0
  %784 = vmatpush1.msra.mxu0 0.0
  %785 = vmatprep.subr.mxu0 0.0
  %786 = vmatpush1.msra.mxu0 0.0
  %787 = vmatprep.subr.mxu0 0.0
  %788 = vmatpush1.msra.mxu0 0.0
  %789 = vmatprep.subr.mxu0 0.0
  %790 = vmatpush1.msra.mxu0 0.0
  %791 = vmatprep.subr.mxu0 0.0
  %792 = vmatpush1.msra.mxu0 0.0
  %793 = vmatprep.subr.mxu0 0.0
  %794 = vmatpush1.msra.mxu0 0.0
  %795 = vmatprep.mubr.f32.mxu0 0.0
  %796 = vmatmul.mubr.f32.gmra.mrb[0].mxu0 %v729
  %v797 = vpop.f32.mrb[0].mxu0
  %v798 = vadd.f32 0.0, %v797
  %v799 = vpop.f32.mrb[0].mxu0
  %800 = vdwg.mxu0
  %v801 = vadd.f32 %v624, %v798
  %v802 = vxor.u32 %v801, 2147483648
  %v803 = vmul.f32 %v802, 1.442695
  %v804 = vpow.pop %v803
  %v805 = vadd.f32 %v804, 1.0
  %v806 = vrcp.pop %v805
  %v807 = vmul.f32 1.0, %v806
  %v808 = vtanh.pop %v801
  %v809 = vmul.f32 %v807, %v537
  %811 = vrot.lane.b32.xlu0 %v808, 32
  %v812 = vpop.permute.xlu0 %811
  %v814 = vmul.f32 %v807, %v812
  %816 = vrot.lane.b32.xlu0 %v814, 32
  %v817 = vpop.permute.xlu0 %816
  %v819 = vadd.f32 %v809, %v817
  %v820 = vtanh.pop %v819
  %822 = vrot.lane.b32.xlu0 %v820, 32
  %v823 = vpop.permute.xlu0 %822
  %v825 = vmul.f32 %v807, %v823
  %827 = vrot.lane.b32.xlu0 %v825, 64
  %v828 = vpop.permute.xlu0 %827
  %830 = vst.msk [vmem:[#allocation2 + $0x1] sm:$0x1] %vm548, %v828
  %831 = vrot.lane.b32.xlu0 %v825, 96
  %v832 = vpop.permute.xlu0 %831
  %834 = vst.msk [vmem:[#allocation2] sm:$0x2] %vm553, %v832
  %v835 = vsel %vm270, %v828, 0
  %837 = vmatprep.subr.mxu0 0.0
  %838 = vmatpush1.msra.mxu0 %v259
  %839 = vmatprep.subr.mxu0 0.0
  %840 = vmatpush1.msra.mxu0 %v260
  %841 = vmatprep.subr.mxu0 0.0
  %842 = vmatpush1.msra.mxu0 %v261
  %843 = vmatprep.subr.mxu0 0.0
  %844 = vmatpush1.msra.mxu0 %v262
  %845 = vmatprep.subr.mxu0 0.0
  %846 = vmatpush1.msra.mxu0 0.0
  %847 = vmatprep.subr.mxu0 0.0
  %848 = vmatpush1.msra.mxu0 0.0
  %849 = vmatprep.subr.mxu0 0.0
  %850 = vmatpush1.msra.mxu0 0.0
  %851 = vmatprep.subr.mxu0 0.0
  %852 = vmatpush1.msra.mxu0 0.0
  %853 = vmatprep.subr.mxu0 0.0
  %854 = vmatpush1.msra.mxu0 0.0
  %855 = vmatprep.subr.mxu0 0.0
  %856 = vmatpush1.msra.mxu0 0.0
  %857 = vmatprep.subr.mxu0 0.0
  %858 = vmatpush1.msra.mxu0 0.0
  %859 = vmatprep.subr.mxu0 0.0
  %860 = vmatpush1.msra.mxu0 0.0
  %861 = vmatprep.subr.mxu0 0.0
  %862 = vmatpush1.msra.mxu0 0.0
  %863 = vmatprep.subr.mxu0 0.0
  %864 = vmatpush1.msra.mxu0 0.0
  %865 = vmatprep.subr.mxu0 0.0
  %866 = vmatpush1.msra.mxu0 0.0
  %867 = vmatprep.subr.mxu0 0.0
  %868 = vmatpush1.msra.mxu0 0.0
  %869 = vmatprep.subr.mxu0 0.0
  %870 = vmatpush1.msra.mxu0 0.0
  %871 = vmatprep.subr.mxu0 0.0
  %872 = vmatpush1.msra.mxu0 0.0
  %873 = vmatprep.subr.mxu0 0.0
  %874 = vmatpush1.msra.mxu0 0.0
  %875 = vmatprep.subr.mxu0 0.0
  %876 = vmatpush1.msra.mxu0 0.0
  %877 = vmatprep.subr.mxu0 0.0
  %878 = vmatpush1.msra.mxu0 0.0
  %879 = vmatprep.subr.mxu0 0.0
  %880 = vmatpush1.msra.mxu0 0.0
  %881 = vmatprep.subr.mxu0 0.0
  %882 = vmatpush1.msra.mxu0 0.0
  %883 = vmatprep.subr.mxu0 0.0
  %884 = vmatpush1.msra.mxu0 0.0
  %885 = vmatprep.subr.mxu0 0.0
  %886 = vmatpush1.msra.mxu0 0.0
  %887 = vmatprep.subr.mxu0 0.0
  %888 = vmatpush1.msra.mxu0 0.0
  %889 = vmatprep.subr.mxu0 0.0
  %890 = vmatpush1.msra.mxu0 0.0
  %891 = vmatprep.subr.mxu0 0.0
  %892 = vmatpush1.msra.mxu0 0.0
  %893 = vmatprep.subr.mxu0 0.0
  %894 = vmatpush1.msra.mxu0 0.0
  %895 = vmatprep.subr.mxu0 0.0
  %896 = vmatpush1.msra.mxu0 0.0
  %897 = vmatprep.subr.mxu0 0.0
  %898 = vmatpush1.msra.mxu0 0.0
  %899 = vmatprep.subr.mxu0 0.0
  %900 = vmatpush1.msra.mxu0 0.0
  %901 = vmatprep.mubr.f32.mxu0 0.0
  %902 = vmatmul.mubr.f32.gmra.mrb[0].mxu0 %v835
  %v903 = vpop.f32.mrb[0].mxu0
  %v904 = vadd.f32 %v268, %v903
  %v905 = vpop.f32.mrb[0].mxu0
  %906 = vdwg.mxu0
  %v907 = vrot.slane %v247, 2
  %v909 = vrot.slane %v249, 1
  %v911 = vsel %vm347, %v907, %v909
  %912 = vmatprep.subr.mxu0 0.0
  %913 = vmatpush1.msra.mxu0 %v251
  %914 = vmatprep.subr.mxu0 0.0
  %915 = vmatpush1.msra.mxu0 %v252
  %916 = vmatprep.subr.mxu0 0.0
  %917 = vmatpush1.msra.mxu0 %v253
  %918 = vmatprep.subr.mxu0 0.0
  %919 = vmatpush1.msra.mxu0 %v254
  %920 = vmatprep.subr.mxu0 0.0
  %921 = vmatpush1.msra.mxu0 0.0
  %922 = vmatprep.subr.mxu0 0.0
  %923 = vmatpush1.msra.mxu0 0.0
  %924 = vmatprep.subr.mxu0 0.0
  %925 = vmatpush1.msra.mxu0 0.0
  %926 = vmatprep.subr.mxu0 0.0
  %927 = vmatpush1.msra.mxu0 0.0
  %928 = vmatprep.subr.mxu0 0.0
  %929 = vmatpush1.msra.mxu0 0.0
  %930 = vmatprep.subr.mxu0 0.0
  %931 = vmatpush1.msra.mxu0 0.0
  %932 = vmatprep.subr.mxu0 0.0
  %933 = vmatpush1.msra.mxu0 0.0
  %934 = vmatprep.subr.mxu0 0.0
  %935 = vmatpush1.msra.mxu0 0.0
  %936 = vmatprep.subr.mxu0 0.0
  %937 = vmatpush1.msra.mxu0 0.0
  %938 = vmatprep.subr.mxu0 0.0
  %939 = vmatpush1.msra.mxu0 0.0
  %940 = vmatprep.subr.mxu0 0.0
  %941 = vmatpush1.msra.mxu0 0.0
  %942 = vmatprep.subr.mxu0 0.0
  %943 = vmatpush1.msra.mxu0 0.0
  %944 = vmatprep.subr.mxu0 0.0
  %945 = vmatpush1.msra.mxu0 0.0
  %946 = vmatprep.subr.mxu0 0.0
  %947 = vmatpush1.msra.mxu0 0.0
  %948 = vmatprep.subr.mxu0 0.0
  %949 = vmatpush1.msra.mxu0 0.0
  %950 = vmatprep.subr.mxu0 0.0
  %951 = vmatpush1.msra.mxu0 0.0
  %952 = vmatprep.subr.mxu0 0.0
  %953 = vmatpush1.msra.mxu0 0.0
  %954 = vmatprep.subr.mxu0 0.0
  %955 = vmatpush1.msra.mxu0 0.0
  %956 = vmatprep.subr.mxu0 0.0
  %957 = vmatpush1.msra.mxu0 0.0
  %958 = vmatprep.subr.mxu0 0.0
  %959 = vmatpush1.msra.mxu0 0.0
  %960 = vmatprep.subr.mxu0 0.0
  %961 = vmatpush1.msra.mxu0 0.0
  %962 = vmatprep.subr.mxu0 0.0
  %963 = vmatpush1.msra.mxu0 0.0
  %964 = vmatprep.subr.mxu0 0.0
  %965 = vmatpush1.msra.mxu0 0.0
  %966 = vmatprep.subr.mxu0 0.0
  %967 = vmatpush1.msra.mxu0 0.0
  %968 = vmatprep.subr.mxu0 0.0
  %969 = vmatpush1.msra.mxu0 0.0
  %970 = vmatprep.subr.mxu0 0.0
  %971 = vmatpush1.msra.mxu0 0.0
  %972 = vmatprep.subr.mxu0 0.0
  %973 = vmatpush1.msra.mxu0 0.0
  %974 = vmatprep.subr.mxu0 0.0
  %975 = vmatpush1.msra.mxu0 0.0
  %976 = vmatprep.mubr.f32.mxu0 0.0
  %977 = vmatmul.mubr.f32.gmra.mrb[0].mxu0 %v729
  %v978 = vpop.f32.mrb[0].mxu0
  %v979 = vadd.f32 0.0, %v978
  %v980 = vpop.f32.mrb[0].mxu0
  %981 = vdwg.mxu0
  %v982 = vadd.f32 %v911, %v979
  %v983 = vxor.u32 %v982, 2147483648
  %v984 = vmul.f32 %v983, 1.442695
  %v985 = vpow.pop %v984
  %v986 = vadd.f32 %v985, 1.0
  %v987 = vrcp.pop %v986
  %v988 = vmul.f32 1.0, %v987
  %v989 = vtanh.pop %v982
  %v990 = vmul.f32 %v988, %v719
  %992 = vrot.lane.b32.xlu0 %v989, 32
  %v993 = vpop.permute.xlu0 %992
  %v995 = vmul.f32 %v988, %v993
  %997 = vrot.lane.b32.xlu0 %v995, 32
  %v998 = vpop.permute.xlu0 %997
  %v1000 = vadd.f32 %v990, %v998
  %v1001 = vtanh.pop %v1000
  %1003 = vrot.lane.b32.xlu0 %v1001, 32
  %v1004 = vpop.permute.xlu0 %1003
  %v1006 = vmul.f32 %v988, %v1004
  %1008 = vrot.lane.b32.xlu0 %v1006, 64
  %v1009 = vpop.permute.xlu0 %1008
  %v1010 = vsel %vm270, %v1009, 0
  %1012 = vmatprep.subr.mxu0 0.0
  %1013 = vmatpush1.msra.mxu0 %v255
  %1014 = vmatprep.subr.mxu0 0.0
  %1015 = vmatpush1.msra.mxu0 %v256
  %1016 = vmatprep.subr.mxu0 0.0
  %1017 = vmatpush1.msra.mxu0 %v257
  %1018 = vmatprep.subr.mxu0 0.0
  %1019 = vmatpush1.msra.mxu0 %v258
  %1020 = vmatprep.subr.mxu0 0.0
  %1021 = vmatpush1.msra.mxu0 0.0
  %1022 = vmatprep.subr.mxu0 0.0
  %1023 = vmatpush1.msra.mxu0 0.0
  %1024 = vmatprep.subr.mxu0 0.0
  %1025 = vmatpush1.msra.mxu0 0.0
  %1026 = vmatprep.subr.mxu0 0.0
  %1027 = vmatpush1.msra.mxu0 0.0
  %1028 = vmatprep.subr.mxu0 0.0
  %1029 = vmatpush1.msra.mxu0 0.0
  %1030 = vmatprep.subr.mxu0 0.0
  %1031 = vmatpush1.msra.mxu0 0.0
  %1032 = vmatprep.subr.mxu0 0.0
  %1033 = vmatpush1.msra.mxu0 0.0
  %1034 = vmatprep.subr.mxu0 0.0
  %1035 = vmatpush1.msra.mxu0 0.0
  %1036 = vmatprep.subr.mxu0 0.0
  %1037 = vmatpush1.msra.mxu0 0.0
  %1038 = vmatprep.subr.mxu0 0.0
  %1039 = vmatpush1.msra.mxu0 0.0
  %1040 = vmatprep.subr.mxu0 0.0
  %1041 = vmatpush1.msra.mxu0 0.0
  %1042 = vmatprep.subr.mxu0 0.0
  %1043 = vmatpush1.msra.mxu0 0.0
  %1044 = vmatprep.subr.mxu0 0.0
  %1045 = vmatpush1.msra.mxu0 0.0
  %1046 = vmatprep.subr.mxu0 0.0
  %1047 = vmatpush1.msra.mxu0 0.0
  %1048 = vmatprep.subr.mxu0 0.0
  %1049 = vmatpush1.msra.mxu0 0.0
  %1050 = vmatprep.subr.mxu0 0.0
  %1051 = vmatpush1.msra.mxu0 0.0
  %1052 = vmatprep.subr.mxu0 0.0
  %1053 = vmatpush1.msra.mxu0 0.0
  %1054 = vmatprep.subr.mxu0 0.0
  %1055 = vmatpush1.msra.mxu0 0.0
  %1056 = vmatprep.subr.mxu0 0.0
  %1057 = vmatpush1.msra.mxu0 0.0
  %1058 = vmatprep.subr.mxu0 0.0
  %1059 = vmatpush1.msra.mxu0 0.0
  %1060 = vmatprep.subr.mxu0 0.0
  %1061 = vmatpush1.msra.mxu0 0.0
  %1062 = vmatprep.subr.mxu0 0.0
  %1063 = vmatpush1.msra.mxu0 0.0
  %1064 = vmatprep.subr.mxu0 0.0
  %1065 = vmatpush1.msra.mxu0 0.0
  %1066 = vmatprep.subr.mxu0 0.0
  %1067 = vmatpush1.msra.mxu0 0.0
  %1068 = vmatprep.subr.mxu0 0.0
  %1069 = vmatpush1.msra.mxu0 0.0
  %1070 = vmatprep.subr.mxu0 0.0
  %1071 = vmatpush1.msra.mxu0 0.0
  %1072 = vmatprep.subr.mxu0 0.0
  %1073 = vmatpush1.msra.mxu0 0.0
  %1074 = vmatprep.subr.mxu0 0.0
  %1075 = vmatpush1.msra.mxu0 0.0
  %1076 = vmatprep.mubr.f32.mxu0 0.0
  %1077 = vmatmul.mubr.f32.gmra.mrb[0].mxu0 %v1010
  %v1078 = vpop.f32.mrb[0].mxu0
  %v1079 = vadd.f32 0.0, %v1078
  %v1080 = vpop.f32.mrb[0].mxu0
  %1081 = vdwg.mxu0
  %v1082 = vadd.f32 %v904, %v1079
  %v1083 = vxor.u32 %v1082, 2147483648
  %v1084 = vmul.f32 %v1083, 1.442695
  %v1085 = vpow.pop %v1084
  %v1086 = vadd.f32 %v1085, 1.0
  %v1087 = vrcp.pop %v1086
  %v1088 = vmul.f32 1.0, %v1087
  %v1089 = vtanh.pop %v1082
  %v1090 = vmul.f32 %v1088, %v819
  %1092 = vrot.lane.b32.xlu0 %v1089, 32
  %v1093 = vpop.permute.xlu0 %1092
  %v1095 = vmul.f32 %v1088, %v1093
  %1097 = vrot.lane.b32.xlu0 %v1095, 32
  %v1098 = vpop.permute.xlu0 %1097
  %v1100 = vadd.f32 %v1090, %v1098
  %v1101 = vtanh.pop %v1100
  %1103 = vrot.lane.b32.xlu0 %v1101, 32
  %v1104 = vpop.permute.xlu0 %1103
  %v1106 = vmul.f32 %v1088, %v1104
  %1108 = vrot.lane.b32.xlu0 %v1106, 64
  %v1109 = vpop.permute.xlu0 %1108
  %1111 = vst.msk [vmem:[#allocation2 + $0x2] sm:$0x1] %vm548, %v1109
  %1112 = vrot.lane.b32.xlu0 %v1106, 96
  %v1113 = vpop.permute.xlu0 %1112
  %1115 = vst.msk [vmem:[#allocation2 + $0x1] sm:$0x2] %vm553, %v1113
  %v1116 = vsel %vm270, %v1109, 0
  %1118 = vmatprep.subr.mxu0 0.0
  %1119 = vmatpush1.msra.mxu0 %v259
  %1120 = vmatprep.subr.mxu0 0.0
  %1121 = vmatpush1.msra.mxu0 %v260
  %1122 = vmatprep.subr.mxu0 0.0
  %1123 = vmatpush1.msra.mxu0 %v261
  %1124 = vmatprep.subr.mxu0 0.0
  %1125 = vmatpush1.msra.mxu0 %v262
  %1126 = vmatprep.subr.mxu0 0.0
  %1127 = vmatpush1.msra.mxu0 0.0
  %1128 = vmatprep.subr.mxu0 0.0
  %1129 = vmatpush1.msra.mxu0 0.0
  %1130 = vmatprep.subr.mxu0 0.0
  %1131 = vmatpush1.msra.mxu0 0.0
  %1132 = vmatprep.subr.mxu0 0.0
  %1133 = vmatpush1.msra.mxu0 0.0
  %1134 = vmatprep.subr.mxu0 0.0
  %1135 = vmatpush1.msra.mxu0 0.0
  %1136 = vmatprep.subr.mxu0 0.0
  %1137 = vmatpush1.msra.mxu0 0.0
  %1138 = vmatprep.subr.mxu0 0.0
  %1139 = vmatpush1.msra.mxu0 0.0
  %1140 = vmatprep.subr.mxu0 0.0
  %1141 = vmatpush1.msra.mxu0 0.0
  %1142 = vmatprep.subr.mxu0 0.0
  %1143 = vmatpush1.msra.mxu0 0.0
  %1144 = vmatprep.subr.mxu0 0.0
  %1145 = vmatpush1.msra.mxu0 0.0
  %1146 = vmatprep.subr.mxu0 0.0
  %1147 = vmatpush1.msra.mxu0 0.0
  %1148 = vmatprep.subr.mxu0 0.0
  %1149 = vmatpush1.msra.mxu0 0.0
  %1150 = vmatprep.subr.mxu0 0.0
  %1151 = vmatpush1.msra.mxu0 0.0
  %1152 = vmatprep.subr.mxu0 0.0
  %1153 = vmatpush1.msra.mxu0 0.0
  %1154 = vmatprep.subr.mxu0 0.0
  %1155 = vmatpush1.msra.mxu0 0.0
  %1156 = vmatprep.subr.mxu0 0.0
  %1157 = vmatpush1.msra.mxu0 0.0
  %1158 = vmatprep.subr.mxu0 0.0
  %1159 = vmatpush1.msra.mxu0 0.0
  %1160 = vmatprep.subr.mxu0 0.0
  %1161 = vmatpush1.msra.mxu0 0.0
  %1162 = vmatprep.subr.mxu0 0.0
  %1163 = vmatpush1.msra.mxu0 0.0
  %1164 = vmatprep.subr.mxu0 0.0
  %1165 = vmatpush1.msra.mxu0 0.0
  %1166 = vmatprep.subr.mxu0 0.0
  %1167 = vmatpush1.msra.mxu0 0.0
  %1168 = vmatprep.subr.mxu0 0.0
  %1169 = vmatpush1.msra.mxu0 0.0
  %1170 = vmatprep.subr.mxu0 0.0
  %1171 = vmatpush1.msra.mxu0 0.0
  %1172 = vmatprep.subr.mxu0 0.0
  %1173 = vmatpush1.msra.mxu0 0.0
  %1174 = vmatprep.subr.mxu0 0.0
  %1175 = vmatpush1.msra.mxu0 0.0
  %1176 = vmatprep.subr.mxu0 0.0
  %1177 = vmatpush1.msra.mxu0 0.0
  %1178 = vmatprep.subr.mxu0 0.0
  %1179 = vmatpush1.msra.mxu0 0.0
  %1180 = vmatprep.subr.mxu0 0.0
  %1181 = vmatpush1.msra.mxu0 0.0
  %1182 = vmatprep.mubr.f32.mxu0 0.0
  %1183 = vmatmul.mubr.f32.gmra.mrb[0].mxu0 %v1116
  %v1184 = vpop.f32.mrb[0].mxu0
  %v1185 = vadd.f32 %v268, %v1184
  %v1186 = vpop.f32.mrb[0].mxu0
  %1187 = vdwg.mxu0
  %v1188 = vrot.slane %v247, 3
  %v1190 = vrot.slane %v249, 2
  %v1192 = vsel %vm347, %v1188, %v1190
  %1193 = vmatprep.subr.mxu0 0.0
  %1194 = vmatpush1.msra.mxu0 %v251
  %1195 = vmatprep.subr.mxu0 0.0
  %1196 = vmatpush1.msra.mxu0 %v252
  %1197 = vmatprep.subr.mxu0 0.0
  %1198 = vmatpush1.msra.mxu0 %v253
  %1199 = vmatprep.subr.mxu0 0.0
  %1200 = vmatpush1.msra.mxu0 %v254
  %1201 = vmatprep.subr.mxu0 0.0
  %1202 = vmatpush1.msra.mxu0 0.0
  %1203 = vmatprep.subr.mxu0 0.0
  %1204 = vmatpush1.msra.mxu0 0.0
  %1205 = vmatprep.subr.mxu0 0.0
  %1206 = vmatpush1.msra.mxu0 0.0
  %1207 = vmatprep.subr.mxu0 0.0
  %1208 = vmatpush1.msra.mxu0 0.0
  %1209 = vmatprep.subr.mxu0 0.0
  %1210 = vmatpush1.msra.mxu0 0.0
  %1211 = vmatprep.subr.mxu0 0.0
  %1212 = vmatpush1.msra.mxu0 0.0
  %1213 = vmatprep.subr.mxu0 0.0
  %1214 = vmatpush1.msra.mxu0 0.0
  %1215 = vmatprep.subr.mxu0 0.0
  %1216 = vmatpush1.msra.mxu0 0.0
  %1217 = vmatprep.subr.mxu0 0.0
  %1218 = vmatpush1.msra.mxu0 0.0
  %1219 = vmatprep.subr.mxu0 0.0
  %1220 = vmatpush1.msra.mxu0 0.0
  %1221 = vmatprep.subr.mxu0 0.0
  %1222 = vmatpush1.msra.mxu0 0.0
  %1223 = vmatprep.subr.mxu0 0.0
  %1224 = vmatpush1.msra.mxu0 0.0
  %1225 = vmatprep.subr.mxu0 0.0
  %1226 = vmatpush1.msra.mxu0 0.0
  %1227 = vmatprep.subr.mxu0 0.0
  %1228 = vmatpush1.msra.mxu0 0.0
  %1229 = vmatprep.subr.mxu0 0.0
  %1230 = vmatpush1.msra.mxu0 0.0
  %1231 = vmatprep.subr.mxu0 0.0
  %1232 = vmatpush1.msra.mxu0 0.0
  %1233 = vmatprep.subr.mxu0 0.0
  %1234 = vmatpush1.msra.mxu0 0.0
  %1235 = vmatprep.subr.mxu0 0.0
  %1236 = vmatpush1.msra.mxu0 0.0
  %1237 = vmatprep.subr.mxu0 0.0
  %1238 = vmatpush1.msra.mxu0 0.0
  %1239 = vmatprep.subr.mxu0 0.0
  %1240 = vmatpush1.msra.mxu0 0.0
  %1241 = vmatprep.subr.mxu0 0.0
  %1242 = vmatpush1.msra.mxu0 0.0
  %1243 = vmatprep.subr.mxu0 0.0
  %1244 = vmatpush1.msra.mxu0 0.0
  %1245 = vmatprep.subr.mxu0 0.0
  %1246 = vmatpush1.msra.mxu0 0.0
  %1247 = vmatprep.subr.mxu0 0.0
  %1248 = vmatpush1.msra.mxu0 0.0
  %1249 = vmatprep.subr.mxu0 0.0
  %1250 = vmatpush1.msra.mxu0 0.0
  %1251 = vmatprep.subr.mxu0 0.0
  %1252 = vmatpush1.msra.mxu0 0.0
  %1253 = vmatprep.subr.mxu0 0.0
  %1254 = vmatpush1.msra.mxu0 0.0
  %1255 = vmatprep.subr.mxu0 0.0
  %1256 = vmatpush1.msra.mxu0 0.0
  %1257 = vmatprep.mubr.f32.mxu0 0.0
  %1258 = vmatmul.mubr.f32.gmra.mrb[0].mxu0 %v1010
  %v1259 = vpop.f32.mrb[0].mxu0
  %v1260 = vadd.f32 0.0, %v1259
  %v1261 = vpop.f32.mrb[0].mxu0
  %1262 = vdwg.mxu0
  %v1263 = vadd.f32 %v1192, %v1260
  %v1264 = vxor.u32 %v1263, 2147483648
  %v1265 = vmul.f32 %v1264, 1.442695
  %v1266 = vpow.pop %v1265
  %v1267 = vadd.f32 %v1266, 1.0
  %v1268 = vrcp.pop %v1267
  %v1269 = vmul.f32 1.0, %v1268
  %v1270 = vtanh.pop %v1263
  %v1271 = vmul.f32 %v1269, %v1000
  %1273 = vrot.lane.b32.xlu0 %v1270, 32
  %v1274 = vpop.permute.xlu0 %1273
  %v1276 = vmul.f32 %v1269, %v1274
  %1278 = vrot.lane.b32.xlu0 %v1276, 32
  %v1279 = vpop.permute.xlu0 %1278
  %v1281 = vadd.f32 %v1271, %v1279
  %v1282 = vtanh.pop %v1281
  %1284 = vrot.lane.b32.xlu0 %v1282, 32
  %v1285 = vpop.permute.xlu0 %1284
  %v1287 = vmul.f32 %v1269, %v1285
  %1289 = vrot.lane.b32.xlu0 %v1287, 64
  %v1290 = vpop.permute.xlu0 %1289
  %v1291 = vsel %vm270, %v1290, 0
  %1293 = vmatprep.subr.mxu0 0.0
  %1294 = vmatpush1.msra.mxu0 %v255
  %1295 = vmatprep.subr.mxu0 0.0
  %1296 = vmatpush1.msra.mxu0 %v256
  %1297 = vmatprep.subr.mxu0 0.0
  %1298 = vmatpush1.msra.mxu0 %v257
  %1299 = vmatprep.subr.mxu0 0.0
  %1300 = vmatpush1.msra.mxu0 %v258
  %1301 = vmatprep.subr.mxu0 0.0
  %1302 = vmatpush1.msra.mxu0 0.0
  %1303 = vmatprep.subr.mxu0 0.0
  %1304 = vmatpush1.msra.mxu0 0.0
  %1305 = vmatprep.subr.mxu0 0.0
  %1306 = vmatpush1.msra.mxu0 0.0
  %1307 = vmatprep.subr.mxu0 0.0
  %1308 = vmatpush1.msra.mxu0 0.0
  %1309 = vmatprep.subr.mxu0 0.0
  %1310 = vmatpush1.msra.mxu0 0.0
  %1311 = vmatprep.subr.mxu0 0.0
  %1312 = vmatpush1.msra.mxu0 0.0
  %1313 = vmatprep.subr.mxu0 0.0
  %1314 = vmatpush1.msra.mxu0 0.0
  %1315 = vmatprep.subr.mxu0 0.0
  %1316 = vmatpush1.msra.mxu0 0.0
  %1317 = vmatprep.subr.mxu0 0.0
  %1318 = vmatpush1.msra.mxu0 0.0
  %1319 = vmatprep.subr.mxu0 0.0
  %1320 = vmatpush1.msra.mxu0 0.0
  %1321 = vmatprep.subr.mxu0 0.0
  %1322 = vmatpush1.msra.mxu0 0.0
  %1323 = vmatprep.subr.mxu0 0.0
  %1324 = vmatpush1.msra.mxu0 0.0
  %1325 = vmatprep.subr.mxu0 0.0
  %1326 = vmatpush1.msra.mxu0 0.0
  %1327 = vmatprep.subr.mxu0 0.0
  %1328 = vmatpush1.msra.mxu0 0.0
  %1329 = vmatprep.subr.mxu0 0.0
  %1330 = vmatpush1.msra.mxu0 0.0
  %1331 = vmatprep.subr.mxu0 0.0
  %1332 = vmatpush1.msra.mxu0 0.0
  %1333 = vmatprep.subr.mxu0 0.0
  %1334 = vmatpush1.msra.mxu0 0.0
  %1335 = vmatprep.subr.mxu0 0.0
  %1336 = vmatpush1.msra.mxu0 0.0
  %1337 = vmatprep.subr.mxu0 0.0
  %1338 = vmatpush1.msra.mxu0 0.0
  %1339 = vmatprep.subr.mxu0 0.0
  %1340 = vmatpush1.msra.mxu0 0.0
  %1341 = vmatprep.subr.mxu0 0.0
  %1342 = vmatpush1.msra.mxu0 0.0
  %1343 = vmatprep.subr.mxu0 0.0
  %1344 = vmatpush1.msra.mxu0 0.0
  %1345 = vmatprep.subr.mxu0 0.0
  %1346 = vmatpush1.msra.mxu0 0.0
  %1347 = vmatprep.subr.mxu0 0.0
  %1348 = vmatpush1.msra.mxu0 0.0
  %1349 = vmatprep.subr.mxu0 0.0
  %1350 = vmatpush1.msra.mxu0 0.0
  %1351 = vmatprep.subr.mxu0 0.0
  %1352 = vmatpush1.msra.mxu0 0.0
  %1353 = vmatprep.subr.mxu0 0.0
  %1354 = vmatpush1.msra.mxu0 0.0
  %1355 = vmatprep.subr.mxu0 0.0
  %1356 = vmatpush1.msra.mxu0 0.0
  %1357 = vmatprep.mubr.f32.mxu0 0.0
  %1358 = vmatmul.mubr.f32.gmra.mrb[0].mxu0 %v1291
  %v1359 = vpop.f32.mrb[0].mxu0
  %v1360 = vadd.f32 0.0, %v1359
  %v1361 = vpop.f32.mrb[0].mxu0
  %1362 = vdwg.mxu0
  %v1363 = vadd.f32 %v1185, %v1360
  %v1364 = vxor.u32 %v1363, 2147483648
  %v1365 = vmul.f32 %v1364, 1.442695
  %v1366 = vpow.pop %v1365
  %v1367 = vadd.f32 %v1366, 1.0
  %v1368 = vrcp.pop %v1367
  %v1369 = vmul.f32 1.0, %v1368
  %v1370 = vtanh.pop %v1363
  %v1371 = vmul.f32 %v1369, %v1100
  %1373 = vrot.lane.b32.xlu0 %v1370, 32
  %v1374 = vpop.permute.xlu0 %1373
  %v1376 = vmul.f32 %v1369, %v1374
  %1378 = vrot.lane.b32.xlu0 %v1376, 32
  %v1379 = vpop.permute.xlu0 %1378
  %v1381 = vadd.f32 %v1371, %v1379
  %v1382 = vtanh.pop %v1381
  %1384 = vrot.lane.b32.xlu0 %v1382, 32
  %v1385 = vpop.permute.xlu0 %1384
  %v1387 = vmul.f32 %v1369, %v1385
  %1389 = vrot.lane.b32.xlu0 %v1387, 64
  %v1390 = vpop.permute.xlu0 %1389
  %1392 = vst.msk [vmem:[#allocation2 + $0x3] sm:$0x1] %vm548, %v1390
  %1393 = vrot.lane.b32.xlu0 %v1387, 96
  %v1394 = vpop.permute.xlu0 %1393
  %1396 = vst.msk [vmem:[#allocation2 + $0x2] sm:$0x2] %vm553, %v1394
  %v1397 = vsel %vm270, %v1390, 0
  %1399 = vmatprep.subr.mxu0 0.0
  %1400 = vmatpush1.msra.mxu0 %v259
  %1401 = vmatprep.subr.mxu0 0.0
  %1402 = vmatpush1.msra.mxu0 %v260
  %1403 = vmatprep.subr.mxu0 0.0
  %1404 = vmatpush1.msra.mxu0 %v261
  %1405 = vmatprep.subr.mxu0 0.0
  %1406 = vmatpush1.msra.mxu0 %v262
  %1407 = vmatprep.subr.mxu0 0.0
  %1408 = vmatpush1.msra.mxu0 0.0
  %1409 = vmatprep.subr.mxu0 0.0
  %1410 = vmatpush1.msra.mxu0 0.0
  %1411 = vmatprep.subr.mxu0 0.0
  %1412 = vmatpush1.msra.mxu0 0.0
  %1413 = vmatprep.subr.mxu0 0.0
  %1414 = vmatpush1.msra.mxu0 0.0
  %1415 = vmatprep.subr.mxu0 0.0
  %1416 = vmatpush1.msra.mxu0 0.0
  %1417 = vmatprep.subr.mxu0 0.0
  %1418 = vmatpush1.msra.mxu0 0.0
  %1419 = vmatprep.subr.mxu0 0.0
  %1420 = vmatpush1.msra.mxu0 0.0
  %1421 = vmatprep.subr.mxu0 0.0
  %1422 = vmatpush1.msra.mxu0 0.0
  %1423 = vmatprep.subr.mxu0 0.0
  %1424 = vmatpush1.msra.mxu0 0.0
  %1425 = vmatprep.subr.mxu0 0.0
  %1426 = vmatpush1.msra.mxu0 0.0
  %1427 = vmatprep.subr.mxu0 0.0
  %1428 = vmatpush1.msra.mxu0 0.0
  %1429 = vmatprep.subr.mxu0 0.0
  %1430 = vmatpush1.msra.mxu0 0.0
  %1431 = vmatprep.subr.mxu0 0.0
  %1432 = vmatpush1.msra.mxu0 0.0
  %1433 = vmatprep.subr.mxu0 0.0
  %1434 = vmatpush1.msra.mxu0 0.0
  %1435 = vmatprep.subr.mxu0 0.0
  %1436 = vmatpush1.msra.mxu0 0.0
  %1437 = vmatprep.subr.mxu0 0.0
  %1438 = vmatpush1.msra.mxu0 0.0
  %1439 = vmatprep.subr.mxu0 0.0
  %1440 = vmatpush1.msra.mxu0 0.0
  %1441 = vmatprep.subr.mxu0 0.0
  %1442 = vmatpush1.msra.mxu0 0.0
  %1443 = vmatprep.subr.mxu0 0.0
  %1444 = vmatpush1.msra.mxu0 0.0
  %1445 = vmatprep.subr.mxu0 0.0
  %1446 = vmatpush1.msra.mxu0 0.0
  %1447 = vmatprep.subr.mxu0 0.0
  %1448 = vmatpush1.msra.mxu0 0.0
  %1449 = vmatprep.subr.mxu0 0.0
  %1450 = vmatpush1.msra.mxu0 0.0
  %1451 = vmatprep.subr.mxu0 0.0
  %1452 = vmatpush1.msra.mxu0 0.0
  %1453 = vmatprep.subr.mxu0 0.0
  %1454 = vmatpush1.msra.mxu0 0.0
  %1455 = vmatprep.subr.mxu0 0.0
  %1456 = vmatpush1.msra.mxu0 0.0
  %1457 = vmatprep.subr.mxu0 0.0
  %1458 = vmatpush1.msra.mxu0 0.0
  %1459 = vmatprep.subr.mxu0 0.0
  %1460 = vmatpush1.msra.mxu0 0.0
  %1461 = vmatprep.subr.mxu0 0.0
  %1462 = vmatpush1.msra.mxu0 0.0
  %1463 = vmatprep.mubr.f32.mxu0 0.0
  %1464 = vmatmul.mubr.f32.gmra.mrb[0].mxu0 %v1397
  %v1465 = vpop.f32.mrb[0].mxu0
  %v1466 = vadd.f32 %v268, %v1465
  %v1467 = vpop.f32.mrb[0].mxu0
  %1468 = vdwg.mxu0
  %v1469 = vrot.slane %v247, 4
  %v1471 = vrot.slane %v249, 3
  %v1473 = vsel %vm347, %v1469, %v1471
  %1474 = vmatprep.subr.mxu0 0.0
  %1475 = vmatpush1.msra.mxu0 %v251
  %1476 = vmatprep.subr.mxu0 0.0
  %1477 = vmatpush1.msra.mxu0 %v252
  %1478 = vmatprep.subr.mxu0 0.0
  %1479 = vmatpush1.msra.mxu0 %v253
  %1480 = vmatprep.subr.mxu0 0.0
  %1481 = vmatpush1.msra.mxu0 %v254
  %1482 = vmatprep.subr.mxu0 0.0
  %1483 = vmatpush1.msra.mxu0 0.0
  %1484 = vmatprep.subr.mxu0 0.0
  %1485 = vmatpush1.msra.mxu0 0.0
  %1486 = vmatprep.subr.mxu0 0.0
  %1487 = vmatpush1.msra.mxu0 0.0
  %1488 = vmatprep.subr.mxu0 0.0
  %1489 = vmatpush1.msra.mxu0 0.0
  %1490 = vmatprep.subr.mxu0 0.0
  %1491 = vmatpush1.msra.mxu0 0.0
  %1492 = vmatprep.subr.mxu0 0.0
  %1493 = vmatpush1.msra.mxu0 0.0
  %1494 = vmatprep.subr.mxu0 0.0
  %1495 = vmatpush1.msra.mxu0 0.0
  %1496 = vmatprep.subr.mxu0 0.0
  %1497 = vmatpush1.msra.mxu0 0.0
  %1498 = vmatprep.subr.mxu0 0.0
  %1499 = vmatpush1.msra.mxu0 0.0
  %1500 = vmatprep.subr.mxu0 0.0
  %1501 = vmatpush1.msra.mxu0 0.0
  %1502 = vmatprep.subr.mxu0 0.0
  %1503 = vmatpush1.msra.mxu0 0.0
  %1504 = vmatprep.subr.mxu0 0.0
  %1505 = vmatpush1.msra.mxu0 0.0
  %1506 = vmatprep.subr.mxu0 0.0
  %1507 = vmatpush1.msra.mxu0 0.0
  %1508 = vmatprep.subr.mxu0 0.0
  %1509 = vmatpush1.msra.mxu0 0.0
  %1510 = vmatprep.subr.mxu0 0.0
  %1511 = vmatpush1.msra.mxu0 0.0
  %1512 = vmatprep.subr.mxu0 0.0
  %1513 = vmatpush1.msra.mxu0 0.0
  %1514 = vmatprep.subr.mxu0 0.0
  %1515 = vmatpush1.msra.mxu0 0.0
  %1516 = vmatprep.subr.mxu0 0.0
  %1517 = vmatpush1.msra.mxu0 0.0
  %1518 = vmatprep.subr.mxu0 0.0
  %1519 = vmatpush1.msra.mxu0 0.0
  %1520 = vmatprep.subr.mxu0 0.0
  %1521 = vmatpush1.msra.mxu0 0.0
  %1522 = vmatprep.subr.mxu0 0.0
  %1523 = vmatpush1.msra.mxu0 0.0
  %1524 = vmatprep.subr.mxu0 0.0
  %1525 = vmatpush1.msra.mxu0 0.0
  %1526 = vmatprep.subr.mxu0 0.0
  %1527 = vmatpush1.msra.mxu0 0.0
  %1528 = vmatprep.subr.mxu0 0.0
  %1529 = vmatpush1.msra.mxu0 0.0
  %1530 = vmatprep.subr.mxu0 0.0
  %1531 = vmatpush1.msra.mxu0 0.0
  %1532 = vmatprep.subr.mxu0 0.0
  %1533 = vmatpush1.msra.mxu0 0.0
  %1534 = vmatprep.subr.mxu0 0.0
  %1535 = vmatpush1.msra.mxu0 0.0
  %1536 = vmatprep.subr.mxu0 0.0
  %1537 = vmatpush1.msra.mxu0 0.0
  %1538 = vmatprep.mubr.f32.mxu0 0.0
  %1539 = vmatmul.mubr.f32.gmra.mrb[0].mxu0 %v1291
  %v1540 = vpop.f32.mrb[0].mxu0
  %v1541 = vadd.f32 0.0, %v1540
  %v1542 = vpop.f32.mrb[0].mxu0
  %1543 = vdwg.mxu0
  %v1544 = vadd.f32 %v1473, %v1541
  %v1545 = vxor.u32 %v1544, 2147483648
  %v1546 = vmul.f32 %v1545, 1.442695
  %v1547 = vpow.pop %v1546
  %v1548 = vadd.f32 %v1547, 1.0
  %v1549 = vrcp.pop %v1548
  %v1550 = vmul.f32 1.0, %v1549
  %v1551 = vtanh.pop %v1544
  %v1552 = vmul.f32 %v1550, %v1281
  %1554 = vrot.lane.b32.xlu0 %v1551, 32
  %v1555 = vpop.permute.xlu0 %1554
  %v1557 = vmul.f32 %v1550, %v1555
  %1559 = vrot.lane.b32.xlu0 %v1557, 32
  %v1560 = vpop.permute.xlu0 %1559
  %v1562 = vadd.f32 %v1552, %v1560
  %v1563 = vtanh.pop %v1562
  %1565 = vrot.lane.b32.xlu0 %v1563, 32
  %v1566 = vpop.permute.xlu0 %1565
  %v1568 = vmul.f32 %v1550, %v1566
  %1570 = vrot.lane.b32.xlu0 %v1568, 64
  %v1571 = vpop.permute.xlu0 %1570
  %v1572 = vsel %vm270, %v1571, 0
  %1574 = vmatprep.subr.mxu0 0.0
  %1575 = vmatpush1.msra.mxu0 %v255
  %1576 = vmatprep.subr.mxu0 0.0
  %1577 = vmatpush1.msra.mxu0 %v256
  %1578 = vmatprep.subr.mxu0 0.0
  %1579 = vmatpush1.msra.mxu0 %v257
  %1580 = vmatprep.subr.mxu0 0.0
  %1581 = vmatpush1.msra.mxu0 %v258
  %1582 = vmatprep.subr.mxu0 0.0
  %1583 = vmatpush1.msra.mxu0 0.0
  %1584 = vmatprep.subr.mxu0 0.0
  %1585 = vmatpush1.msra.mxu0 0.0
  %1586 = vmatprep.subr.mxu0 0.0
  %1587 = vmatpush1.msra.mxu0 0.0
  %1588 = vmatprep.subr.mxu0 0.0
  %1589 = vmatpush1.msra.mxu0 0.0
  %1590 = vmatprep.subr.mxu0 0.0
  %1591 = vmatpush1.msra.mxu0 0.0
  %1592 = vmatprep.subr.mxu0 0.0
  %1593 = vmatpush1.msra.mxu0 0.0
  %1594 = vmatprep.subr.mxu0 0.0
  %1595 = vmatpush1.msra.mxu0 0.0
  %1596 = vmatprep.subr.mxu0 0.0
  %1597 = vmatpush1.msra.mxu0 0.0
  %1598 = vmatprep.subr.mxu0 0.0
  %1599 = vmatpush1.msra.mxu0 0.0
  %1600 = vmatprep.subr.mxu0 0.0
  %1601 = vmatpush1.msra.mxu0 0.0
  %1602 = vmatprep.subr.mxu0 0.0
  %1603 = vmatpush1.msra.mxu0 0.0
  %1604 = vmatprep.subr.mxu0 0.0
  %1605 = vmatpush1.msra.mxu0 0.0
  %1606 = vmatprep.subr.mxu0 0.0
  %1607 = vmatpush1.msra.mxu0 0.0
  %1608 = vmatprep.subr.mxu0 0.0
  %1609 = vmatpush1.msra.mxu0 0.0
  %1610 = vmatprep.subr.mxu0 0.0
  %1611 = vmatpush1.msra.mxu0 0.0
  %1612 = vmatprep.subr.mxu0 0.0
  %1613 = vmatpush1.msra.mxu0 0.0
  %1614 = vmatprep.subr.mxu0 0.0
  %1615 = vmatpush1.msra.mxu0 0.0
  %1616 = vmatprep.subr.mxu0 0.0
  %1617 = vmatpush1.msra.mxu0 0.0
  %1618 = vmatprep.subr.mxu0 0.0
  %1619 = vmatpush1.msra.mxu0 0.0
  %1620 = vmatprep.subr.mxu0 0.0
  %1621 = vmatpush1.msra.mxu0 0.0
  %1622 = vmatprep.subr.mxu0 0.0
  %1623 = vmatpush1.msra.mxu0 0.0
  %1624 = vmatprep.subr.mxu0 0.0
  %1625 = vmatpush1.msra.mxu0 0.0
  %1626 = vmatprep.subr.mxu0 0.0
  %1627 = vmatpush1.msra.mxu0 0.0
  %1628 = vmatprep.subr.mxu0 0.0
  %1629 = vmatpush1.msra.mxu0 0.0
  %1630 = vmatprep.subr.mxu0 0.0
  %1631 = vmatpush1.msra.mxu0 0.0
  %1632 = vmatprep.subr.mxu0 0.0
  %1633 = vmatpush1.msra.mxu0 0.0
  %1634 = vmatprep.subr.mxu0 0.0
  %1635 = vmatpush1.msra.mxu0 0.0
  %1636 = vmatprep.subr.mxu0 0.0
  %1637 = vmatpush1.msra.mxu0 0.0
  %1638 = vmatprep.mubr.f32.mxu0 0.0
  %1639 = vmatmul.mubr.f32.gmra.mrb[0].mxu0 %v1572
  %v1640 = vpop.f32.mrb[0].mxu0
  %v1641 = vadd.f32 0.0, %v1640
  %v1642 = vpop.f32.mrb[0].mxu0
  %1643 = vdwg.mxu0
  %v1644 = vadd.f32 %v1466, %v1641
  %v1645 = vxor.u32 %v1644, 2147483648
  %v1646 = vmul.f32 %v1645, 1.442695
  %v1647 = vpow.pop %v1646
  %v1648 = vadd.f32 %v1647, 1.0
  %v1649 = vrcp.pop %v1648
  %v1650 = vmul.f32 1.0, %v1649
  %v1651 = vtanh.pop %v1644
  %v1652 = vmul.f32 %v1650, %v1381
  %1654 = vrot.lane.b32.xlu0 %v1651, 32
  %v1655 = vpop.permute.xlu0 %1654
  %v1657 = vmul.f32 %v1650, %v1655
  %1659 = vrot.lane.b32.xlu0 %v1657, 32
  %v1660 = vpop.permute.xlu0 %1659
  %v1662 = vadd.f32 %v1652, %v1660
  %v1663 = vtanh.pop %v1662
  %1665 = vrot.lane.b32.xlu0 %v1663, 32
  %v1666 = vpop.permute.xlu0 %1665
  %v1668 = vmul.f32 %v1650, %v1666
  %1670 = vrot.lane.b32.xlu0 %v1668, 64
  %v1671 = vpop.permute.xlu0 %1670
  %1673 = vst.msk [vmem:[#allocation2 + $0x4] sm:$0x1] %vm548, %v1671
  %1674 = vrot.lane.b32.xlu0 %v1668, 96
  %v1675 = vpop.permute.xlu0 %1674
  %1677 = vst.msk [vmem:[#allocation2 + $0x3] sm:$0x2] %vm553, %v1675
  %v1678 = vsel %vm270, %v1671, 0
  %1680 = vmatprep.subr.mxu0 0.0
  %1681 = vmatpush1.msra.mxu0 %v259
  %1682 = vmatprep.subr.mxu0 0.0
  %1683 = vmatpush1.msra.mxu0 %v260
  %1684 = vmatprep.subr.mxu0 0.0
  %1685 = vmatpush1.msra.mxu0 %v261
  %1686 = vmatprep.subr.mxu0 0.0
  %1687 = vmatpush1.msra.mxu0 %v262
  %1688 = vmatprep.subr.mxu0 0.0
  %1689 = vmatpush1.msra.mxu0 0.0
  %1690 = vmatprep.subr.mxu0 0.0
  %1691 = vmatpush1.msra.mxu0 0.0
  %1692 = vmatprep.subr.mxu0 0.0
  %1693 = vmatpush1.msra.mxu0 0.0
  %1694 = vmatprep.subr.mxu0 0.0
  %1695 = vmatpush1.msra.mxu0 0.0
  %1696 = vmatprep.subr.mxu0 0.0
  %1697 = vmatpush1.msra.mxu0 0.0
  %1698 = vmatprep.subr.mxu0 0.0
  %1699 = vmatpush1.msra.mxu0 0.0
  %1700 = vmatprep.subr.mxu0 0.0
  %1701 = vmatpush1.msra.mxu0 0.0
  %1702 = vmatprep.subr.mxu0 0.0
  %1703 = vmatpush1.msra.mxu0 0.0
  %1704 = vmatprep.subr.mxu0 0.0
  %1705 = vmatpush1.msra.mxu0 0.0
  %1706 = vmatprep.subr.mxu0 0.0
  %1707 = vmatpush1.msra.mxu0 0.0
  %1708 = vmatprep.subr.mxu0 0.0
  %1709 = vmatpush1.msra.mxu0 0.0
  %1710 = vmatprep.subr.mxu0 0.0
  %1711 = vmatpush1.msra.mxu0 0.0
  %1712 = vmatprep.subr.mxu0 0.0
  %1713 = vmatpush1.msra.mxu0 0.0
  %1714 = vmatprep.subr.mxu0 0.0
  %1715 = vmatpush1.msra.mxu0 0.0
  %1716 = vmatprep.subr.mxu0 0.0
  %1717 = vmatpush1.msra.mxu0 0.0
  %1718 = vmatprep.subr.mxu0 0.0
  %1719 = vmatpush1.msra.mxu0 0.0
  %1720 = vmatprep.subr.mxu0 0.0
  %1721 = vmatpush1.msra.mxu0 0.0
  %1722 = vmatprep.subr.mxu0 0.0
  %1723 = vmatpush1.msra.mxu0 0.0
  %1724 = vmatprep.subr.mxu0 0.0
  %1725 = vmatpush1.msra.mxu0 0.0
  %1726 = vmatprep.subr.mxu0 0.0
  %1727 = vmatpush1.msra.mxu0 0.0
  %1728 = vmatprep.subr.mxu0 0.0
  %1729 = vmatpush1.msra.mxu0 0.0
  %1730 = vmatprep.subr.mxu0 0.0
  %1731 = vmatpush1.msra.mxu0 0.0
  %1732 = vmatprep.subr.mxu0 0.0
  %1733 = vmatpush1.msra.mxu0 0.0
  %1734 = vmatprep.subr.mxu0 0.0
  %1735 = vmatpush1.msra.mxu0 0.0
  %1736 = vmatprep.subr.mxu0 0.0
  %1737 = vmatpush1.msra.mxu0 0.0
  %1738 = vmatprep.subr.mxu0 0.0
  %1739 = vmatpush1.msra.mxu0 0.0
  %1740 = vmatprep.subr.mxu0 0.0
  %1741 = vmatpush1.msra.mxu0 0.0
  %1742 = vmatprep.subr.mxu0 0.0
  %1743 = vmatpush1.msra.mxu0 0.0
  %1744 = vmatprep.mubr.f32.mxu0 0.0
  %1745 = vmatmul.mubr.f32.gmra.mrb[0].mxu0 %v1678
  %v1746 = vpop.f32.mrb[0].mxu0
  %v1747 = vadd.f32 %v268, %v1746
  %v1748 = vpop.f32.mrb[0].mxu0
  %1749 = vdwg.mxu0
  %v1750 = vrot.slane %v247, 5
  %v1752 = vrot.slane %v249, 4
  %v1754 = vsel %vm347, %v1750, %v1752
  %1755 = vmatprep.subr.mxu0 0.0
  %1756 = vmatpush1.msra.mxu0 %v251
  %1757 = vmatprep.subr.mxu0 0.0
  %1758 = vmatpush1.msra.mxu0 %v252
  %1759 = vmatprep.subr.mxu0 0.0
  %1760 = vmatpush1.msra.mxu0 %v253
  %1761 = vmatprep.subr.mxu0 0.0
  %1762 = vmatpush1.msra.mxu0 %v254
  %1763 = vmatprep.subr.mxu0 0.0
  %1764 = vmatpush1.msra.mxu0 0.0
  %1765 = vmatprep.subr.mxu0 0.0
  %1766 = vmatpush1.msra.mxu0 0.0
  %1767 = vmatprep.subr.mxu0 0.0
  %1768 = vmatpush1.msra.mxu0 0.0
  %1769 = vmatprep.subr.mxu0 0.0
  %1770 = vmatpush1.msra.mxu0 0.0
  %1771 = vmatprep.subr.mxu0 0.0
  %1772 = vmatpush1.msra.mxu0 0.0
  %1773 = vmatprep.subr.mxu0 0.0
  %1774 = vmatpush1.msra.mxu0 0.0
  %1775 = vmatprep.subr.mxu0 0.0
  %1776 = vmatpush1.msra.mxu0 0.0
  %1777 = vmatprep.subr.mxu0 0.0
  %1778 = vmatpush1.msra.mxu0 0.0
  %1779 = vmatprep.subr.mxu0 0.0
  %1780 = vmatpush1.msra.mxu0 0.0
  %1781 = vmatprep.subr.mxu0 0.0
  %1782 = vmatpush1.msra.mxu0 0.0
  %1783 = vmatprep.subr.mxu0 0.0
  %1784 = vmatpush1.msra.mxu0 0.0
  %1785 = vmatprep.subr.mxu0 0.0
  %1786 = vmatpush1.msra.mxu0 0.0
  %1787 = vmatprep.subr.mxu0 0.0
  %1788 = vmatpush1.msra.mxu0 0.0
  %1789 = vmatprep.subr.mxu0 0.0
  %1790 = vmatpush1.msra.mxu0 0.0
  %1791 = vmatprep.subr.mxu0 0.0
  %1792 = vmatpush1.msra.mxu0 0.0
  %1793 = vmatprep.subr.mxu0 0.0
  %1794 = vmatpush1.msra.mxu0 0.0
  %1795 = vmatprep.subr.mxu0 0.0
  %1796 = vmatpush1.msra.mxu0 0.0
  %1797 = vmatprep.subr.mxu0 0.0
  %1798 = vmatpush1.msra.mxu0 0.0
  %1799 = vmatprep.subr.mxu0 0.0
  %1800 = vmatpush1.msra.mxu0 0.0
  %1801 = vmatprep.subr.mxu0 0.0
  %1802 = vmatpush1.msra.mxu0 0.0
  %1803 = vmatprep.subr.mxu0 0.0
  %1804 = vmatpush1.msra.mxu0 0.0
  %1805 = vmatprep.subr.mxu0 0.0
  %1806 = vmatpush1.msra.mxu0 0.0
  %1807 = vmatprep.subr.mxu0 0.0
  %1808 = vmatpush1.msra.mxu0 0.0
  %1809 = vmatprep.subr.mxu0 0.0
  %1810 = vmatpush1.msra.mxu0 0.0
  %1811 = vmatprep.subr.mxu0 0.0
  %1812 = vmatpush1.msra.mxu0 0.0
  %1813 = vmatprep.subr.mxu0 0.0
  %1814 = vmatpush1.msra.mxu0 0.0
  %1815 = vmatprep.subr.mxu0 0.0
  %1816 = vmatpush1.msra.mxu0 0.0
  %1817 = vmatprep.subr.mxu0 0.0
  %1818 = vmatpush1.msra.mxu0 0.0
  %1819 = vmatprep.mubr.f32.mxu0 0.0
  %1820 = vmatmul.mubr.f32.gmra.mrb[0].mxu0 %v1572
  %v1821 = vpop.f32.mrb[0].mxu0
  %v1822 = vadd.f32 0.0, %v1821
  %v1823 = vpop.f32.mrb[0].mxu0
  %1824 = vdwg.mxu0
  %v1825 = vadd.f32 %v1754, %v1822
  %v1826 = vxor.u32 %v1825, 2147483648
  %v1827 = vmul.f32 %v1826, 1.442695
  %v1828 = vpow.pop %v1827
  %v1829 = vadd.f32 %v1828, 1.0
  %v1830 = vrcp.pop %v1829
  %v1831 = vmul.f32 1.0, %v1830
  %v1832 = vtanh.pop %v1825
  %v1833 = vmul.f32 %v1831, %v1562
  %1835 = vrot.lane.b32.xlu0 %v1832, 32
  %v1836 = vpop.permute.xlu0 %1835
  %v1838 = vmul.f32 %v1831, %v1836
  %1840 = vrot.lane.b32.xlu0 %v1838, 32
  %v1841 = vpop.permute.xlu0 %1840
  %v1843 = vadd.f32 %v1833, %v1841
  %v1844 = vtanh.pop %v1843
  %1846 = vrot.lane.b32.xlu0 %v1844, 32
  %v1847 = vpop.permute.xlu0 %1846
  %v1849 = vmul.f32 %v1831, %v1847
  %1851 = vrot.lane.b32.xlu0 %v1849, 64
  %v1852 = vpop.permute.xlu0 %1851
  %v1853 = vsel %vm270, %v1852, 0
  %1855 = vmatprep.subr.mxu0 0.0
  %1856 = vmatpush1.msra.mxu0 %v255
  %1857 = vmatprep.subr.mxu0 0.0
  %1858 = vmatpush1.msra.mxu0 %v256
  %1859 = vmatprep.subr.mxu0 0.0
  %1860 = vmatpush1.msra.mxu0 %v257
  %1861 = vmatprep.subr.mxu0 0.0
  %1862 = vmatpush1.msra.mxu0 %v258
  %1863 = vmatprep.subr.mxu0 0.0
  %1864 = vmatpush1.msra.mxu0 0.0
  %1865 = vmatprep.subr.mxu0 0.0
  %1866 = vmatpush1.msra.mxu0 0.0
  %1867 = vmatprep.subr.mxu0 0.0
  %1868 = vmatpush1.msra.mxu0 0.0
  %1869 = vmatprep.subr.mxu0 0.0
  %1870 = vmatpush1.msra.mxu0 0.0
  %1871 = vmatprep.subr.mxu0 0.0
  %1872 = vmatpush1.msra.mxu0 0.0
  %1873 = vmatprep.subr.mxu0 0.0
  %1874 = vmatpush1.msra.mxu0 0.0
  %1875 = vmatprep.subr.mxu0 0.0
  %1876 = vmatpush1.msra.mxu0 0.0
  %1877 = vmatprep.subr.mxu0 0.0
  %1878 = vmatpush1.msra.mxu0 0.0
  %1879 = vmatprep.subr.mxu0 0.0
  %1880 = vmatpush1.msra.mxu0 0.0
  %1881 = vmatprep.subr.mxu0 0.0
  %1882 = vmatpush1.msra.mxu0 0.0
  %1883 = vmatprep.subr.mxu0 0.0
  %1884 = vmatpush1.msra.mxu0 0.0
  %1885 = vmatprep.subr.mxu0 0.0
  %1886 = vmatpush1.msra.mxu0 0.0
  %1887 = vmatprep.subr.mxu0 0.0
  %1888 = vmatpush1.msra.mxu0 0.0
  %1889 = vmatprep.subr.mxu0 0.0
  %1890 = vmatpush1.msra.mxu0 0.0
  %1891 = vmatprep.subr.mxu0 0.0
  %1892 = vmatpush1.msra.mxu0 0.0
  %1893 = vmatprep.subr.mxu0 0.0
  %1894 = vmatpush1.msra.mxu0 0.0
  %1895 = vmatprep.subr.mxu0 0.0
  %1896 = vmatpush1.msra.mxu0 0.0
  %1897 = vmatprep.subr.mxu0 0.0
  %1898 = vmatpush1.msra.mxu0 0.0
  %1899 = vmatprep.subr.mxu0 0.0
  %1900 = vmatpush1.msra.mxu0 0.0
  %1901 = vmatprep.subr.mxu0 0.0
  %1902 = vmatpush1.msra.mxu0 0.0
  %1903 = vmatprep.subr.mxu0 0.0
  %1904 = vmatpush1.msra.mxu0 0.0
  %1905 = vmatprep.subr.mxu0 0.0
  %1906 = vmatpush1.msra.mxu0 0.0
  %1907 = vmatprep.subr.mxu0 0.0
  %1908 = vmatpush1.msra.mxu0 0.0
  %1909 = vmatprep.subr.mxu0 0.0
  %1910 = vmatpush1.msra.mxu0 0.0
  %1911 = vmatprep.subr.mxu0 0.0
  %1912 = vmatpush1.msra.mxu0 0.0
  %1913 = vmatprep.subr.mxu0 0.0
  %1914 = vmatpush1.msra.mxu0 0.0
  %1915 = vmatprep.subr.mxu0 0.0
  %1916 = vmatpush1.msra.mxu0 0.0
  %1917 = vmatprep.subr.mxu0 0.0
  %1918 = vmatpush1.msra.mxu0 0.0
  %1919 = vmatprep.mubr.f32.mxu0 0.0
  %1920 = vmatmul.mubr.f32.gmra.mrb[0].mxu0 %v1853
  %v1921 = vpop.f32.mrb[0].mxu0
  %v1922 = vadd.f32 0.0, %v1921
  %v1923 = vpop.f32.mrb[0].mxu0
  %1924 = vdwg.mxu0
  %v1925 = vadd.f32 %v1747, %v1922
  %v1926 = vxor.u32 %v1925, 2147483648
  %v1927 = vmul.f32 %v1926, 1.442695
  %v1928 = vpow.pop %v1927
  %v1929 = vadd.f32 %v1928, 1.0
  %v1930 = vrcp.pop %v1929
  %v1931 = vmul.f32 1.0, %v1930
  %v1932 = vtanh.pop %v1925
  %v1933 = vmul.f32 %v1931, %v1662
  %1935 = vrot.lane.b32.xlu0 %v1932, 32
  %v1936 = vpop.permute.xlu0 %1935
  %v1938 = vmul.f32 %v1931, %v1936
  %1940 = vrot.lane.b32.xlu0 %v1938, 32
  %v1941 = vpop.permute.xlu0 %1940
  %v1943 = vadd.f32 %v1933, %v1941
  %v1944 = vtanh.pop %v1943
  %1946 = vrot.lane.b32.xlu0 %v1944, 32
  %v1947 = vpop.permute.xlu0 %1946
  %v1949 = vmul.f32 %v1931, %v1947
  %1951 = vrot.lane.b32.xlu0 %v1949, 64
  %v1952 = vpop.permute.xlu0 %1951
  %1954 = vst.msk [vmem:[#allocation2 + $0x5] sm:$0x1] %vm548, %v1952
  %1955 = vrot.lane.b32.xlu0 %v1949, 96
  %v1956 = vpop.permute.xlu0 %1955
  %1958 = vst.msk [vmem:[#allocation2 + $0x4] sm:$0x2] %vm553, %v1956
  %v1959 = vsel %vm270, %v1952, 0
  %1961 = vmatprep.subr.mxu0 0.0
  %1962 = vmatpush1.msra.mxu0 %v259
  %1963 = vmatprep.subr.mxu0 0.0
  %1964 = vmatpush1.msra.mxu0 %v260
  %1965 = vmatprep.subr.mxu0 0.0
  %1966 = vmatpush1.msra.mxu0 %v261
  %1967 = vmatprep.subr.mxu0 0.0
  %1968 = vmatpush1.msra.mxu0 %v262
  %1969 = vmatprep.subr.mxu0 0.0
  %1970 = vmatpush1.msra.mxu0 0.0
  %1971 = vmatprep.subr.mxu0 0.0
  %1972 = vmatpush1.msra.mxu0 0.0
  %1973 = vmatprep.subr.mxu0 0.0
  %1974 = vmatpush1.msra.mxu0 0.0
  %1975 = vmatprep.subr.mxu0 0.0
  %1976 = vmatpush1.msra.mxu0 0.0
  %1977 = vmatprep.subr.mxu0 0.0
  %1978 = vmatpush1.msra.mxu0 0.0
  %1979 = vmatprep.subr.mxu0 0.0
  %1980 = vmatpush1.msra.mxu0 0.0
  %1981 = vmatprep.subr.mxu0 0.0
  %1982 = vmatpush1.msra.mxu0 0.0
  %1983 = vmatprep.subr.mxu0 0.0
  %1984 = vmatpush1.msra.mxu0 0.0
  %1985 = vmatprep.subr.mxu0 0.0
  %1986 = vmatpush1.msra.mxu0 0.0
  %1987 = vmatprep.subr.mxu0 0.0
  %1988 = vmatpush1.msra.mxu0 0.0
  %1989 = vmatprep.subr.mxu0 0.0
  %1990 = vmatpush1.msra.mxu0 0.0
  %1991 = vmatprep.subr.mxu0 0.0
  %1992 = vmatpush1.msra.mxu0 0.0
  %1993 = vmatprep.subr.mxu0 0.0
  %1994 = vmatpush1.msra.mxu0 0.0
  %1995 = vmatprep.subr.mxu0 0.0
  %1996 = vmatpush1.msra.mxu0 0.0
  %1997 = vmatprep.subr.mxu0 0.0
  %1998 = vmatpush1.msra.mxu0 0.0
  %1999 = vmatprep.subr.mxu0 0.0
  %2000 = vmatpush1.msra.mxu0 0.0
  %2001 = vmatprep.subr.mxu0 0.0
  %2002 = vmatpush1.msra.mxu0 0.0
  %2003 = vmatprep.subr.mxu0 0.0
  %2004 = vmatpush1.msra.mxu0 0.0
  %2005 = vmatprep.subr.mxu0 0.0
  %2006 = vmatpush1.msra.mxu0 0.0
  %2007 = vmatprep.subr.mxu0 0.0
  %2008 = vmatpush1.msra.mxu0 0.0
  %2009 = vmatprep.subr.mxu0 0.0
  %2010 = vmatpush1.msra.mxu0 0.0
  %2011 = vmatprep.subr.mxu0 0.0
  %2012 = vmatpush1.msra.mxu0 0.0
  %2013 = vmatprep.subr.mxu0 0.0
  %2014 = vmatpush1.msra.mxu0 0.0
  %2015 = vmatprep.subr.mxu0 0.0
  %2016 = vmatpush1.msra.mxu0 0.0
  %2017 = vmatprep.subr.mxu0 0.0
  %2018 = vmatpush1.msra.mxu0 0.0
  %2019 = vmatprep.subr.mxu0 0.0
  %2020 = vmatpush1.msra.mxu0 0.0
  %2021 = vmatprep.subr.mxu0 0.0
  %2022 = vmatpush1.msra.mxu0 0.0
  %2023 = vmatprep.subr.mxu0 0.0
  %2024 = vmatpush1.msra.mxu0 0.0
  %2025 = vmatprep.mubr.f32.mxu0 0.0
  %2026 = vmatmul.mubr.f32.gmra.mrb[0].mxu0 %v1959
  %v2027 = vpop.f32.mrb[0].mxu0
  %v2028 = vadd.f32 %v268, %v2027
  %v2029 = vpop.f32.mrb[0].mxu0
  %2030 = vdwg.mxu0
  %v2031 = vrot.slane %v247, 6
  %v2033 = vrot.slane %v249, 5
  %v2035 = vsel %vm347, %v2031, %v2033
  %2036 = vmatprep.subr.mxu0 0.0
  %2037 = vmatpush1.msra.mxu0 %v251
  %2038 = vmatprep.subr.mxu0 0.0
  %2039 = vmatpush1.msra.mxu0 %v252
  %2040 = vmatprep.subr.mxu0 0.0
  %2041 = vmatpush1.msra.mxu0 %v253
  %2042 = vmatprep.subr.mxu0 0.0
  %2043 = vmatpush1.msra.mxu0 %v254
  %2044 = vmatprep.subr.mxu0 0.0
  %2045 = vmatpush1.msra.mxu0 0.0
  %2046 = vmatprep.subr.mxu0 0.0
  %2047 = vmatpush1.msra.mxu0 0.0
  %2048 = vmatprep.subr.mxu0 0.0
  %2049 = vmatpush1.msra.mxu0 0.0
  %2050 = vmatprep.subr.mxu0 0.0
  %2051 = vmatpush1.msra.mxu0 0.0
  %2052 = vmatprep.subr.mxu0 0.0
  %2053 = vmatpush1.msra.mxu0 0.0
  %2054 = vmatprep.subr.mxu0 0.0
  %2055 = vmatpush1.msra.mxu0 0.0
  %2056 = vmatprep.subr.mxu0 0.0
  %2057 = vmatpush1.msra.mxu0 0.0
  %2058 = vmatprep.subr.mxu0 0.0
  %2059 = vmatpush1.msra.mxu0 0.0
  %2060 = vmatprep.subr.mxu0 0.0
  %2061 = vmatpush1.msra.mxu0 0.0
  %2062 = vmatprep.subr.mxu0 0.0
  %2063 = vmatpush1.msra.mxu0 0.0
  %2064 = vmatprep.subr.mxu0 0.0
  %2065 = vmatpush1.msra.mxu0 0.0
  %2066 = vmatprep.subr.mxu0 0.0
  %2067 = vmatpush1.msra.mxu0 0.0
  %2068 = vmatprep.subr.mxu0 0.0
  %2069 = vmatpush1.msra.mxu0 0.0
  %2070 = vmatprep.subr.mxu0 0.0
  %2071 = vmatpush1.msra.mxu0 0.0
  %2072 = vmatprep.subr.mxu0 0.0
  %2073 = vmatpush1.msra.mxu0 0.0
  %2074 = vmatprep.subr.mxu0 0.0
  %2075 = vmatpush1.msra.mxu0 0.0
  %2076 = vmatprep.subr.mxu0 0.0
  %2077 = vmatpush1.msra.mxu0 0.0
  %2078 = vmatprep.subr.mxu0 0.0
  %2079 = vmatpush1.msra.mxu0 0.0
  %2080 = vmatprep.subr.mxu0 0.0
  %2081 = vmatpush1.msra.mxu0 0.0
  %2082 = vmatprep.subr.mxu0 0.0
  %2083 = vmatpush1.msra.mxu0 0.0
  %2084 = vmatprep.subr.mxu0 0.0
  %2085 = vmatpush1.msra.mxu0 0.0
  %2086 = vmatprep.subr.mxu0 0.0
  %2087 = vmatpush1.msra.mxu0 0.0
  %2088 = vmatprep.subr.mxu0 0.0
  %2089 = vmatpush1.msra.mxu0 0.0
  %2090 = vmatprep.subr.mxu0 0.0
  %2091 = vmatpush1.msra.mxu0 0.0
  %2092 = vmatprep.subr.mxu0 0.0
  %2093 = vmatpush1.msra.mxu0 0.0
  %2094 = vmatprep.subr.mxu0 0.0
  %2095 = vmatpush1.msra.mxu0 0.0
  %2096 = vmatprep.subr.mxu0 0.0
  %2097 = vmatpush1.msra.mxu0 0.0
  %2098 = vmatprep.subr.mxu0 0.0
  %2099 = vmatpush1.msra.mxu0 0.0
  %2100 = vmatprep.mubr.f32.mxu0 0.0
  %2101 = vmatmul.mubr.f32.gmra.mrb[0].mxu0 %v1853
  %v2102 = vpop.f32.mrb[0].mxu0
  %v2103 = vadd.f32 0.0, %v2102
  %v2104 = vpop.f32.mrb[0].mxu0
  %2105 = vdwg.mxu0
  %v2106 = vadd.f32 %v2035, %v2103
  %v2107 = vxor.u32 %v2106, 2147483648
  %v2108 = vmul.f32 %v2107, 1.442695
  %v2109 = vpow.pop %v2108
  %v2110 = vadd.f32 %v2109, 1.0
  %v2111 = vrcp.pop %v2110
  %v2112 = vmul.f32 1.0, %v2111
  %v2113 = vtanh.pop %v2106
  %v2114 = vmul.f32 %v2112, %v1843
  %2116 = vrot.lane.b32.xlu0 %v2113, 32
  %v2117 = vpop.permute.xlu0 %2116
  %v2119 = vmul.f32 %v2112, %v2117
  %2121 = vrot.lane.b32.xlu0 %v2119, 32
  %v2122 = vpop.permute.xlu0 %2121
  %v2124 = vadd.f32 %v2114, %v2122
  %v2125 = vtanh.pop %v2124
  %2127 = vrot.lane.b32.xlu0 %v2125, 32
  %v2128 = vpop.permute.xlu0 %2127
  %v2130 = vmul.f32 %v2112, %v2128
  %2132 = vrot.lane.b32.xlu0 %v2130, 64
  %v2133 = vpop.permute.xlu0 %2132
  %v2134 = vsel %vm270, %v2133, 0
  %2136 = vmatprep.subr.mxu0 0.0
  %2137 = vmatpush1.msra.mxu0 %v255
  %2138 = vmatprep.subr.mxu0 0.0
  %2139 = vmatpush1.msra.mxu0 %v256
  %2140 = vmatprep.subr.mxu0 0.0
  %2141 = vmatpush1.msra.mxu0 %v257
  %2142 = vmatprep.subr.mxu0 0.0
  %2143 = vmatpush1.msra.mxu0 %v258
  %2144 = vmatprep.subr.mxu0 0.0
  %2145 = vmatpush1.msra.mxu0 0.0
  %2146 = vmatprep.subr.mxu0 0.0
  %2147 = vmatpush1.msra.mxu0 0.0
  %2148 = vmatprep.subr.mxu0 0.0
  %2149 = vmatpush1.msra.mxu0 0.0
  %2150 = vmatprep.subr.mxu0 0.0
  %2151 = vmatpush1.msra.mxu0 0.0
  %2152 = vmatprep.subr.mxu0 0.0
  %2153 = vmatpush1.msra.mxu0 0.0
  %2154 = vmatprep.subr.mxu0 0.0
  %2155 = vmatpush1.msra.mxu0 0.0
  %2156 = vmatprep.subr.mxu0 0.0
  %2157 = vmatpush1.msra.mxu0 0.0
  %2158 = vmatprep.subr.mxu0 0.0
  %2159 = vmatpush1.msra.mxu0 0.0
  %2160 = vmatprep.subr.mxu0 0.0
  %2161 = vmatpush1.msra.mxu0 0.0
  %2162 = vmatprep.subr.mxu0 0.0
  %2163 = vmatpush1.msra.mxu0 0.0
  %2164 = vmatprep.subr.mxu0 0.0
  %2165 = vmatpush1.msra.mxu0 0.0
  %2166 = vmatprep.subr.mxu0 0.0
  %2167 = vmatpush1.msra.mxu0 0.0
  %2168 = vmatprep.subr.mxu0 0.0
  %2169 = vmatpush1.msra.mxu0 0.0
  %2170 = vmatprep.subr.mxu0 0.0
  %2171 = vmatpush1.msra.mxu0 0.0
  %2172 = vmatprep.subr.mxu0 0.0
  %2173 = vmatpush1.msra.mxu0 0.0
  %2174 = vmatprep.subr.mxu0 0.0
  %2175 = vmatpush1.msra.mxu0 0.0
  %2176 = vmatprep.subr.mxu0 0.0
  %2177 = vmatpush1.msra.mxu0 0.0
  %2178 = vmatprep.subr.mxu0 0.0
  %2179 = vmatpush1.msra.mxu0 0.0
  %2180 = vmatprep.subr.mxu0 0.0
  %2181 = vmatpush1.msra.mxu0 0.0
  %2182 = vmatprep.subr.mxu0 0.0
  %2183 = vmatpush1.msra.mxu0 0.0
  %2184 = vmatprep.subr.mxu0 0.0
  %2185 = vmatpush1.msra.mxu0 0.0
  %2186 = vmatprep.subr.mxu0 0.0
  %2187 = vmatpush1.msra.mxu0 0.0
  %2188 = vmatprep.subr.mxu0 0.0
  %2189 = vmatpush1.msra.mxu0 0.0
  %2190 = vmatprep.subr.mxu0 0.0
  %2191 = vmatpush1.msra.mxu0 0.0
  %2192 = vmatprep.subr.mxu0 0.0
  %2193 = vmatpush1.msra.mxu0 0.0
  %2194 = vmatprep.subr.mxu0 0.0
  %2195 = vmatpush1.msra.mxu0 0.0
  %2196 = vmatprep.subr.mxu0 0.0
  %2197 = vmatpush1.msra.mxu0 0.0
  %2198 = vmatprep.subr.mxu0 0.0
  %2199 = vmatpush1.msra.mxu0 0.0
  %2200 = vmatprep.mubr.f32.mxu0 0.0
  %2201 = vmatmul.mubr.f32.gmra.mrb[0].mxu0 %v2134
  %v2202 = vpop.f32.mrb[0].mxu0
  %v2203 = vadd.f32 0.0, %v2202
  %v2204 = vpop.f32.mrb[0].mxu0
  %2205 = vdwg.mxu0
  %v2206 = vadd.f32 %v2028, %v2203
  %v2207 = vxor.u32 %v2206, 2147483648
  %v2208 = vmul.f32 %v2207, 1.442695
  %v2209 = vpow.pop %v2208
  %v2210 = vadd.f32 %v2209, 1.0
  %v2211 = vrcp.pop %v2210
  %v2212 = vmul.f32 1.0, %v2211
  %v2213 = vtanh.pop %v2206
  %v2214 = vmul.f32 %v2212, %v1943
  %2216 = vrot.lane.b32.xlu0 %v2213, 32
  %v2217 = vpop.permute.xlu0 %2216
  %v2219 = vmul.f32 %v2212, %v2217
  %2221 = vrot.lane.b32.xlu0 %v2219, 32
  %v2222 = vpop.permute.xlu0 %2221
  %v2224 = vadd.f32 %v2214, %v2222
  %v2225 = vtanh.pop %v2224
  %2227 = vrot.lane.b32.xlu0 %v2225, 32
  %v2228 = vpop.permute.xlu0 %2227
  %v2230 = vmul.f32 %v2212, %v2228
  %2232 = vrot.lane.b32.xlu0 %v2230, 64
  %v2233 = vpop.permute.xlu0 %2232
  %2235 = vst.msk [vmem:[#allocation2 + $0x6] sm:$0x1] %vm548, %v2233
  %2236 = vrot.lane.b32.xlu0 %v2230, 96
  %v2237 = vpop.permute.xlu0 %2236
  %2239 = vst.msk [vmem:[#allocation2 + $0x5] sm:$0x2] %vm553, %v2237
  %v2240 = vsel %vm270, %v2233, 0
  %2242 = vmatprep.subr.mxu0 0.0
  %2243 = vmatpush1.msra.mxu0 %v259
  %2244 = vmatprep.subr.mxu0 0.0
  %2245 = vmatpush1.msra.mxu0 %v260
  %2246 = vmatprep.subr.mxu0 0.0
  %2247 = vmatpush1.msra.mxu0 %v261
  %2248 = vmatprep.subr.mxu0 0.0
  %2249 = vmatpush1.msra.mxu0 %v262
  %2250 = vmatprep.subr.mxu0 0.0
  %2251 = vmatpush1.msra.mxu0 0.0
  %2252 = vmatprep.subr.mxu0 0.0
  %2253 = vmatpush1.msra.mxu0 0.0
  %2254 = vmatprep.subr.mxu0 0.0
  %2255 = vmatpush1.msra.mxu0 0.0
  %2256 = vmatprep.subr.mxu0 0.0
  %2257 = vmatpush1.msra.mxu0 0.0
  %2258 = vmatprep.subr.mxu0 0.0
  %2259 = vmatpush1.msra.mxu0 0.0
  %2260 = vmatprep.subr.mxu0 0.0
  %2261 = vmatpush1.msra.mxu0 0.0
  %2262 = vmatprep.subr.mxu0 0.0
  %2263 = vmatpush1.msra.mxu0 0.0
  %2264 = vmatprep.subr.mxu0 0.0
  %2265 = vmatpush1.msra.mxu0 0.0
  %2266 = vmatprep.subr.mxu0 0.0
  %2267 = vmatpush1.msra.mxu0 0.0
  %2268 = vmatprep.subr.mxu0 0.0
  %2269 = vmatpush1.msra.mxu0 0.0
  %2270 = vmatprep.subr.mxu0 0.0
  %2271 = vmatpush1.msra.mxu0 0.0
  %2272 = vmatprep.subr.mxu0 0.0
  %2273 = vmatpush1.msra.mxu0 0.0
  %2274 = vmatprep.subr.mxu0 0.0
  %2275 = vmatpush1.msra.mxu0 0.0
  %2276 = vmatprep.subr.mxu0 0.0
  %2277 = vmatpush1.msra.mxu0 0.0
  %2278 = vmatprep.subr.mxu0 0.0
  %2279 = vmatpush1.msra.mxu0 0.0
  %2280 = vmatprep.subr.mxu0 0.0
  %2281 = vmatpush1.msra.mxu0 0.0
  %2282 = vmatprep.subr.mxu0 0.0
  %2283 = vmatpush1.msra.mxu0 0.0
  %2284 = vmatprep.subr.mxu0 0.0
  %2285 = vmatpush1.msra.mxu0 0.0
  %2286 = vmatprep.subr.mxu0 0.0
  %2287 = vmatpush1.msra.mxu0 0.0
  %2288 = vmatprep.subr.mxu0 0.0
  %2289 = vmatpush1.msra.mxu0 0.0
  %2290 = vmatprep.subr.mxu0 0.0
  %2291 = vmatpush1.msra.mxu0 0.0
  %2292 = vmatprep.subr.mxu0 0.0
  %2293 = vmatpush1.msra.mxu0 0.0
  %2294 = vmatprep.subr.mxu0 0.0
  %2295 = vmatpush1.msra.mxu0 0.0
  %2296 = vmatprep.subr.mxu0 0.0
  %2297 = vmatpush1.msra.mxu0 0.0
  %2298 = vmatprep.subr.mxu0 0.0
  %2299 = vmatpush1.msra.mxu0 0.0
  %2300 = vmatprep.subr.mxu0 0.0
  %2301 = vmatpush1.msra.mxu0 0.0
  %2302 = vmatprep.subr.mxu0 0.0
  %2303 = vmatpush1.msra.mxu0 0.0
  %2304 = vmatprep.subr.mxu0 0.0
  %2305 = vmatpush1.msra.mxu0 0.0
  %2306 = vmatprep.mubr.f32.mxu0 0.0
  %2307 = vmatmul.mubr.f32.gmra.mrb[0].mxu0 %v2240
  %v2308 = vpop.f32.mrb[0].mxu0
  %v2309 = vadd.f32 %v268, %v2308
  %v2310 = vpop.f32.mrb[0].mxu0
  %2311 = vdwg.mxu0
  %v2312 = vrot.slane %v247, 7
  %v2314 = vrot.slane %v249, 6
  %v2316 = vsel %vm347, %v2312, %v2314
  %2317 = vmatprep.subr.mxu0 0.0
  %2318 = vmatpush1.msra.mxu0 %v251
  %2319 = vmatprep.subr.mxu0 0.0
  %2320 = vmatpush1.msra.mxu0 %v252
  %2321 = vmatprep.subr.mxu0 0.0
  %2322 = vmatpush1.msra.mxu0 %v253
  %2323 = vmatprep.subr.mxu0 0.0
  %2324 = vmatpush1.msra.mxu0 %v254
  %2325 = vmatprep.subr.mxu0 0.0
  %2326 = vmatpush1.msra.mxu0 0.0
  %2327 = vmatprep.subr.mxu0 0.0
  %2328 = vmatpush1.msra.mxu0 0.0
  %2329 = vmatprep.subr.mxu0 0.0
  %2330 = vmatpush1.msra.mxu0 0.0
  %2331 = vmatprep.subr.mxu0 0.0
  %2332 = vmatpush1.msra.mxu0 0.0
  %2333 = vmatprep.subr.mxu0 0.0
  %2334 = vmatpush1.msra.mxu0 0.0
  %2335 = vmatprep.subr.mxu0 0.0
  %2336 = vmatpush1.msra.mxu0 0.0
  %2337 = vmatprep.subr.mxu0 0.0
  %2338 = vmatpush1.msra.mxu0 0.0
  %2339 = vmatprep.subr.mxu0 0.0
  %2340 = vmatpush1.msra.mxu0 0.0
  %2341 = vmatprep.subr.mxu0 0.0
  %2342 = vmatpush1.msra.mxu0 0.0
  %2343 = vmatprep.subr.mxu0 0.0
  %2344 = vmatpush1.msra.mxu0 0.0
  %2345 = vmatprep.subr.mxu0 0.0
  %2346 = vmatpush1.msra.mxu0 0.0
  %2347 = vmatprep.subr.mxu0 0.0
  %2348 = vmatpush1.msra.mxu0 0.0
  %2349 = vmatprep.subr.mxu0 0.0
  %2350 = vmatpush1.msra.mxu0 0.0
  %2351 = vmatprep.subr.mxu0 0.0
  %2352 = vmatpush1.msra.mxu0 0.0
  %2353 = vmatprep.subr.mxu0 0.0
  %2354 = vmatpush1.msra.mxu0 0.0
  %2355 = vmatprep.subr.mxu0 0.0
  %2356 = vmatpush1.msra.mxu0 0.0
  %2357 = vmatprep.subr.mxu0 0.0
  %2358 = vmatpush1.msra.mxu0 0.0
  %2359 = vmatprep.subr.mxu0 0.0
  %2360 = vmatpush1.msra.mxu0 0.0
  %2361 = vmatprep.subr.mxu0 0.0
  %2362 = vmatpush1.msra.mxu0 0.0
  %2363 = vmatprep.subr.mxu0 0.0
  %2364 = vmatpush1.msra.mxu0 0.0
  %2365 = vmatprep.subr.mxu0 0.0
  %2366 = vmatpush1.msra.mxu0 0.0
  %2367 = vmatprep.subr.mxu0 0.0
  %2368 = vmatpush1.msra.mxu0 0.0
  %2369 = vmatprep.subr.mxu0 0.0
  %2370 = vmatpush1.msra.mxu0 0.0
  %2371 = vmatprep.subr.mxu0 0.0
  %2372 = vmatpush1.msra.mxu0 0.0
  %2373 = vmatprep.subr.mxu0 0.0
  %2374 = vmatpush1.msra.mxu0 0.0
  %2375 = vmatprep.subr.mxu0 0.0
  %2376 = vmatpush1.msra.mxu0 0.0
  %2377 = vmatprep.subr.mxu0 0.0
  %2378 = vmatpush1.msra.mxu0 0.0
  %2379 = vmatprep.subr.mxu0 0.0
  %2380 = vmatpush1.msra.mxu0 0.0
  %2381 = vmatprep.mubr.f32.mxu0 0.0
  %2382 = vmatmul.mubr.f32.gmra.mrb[0].mxu0 %v2134
  %v2383 = vpop.f32.mrb[0].mxu0
  %v2384 = vadd.f32 0.0, %v2383
  %v2385 = vpop.f32.mrb[0].mxu0
  %2386 = vdwg.mxu0
  %v2387 = vadd.f32 %v2316, %v2384
  %v2388 = vxor.u32 %v2387, 2147483648
  %v2389 = vmul.f32 %v2388, 1.442695
  %v2390 = vpow.pop %v2389
  %v2391 = vadd.f32 %v2390, 1.0
  %v2392 = vrcp.pop %v2391
  %v2393 = vmul.f32 1.0, %v2392
  %v2394 = vtanh.pop %v2387
  %v2395 = vmul.f32 %v2393, %v2124
  %2397 = vrot.lane.b32.xlu0 %v2394, 32
  %v2398 = vpop.permute.xlu0 %2397
  %v2400 = vmul.f32 %v2393, %v2398
  %2402 = vrot.lane.b32.xlu0 %v2400, 32
  %v2403 = vpop.permute.xlu0 %2402
  %v2405 = vadd.f32 %v2395, %v2403
  %v2406 = vtanh.pop %v2405
  %2408 = vrot.lane.b32.xlu0 %v2406, 32
  %v2409 = vpop.permute.xlu0 %2408
  %v2411 = vmul.f32 %v2393, %v2409
  %2413 = vrot.lane.b32.xlu0 %v2411, 64
  %v2414 = vpop.permute.xlu0 %2413
  %v2415 = vsel %vm270, %v2414, 0
  %2417 = vmatprep.subr.mxu0 0.0
  %2418 = vmatpush1.msra.mxu0 %v255
  %2419 = vmatprep.subr.mxu0 0.0
  %2420 = vmatpush1.msra.mxu0 %v256
  %2421 = vmatprep.subr.mxu0 0.0
  %2422 = vmatpush1.msra.mxu0 %v257
  %2423 = vmatprep.subr.mxu0 0.0
  %2424 = vmatpush1.msra.mxu0 %v258
  %2425 = vmatprep.subr.mxu0 0.0
  %2426 = vmatpush1.msra.mxu0 0.0
  %2427 = vmatprep.subr.mxu0 0.0
  %2428 = vmatpush1.msra.mxu0 0.0
  %2429 = vmatprep.subr.mxu0 0.0
  %2430 = vmatpush1.msra.mxu0 0.0
  %2431 = vmatprep.subr.mxu0 0.0
  %2432 = vmatpush1.msra.mxu0 0.0
  %2433 = vmatprep.subr.mxu0 0.0
  %2434 = vmatpush1.msra.mxu0 0.0
  %2435 = vmatprep.subr.mxu0 0.0
  %2436 = vmatpush1.msra.mxu0 0.0
  %2437 = vmatprep.subr.mxu0 0.0
  %2438 = vmatpush1.msra.mxu0 0.0
  %2439 = vmatprep.subr.mxu0 0.0
  %2440 = vmatpush1.msra.mxu0 0.0
  %2441 = vmatprep.subr.mxu0 0.0
  %2442 = vmatpush1.msra.mxu0 0.0
  %2443 = vmatprep.subr.mxu0 0.0
  %2444 = vmatpush1.msra.mxu0 0.0
  %2445 = vmatprep.subr.mxu0 0.0
  %2446 = vmatpush1.msra.mxu0 0.0
  %2447 = vmatprep.subr.mxu0 0.0
  %2448 = vmatpush1.msra.mxu0 0.0
  %2449 = vmatprep.subr.mxu0 0.0
  %2450 = vmatpush1.msra.mxu0 0.0
  %2451 = vmatprep.subr.mxu0 0.0
  %2452 = vmatpush1.msra.mxu0 0.0
  %2453 = vmatprep.subr.mxu0 0.0
  %2454 = vmatpush1.msra.mxu0 0.0
  %2455 = vmatprep.subr.mxu0 0.0
  %2456 = vmatpush1.msra.mxu0 0.0
  %2457 = vmatprep.subr.mxu0 0.0
  %2458 = vmatpush1.msra.mxu0 0.0
  %2459 = vmatprep.subr.mxu0 0.0
  %2460 = vmatpush1.msra.mxu0 0.0
  %2461 = vmatprep.subr.mxu0 0.0
  %2462 = vmatpush1.msra.mxu0 0.0
  %2463 = vmatprep.subr.mxu0 0.0
  %2464 = vmatpush1.msra.mxu0 0.0
  %2465 = vmatprep.subr.mxu0 0.0
  %2466 = vmatpush1.msra.mxu0 0.0
  %2467 = vmatprep.subr.mxu0 0.0
  %2468 = vmatpush1.msra.mxu0 0.0
  %2469 = vmatprep.subr.mxu0 0.0
  %2470 = vmatpush1.msra.mxu0 0.0
  %2471 = vmatprep.subr.mxu0 0.0
  %2472 = vmatpush1.msra.mxu0 0.0
  %2473 = vmatprep.subr.mxu0 0.0
  %2474 = vmatpush1.msra.mxu0 0.0
  %2475 = vmatprep.subr.mxu0 0.0
  %2476 = vmatpush1.msra.mxu0 0.0
  %2477 = vmatprep.subr.mxu0 0.0
  %2478 = vmatpush1.msra.mxu0 0.0
  %2479 = vmatprep.subr.mxu0 0.0
  %2480 = vmatpush1.msra.mxu0 0.0
  %2481 = vmatprep.mubr.f32.mxu0 0.0
  %2482 = vmatmul.mubr.f32.gmra.mrb[0].mxu0 %v2415
  %v2483 = vpop.f32.mrb[0].mxu0
  %v2484 = vadd.f32 0.0, %v2483
  %v2485 = vpop.f32.mrb[0].mxu0
  %2486 = vdwg.mxu0
  %v2487 = vadd.f32 %v2309, %v2484
  %v2488 = vxor.u32 %v2487, 2147483648
  %v2489 = vmul.f32 %v2488, 1.442695
  %v2490 = vpow.pop %v2489
  %v2491 = vadd.f32 %v2490, 1.0
  %v2492 = vrcp.pop %v2491
  %v2493 = vmul.f32 1.0, %v2492
  %v2494 = vtanh.pop %v2487
  %v2495 = vmul.f32 %v2493, %v2224
  %2497 = vrot.lane.b32.xlu0 %v2494, 32
  %v2498 = vpop.permute.xlu0 %2497
  %v2500 = vmul.f32 %v2493, %v2498
  %2502 = vrot.lane.b32.xlu0 %v2500, 32
  %v2503 = vpop.permute.xlu0 %2502
  %v2505 = vadd.f32 %v2495, %v2503
  %v2506 = vtanh.pop %v2505
  %2508 = vrot.lane.b32.xlu0 %v2506, 32
  %v2509 = vpop.permute.xlu0 %2508
  %v2511 = vmul.f32 %v2493, %v2509
  %2513 = vrot.lane.b32.xlu0 %v2511, 64
  %v2514 = vpop.permute.xlu0 %2513
  %2516 = vst.msk [vmem:[#allocation2 + $0x7] sm:$0x1] %vm548, %v2514
  %2517 = vrot.lane.b32.xlu0 %v2511, 96
  %v2518 = vpop.permute.xlu0 %2517
  %2520 = vst.msk [vmem:[#allocation2 + $0x6] sm:$0x2] %vm553, %v2518
  %v2521 = vld [vmem:[#allocation2] sm:$0xff]
  %v2522 = vld [vmem:[%s10] sm:$0xff]
  %v2523 = vld [vmem:[%s10 + $0x8] sm:$0xff]
  %v2524 = vld [vmem:[%s10 + $0x10] sm:$0xff]
  %v2525 = vld [vmem:[%s10 + $0x18] sm:$0xff]
  %v2526 = vld [vmem:[%s10 + $0x20] sm:$0xff]
  %v2527 = vld [vmem:[%s10 + $0x28] sm:$0xff]
  %v2528 = vld [vmem:[%s10 + $0x30] sm:$0xff]
  %v2529 = vld [vmem:[%s10 + $0x38] sm:$0xff]
  %v2530 = vld [vmem:[%s11] sm:$0x1]
  %v2532 = vlaneseq
  %v2533 = vshrl.u32 %v2532, 7
  %v2534 = vsub.s32 0, %v2533
  %v2535 = vrot.slane %v2530, %v2534
  %vm2537 = vcmask 523264
  %v2539 = vsel %vm2537, %v2521, 0
  %2541 = vmatprep.subr.mxu0 0.0
  %2542 = vmatpush1.msra.mxu0 %v2522
  %2543 = vmatprep.subr.mxu0 0.0
  %2544 = vmatpush1.msra.mxu0 %v2523
  %2545 = vmatprep.subr.mxu0 0.0
  %2546 = vmatpush1.msra.mxu0 %v2524
  %2547 = vmatprep.subr.mxu0 0.0
  %2548 = vmatpush1.msra.mxu0 %v2525
  %2549 = vmatprep.subr.mxu0 0.0
  %2550 = vmatpush1.msra.mxu0 %v2526
  %2551 = vmatprep.subr.mxu0 0.0
  %2552 = vmatpush1.msra.mxu0 %v2527
  %2553 = vmatprep.subr.mxu0 0.0
  %2554 = vmatpush1.msra.mxu0 %v2528
  %2555 = vmatprep.subr.mxu0 0.0
  %2556 = vmatpush1.msra.mxu0 %v2529
  %2557 = vmatprep.subr.mxu0 0.0
  %2558 = vmatpush1.msra.mxu0 0.0
  %2559 = vmatprep.subr.mxu0 0.0
  %2560 = vmatpush1.msra.mxu0 0.0
  %2561 = vmatprep.subr.mxu0 0.0
  %2562 = vmatpush1.msra.mxu0 0.0
  %2563 = vmatprep.subr.mxu0 0.0
  %2564 = vmatpush1.msra.mxu0 0.0
  %2565 = vmatprep.subr.mxu0 0.0
  %2566 = vmatpush1.msra.mxu0 0.0
  %2567 = vmatprep.subr.mxu0 0.0
  %2568 = vmatpush1.msra.mxu0 0.0
  %2569 = vmatprep.subr.mxu0 0.0
  %2570 = vmatpush1.msra.mxu0 0.0
  %2571 = vmatprep.subr.mxu0 0.0
  %2572 = vmatpush1.msra.mxu0 0.0
  %2573 = vmatprep.subr.mxu0 0.0
  %2574 = vmatpush1.msra.mxu0 0.0
  %2575 = vmatprep.subr.mxu0 0.0
  %2576 = vmatpush1.msra.mxu0 0.0
  %2577 = vmatprep.subr.mxu0 0.0
  %2578 = vmatpush1.msra.mxu0 0.0
  %2579 = vmatprep.subr.mxu0 0.0
  %2580 = vmatpush1.msra.mxu0 0.0
  %2581 = vmatprep.subr.mxu0 0.0
  %2582 = vmatpush1.msra.mxu0 0.0
  %2583 = vmatprep.subr.mxu0 0.0
  %2584 = vmatpush1.msra.mxu0 0.0
  %2585 = vmatprep.subr.mxu0 0.0
  %2586 = vmatpush1.msra.mxu0 0.0
  %2587 = vmatprep.subr.mxu0 0.0
  %2588 = vmatpush1.msra.mxu0 0.0
  %2589 = vmatprep.subr.mxu0 0.0
  %2590 = vmatpush1.msra.mxu0 0.0
  %2591 = vmatprep.subr.mxu0 0.0
  %2592 = vmatpush1.msra.mxu0 0.0
  %2593 = vmatprep.subr.mxu0 0.0
  %2594 = vmatpush1.msra.mxu0 0.0
  %2595 = vmatprep.subr.mxu0 0.0
  %2596 = vmatpush1.msra.mxu0 0.0
  %2597 = vmatprep.subr.mxu0 0.0
  %2598 = vmatpush1.msra.mxu0 0.0
  %2599 = vmatprep.subr.mxu0 0.0
  %2600 = vmatpush1.msra.mxu0 0.0
  %2601 = vmatprep.subr.mxu0 0.0
  %2602 = vmatpush1.msra.mxu0 0.0
  %2603 = vmatprep.subr.mxu0 0.0
  %2604 = vmatpush1.msra.mxu0 0.0
  %2605 = vmatprep.mubr.f32.mxu0 0.0
  %2606 = vmatmul.mubr.f32.gmra.mrb[0].mxu0 %v2539
  %v2607 = vpop.f32.mrb[0].mxu0
  %v2608 = vadd.f32 %v2535, %v2607
  %v2609 = vpop.f32.mrb[0].mxu0
  %2610 = vdwg.mxu0
  %v2611 = vld [vmem:[%s2] sm:$0xff]
  %2613 = vset.pattern.permute.xlu0 0
  %2614 = vperm.xlu0 %2613, %v2611
  %v2615 = vpop.permute.xlu0 %2614
  %v2617 = vsub.f32 %v2608, %v2615
  %v2618 = vld [vmem:[%s3] sm:$0xff]
  %2620 = vset.pattern.permute.xlu0 0
  %2621 = vperm.xlu0 %2620, %v2618
  %v2622 = vpop.permute.xlu0 %2621
  %v2624 = vmul.f32 %v2617, %v2622
  %v2625 = vmul.f32 %v2624, %v137
  %v2626 = vadd.f32 %v2625, %v128
  %2627 = vxpose.xlu0.b32.start [1/16] %v2626, 128
  %2628 = vxpose.xlu0.b32.cont [2/16] 0.0, 128
  %2629 = vxpose.xlu0.b32.cont [3/16] 0.0, 128
  %2630 = vxpose.xlu0.b32.cont [4/16] 0.0, 128
  %2631 = vxpose.xlu0.b32.cont [5/16] 0.0, 128
  %2632 = vxpose.xlu0.b32.cont [6/16] 0.0, 128
  %2633 = vxpose.xlu0.b32.cont [7/16] 0.0, 128
  %2634 = vxpose.xlu0.b32.cont [8/16] 0.0, 128
  %2635 = vxpose.xlu0.b32.cont [9/16] 0.0, 128
  %2636 = vxpose.xlu0.b32.cont [10/16] 0.0, 128
  %2637 = vxpose.xlu0.b32.cont [11/16] 0.0, 128
  %2638 = vxpose.xlu0.b32.cont [12/16] 0.0, 128
  %2639 = vxpose.xlu0.b32.cont [13/16] 0.0, 128
  %2640 = vxpose.xlu0.b32.cont [14/16] 0.0, 128
  %2641 = vxpose.xlu0.b32.cont [15/16] 0.0, 128
  %2642 = vxpose.xlu0.b32.end [16/16] 0.0, 128
  %v2643 = vpop.trf.xlu0
  %v2644 = vpop.trf.xlu0
  %v2645 = vpop.trf.xlu0
  %v2646 = vpop.trf.xlu0
  %v2647 = vpop.trf.xlu0
  %v2648 = vpop.trf.xlu0
  %v2649 = vpop.trf.xlu0
  %v2650 = vpop.trf.xlu0
  %v2651 = vpop.trf.xlu0
  %v2652 = vpop.trf.xlu0
  %v2653 = vpop.trf.xlu0
  %v2654 = vpop.trf.xlu0
  %v2655 = vpop.trf.xlu0
  %v2656 = vpop.trf.xlu0
  %v2657 = vpop.trf.xlu0
  %v2658 = vpop.trf.xlu0
  %vm2659 = vcmask 31744
  %2660 = vst.msk [vmem:[%s12] sm:$0xff] %vm2659, %v2643
  %2661 = vst.msk [vmem:[%s12 + $0x8] sm:$0xff] %vm2659, %v2644
  %v2663 = vrot.slane %v2626, 4
  %2665 = vxpose.xlu0.b32.start [1/16] %v2663, 128
  %2666 = vxpose.xlu0.b32.cont [2/16] 0.0, 128
  %2667 = vxpose.xlu0.b32.cont [3/16] 0.0, 128
  %2668 = vxpose.xlu0.b32.cont [4/16] 0.0, 128
  %2669 = vxpose.xlu0.b32.cont [5/16] 0.0, 128
  %2670 = vxpose.xlu0.b32.cont [6/16] 0.0, 128
  %2671 = vxpose.xlu0.b32.cont [7/16] 0.0, 128
  %2672 = vxpose.xlu0.b32.cont [8/16] 0.0, 128
  %2673 = vxpose.xlu0.b32.cont [9/16] 0.0, 128
  %2674 = vxpose.xlu0.b32.cont [10/16] 0.0, 128
  %2675 = vxpose.xlu0.b32.cont [11/16] 0.0, 128
  %2676 = vxpose.xlu0.b32.cont [12/16] 0.0, 128
  %2677 = vxpose.xlu0.b32.cont [13/16] 0.0, 128
  %2678 = vxpose.xlu0.b32.cont [14/16] 0.0, 128
  %2679 = vxpose.xlu0.b32.cont [15/16] 0.0, 128
  %2680 = vxpose.xlu0.b32.end [16/16] 0.0, 128
  %v2681 = vpop.trf.xlu0
  %v2682 = vpop.trf.xlu0
  %v2683 = vpop.trf.xlu0
  %v2684 = vpop.trf.xlu0
  %v2685 = vpop.trf.xlu0
  %v2686 = vpop.trf.xlu0
  %v2687 = vpop.trf.xlu0
  %v2688 = vpop.trf.xlu0
  %v2689 = vpop.trf.xlu0
  %v2690 = vpop.trf.xlu0
  %v2691 = vpop.trf.xlu0
  %v2692 = vpop.trf.xlu0
  %v2693 = vpop.trf.xlu0
  %v2694 = vpop.trf.xlu0
  %v2695 = vpop.trf.xlu0
  %v2696 = vpop.trf.xlu0
  %s2697 = scalar_lea.vmem %s12, 16
  %2698 = vst.msk [vmem:[%s2697] sm:$0xff] %vm2659, %v2681
  %2699 = vst.msk [vmem:[%s2697 + $0x8] sm:$0xff] %vm2659, %v2682
  // Predicated region
  $region50: #{model_forward.1} parent=0 // pred_check
    _
  $region51: #{model_forward.1} parent=0 // pred_check_branch
    %2701 = sbr.rel (0) target = $region53
  $region52: #{model_forward.1} parent=0 // pred_region
    _
  $region53: #{model_forward.1} parent=0 // pred_fallthru
    _
  // Predicated region
  $region54: #{model_forward.1} parent=0 // pred_check
    _
  $region55: #{model_forward.1} parent=0 // pred_check_branch
    %2703 = sbr.rel (0) target = $region57
  $region56: #{model_forward.1} parent=0 // pred_region
    _
  $region57: #{model_forward.1} parent=0 // pred_fallthru
    _

</llo_original>
